<compile_context>
chip_gen: v6e
topology: v6e:2x2x1
jax: 0.10.0
libtpu: 0.0.40
codegen_flags: <defaults>
</compile_context>

<pallas_src>
import functools
import math

import jax
import jax.numpy as jnp
from jax.experimental import pallas as pl
from jax.experimental.pallas import tpu as pltpu

# ---- small, forward-consistent config (real ERNIE/BERT uses H=768, FFN=3072) ----
H = 32            # hidden size
N_HEADS = 4
D_HEAD = H // N_HEADS
FFN = 64          # intermediate size
N_LAYERS = 2
VOCAB = 100
MAX_POS = 64
TYPE_VOCAB = 2
LN_EPS = 1e-12

PARAM_DTYPE = jnp.float32      # master params (matches the torch reference)
COMPUTE_DTYPE = jnp.bfloat16   # matmul operands (f32 accumulation on the MXU)


# ----------------------------- in-kernel helpers -----------------------------

def _gelu_f32(x):
    # TODO(synk): HF ERNIE/BERT uses exact erf-GELU; tanh approximation used here.
    c = math.sqrt(2.0 / math.pi)
    return 0.5 * x * (1.0 + jnp.tanh(c * (x + 0.044715 * x * x * x)))


def _layernorm_f32(x, g, b):
    mean = jnp.mean(x, axis=-1, keepdims=True)
    var = jnp.mean(jnp.square(x - mean), axis=-1, keepdims=True)
    return (x - mean) * jax.lax.rsqrt(var + LN_EPS) * g + b


# ----------------------------- the fused kernel -----------------------------

def _encoder_kernel(emb_ref, mask_ref,
                    embg_ref, embb_ref,
                    wqkv_ref, bqkv_ref,
                    wo_ref, bo_ref, ln1g_ref, ln1b_ref,
                    w1_ref, b1_ref, w2_ref, b2_ref, ln2g_ref, ln2b_ref,
                    cls_ref,
                    ctx_ref,
                    *, batch, seq):
    f32 = jnp.float32

    # additive key-position mask, shared by all layers / heads
    bias_all = (1.0 - mask_ref[...].astype(f32)) * (-1e9)                     # (B, S)

    # embedding LayerNorm
    x = _layernorm_f32(emb_ref[...].astype(f32),
                       embg_ref[...].astype(f32), embb_ref[...].astype(f32))  # (M, H) f32

    for l in range(N_LAYERS):
        # ---- self-attention: one fused [Q|K|V] matmul (1/sqrt(Dh) folded into Wq/bq) ----
        qkv = jnp.dot(x.astype(COMPUTE_DTYPE), wqkv_ref[l],
                      preferred_element_type=f32) + bqkv_ref[l].astype(f32)   # (M, 3H) f32
        qkv_bf = qkv.astype(COMPUTE_DTYPE)

        # TODO(synk): for production sizes (H=768, long S) replace this per-(batch, head)
        # loop with a head-batched einsum + flash-style KV tiling (online softmax); at
        # S=8, Dh=8 everything fits in VMEM trivially and the loop bodies are tiny.
        for b in range(batch):
            r0 = b * seq
            bias_b = bias_all[b:b + 1, :]                                     # (1, S)
            for h in range(N_HEADS):
                c0 = h * D_HEAD
                q_h = qkv_bf[r0:r0 + seq, c0:c0 + D_HEAD]                     # (S, Dh)
                k_h = qkv_bf[r0:r0 + seq, H + c0:H + c0 + D_HEAD]             # (S, Dh)
                v_h = qkv_bf[r0:r0 + seq, 2 * H + c0:2 * H + c0 + D_HEAD]     # (S, Dh)

                s = jax.lax.dot_general(q_h, k_h, (((1,), (1,)), ((), ())),
                                        preferred_element_type=f32)           # (S, S) f32
                s = s + bias_b
                s = s - jnp.max(s, axis=-1, keepdims=True)
                p = jnp.exp(s)
                p = p * pl.reciprocal(jnp.sum(p, axis=-1, keepdims=True), approx=True)
                ctx_h = jnp.dot(p.astype(COMPUTE_DTYPE), v_h,
                                preferred_element_type=f32)                   # (S, Dh) f32
                # accumulate heads into the (M, H) f32 VMEM scratch -> one read for out-proj
                ctx_ref[r0:r0 + seq, c0:c0 + D_HEAD] = ctx_h

        ctx = ctx_ref[...].astype(COMPUTE_DTYPE)                              # (M, H)

        # ---- output projection + residual + LN1 (all in VMEM) ----
        y = jnp.dot(ctx, wo_ref[l], preferred_element_type=f32)
        y = y + bo_ref[l].astype(f32) + x
        x = _layernorm_f32(y, ln1g_ref[l].astype(f32), ln1b_ref[l].astype(f32))

        # ---- FFN: matmul -> GELU -> matmul -> +residual -> LN2 (intermediate never leaves VMEM) ----
        h1 = jnp.dot(x.astype(COMPUTE_DTYPE), w1_ref[l], preferred_element_type=f32)
        h1 = _gelu_f32(h1 + b1_ref[l].astype(f32))
        y = jnp.dot(h1.astype(COMPUTE_DTYPE), w2_ref[l], preferred_element_type=f32)
        y = y + b2_ref[l].astype(f32) + x
        x = _layernorm_f32(y, ln2g_ref[l].astype(f32), ln2b_ref[l].astype(f32))

    # CLS token of every sequence (rows 0, S, 2S, ...) -> (B, H)
    cls_ref[...] = jnp.concatenate(
        [x[b * seq:b * seq + 1, :] for b in range(batch)], axis=0).astype(cls_ref.dtype)


def encoder_forward(fp, emb, mask):
    """emb: (M, H) f32 summed embeddings, mask: (B, S) f32. Returns (B, H) f32 CLS."""
    m, _ = emb.shape
    b, s = mask.shape
    n_inputs = 16
    return pl.pallas_call(
        functools.partial(_encoder_kernel, batch=b, seq=s),
        out_shape=jax.ShapeDtypeStruct((b, H), jnp.float32),
        in_specs=[pl.BlockSpec(memory_space=pltpu.MemorySpace.VMEM)] * n_inputs,
        out_specs=pl.BlockSpec(memory_space=pltpu.MemorySpace.VMEM),
        scratch_shapes=[pltpu.VMEM((m, H), jnp.float32)],
    )(emb, mask,
      fp["emb_ln_g"], fp["emb_ln_b"],
      fp["wqkv"], fp["bqkv"],
      fp["wo"], fp["bo"], fp["ln1_g"], fp["ln1_b"],
      fp["w1"], fp["b1"], fp["w2"], fp["b2"], fp["ln2_g"], fp["ln2_b"])


# --------------------------- parameters & forward ---------------------------

def init_params(key):
    def nrm(k, shape, scale=0.02):
        return (scale * jax.random.normal(k, shape)).astype(PARAM_DTYPE)

    keys = jax.random.split(key, 4 + N_LAYERS)
    params = {
        "word_emb": nrm(keys[0], (VOCAB, H)),
        "pos_emb": nrm(keys[1], (MAX_POS, H)),
        "type_emb": nrm(keys[2], (TYPE_VOCAB, H)),
        "emb_ln_g": jnp.ones((H,), PARAM_DTYPE),
        "emb_ln_b": jnp.zeros((H,), PARAM_DTYPE),
        "layers": [],
    }
    for li in range(N_LAYERS):
        lk = jax.random.split(keys[4 + li], 6)
        params["layers"].append({
            "wq": nrm(lk[0], (H, H)), "bq": jnp.zeros((H,), PARAM_DTYPE),
            "wk": nrm(lk[1], (H, H)), "bk": jnp.zeros((H,), PARAM_DTYPE),
            "wv": nrm(lk[2], (H, H)), "bv": jnp.zeros((H,), PARAM_DTYPE),
            "wo": nrm(lk[3], (H, H)), "bo": jnp.zeros((H,), PARAM_DTYPE),
            "ln1_g": jnp.ones((H,), PARAM_DTYPE), "ln1_b": jnp.zeros((H,), PARAM_DTYPE),
            "w1": nrm(lk[4], (H, FFN)), "b1": jnp.zeros((FFN,), PARAM_DTYPE),
            "w2": nrm(lk[5], (FFN, H)), "b2": jnp.zeros((H,), PARAM_DTYPE),
            "ln2_g": jnp.ones((H,), PARAM_DTYPE), "ln2_b": jnp.zeros((H,), PARAM_DTYPE),
        })
    return params


def fuse_params(params):
    """Fold 1/sqrt(Dh) into Wq/bq, fuse [Wq|Wk|Wv], stack per-layer params along a leading
    layer axis, cast matmul weights to bf16. Biases / LN params stay f32."""
    scale = 1.0 / math.sqrt(D_HEAD)

    def stack(fn):
        return jnp.stack([fn(lp) for lp in params["layers"]], axis=0)

    return {
        "word_emb": params["word_emb"],
        "pos_emb": params["pos_emb"],
        "type_emb": params["type_emb"],
        "emb_ln_g": params["emb_ln_g"].reshape(1, H).astype(jnp.float32),
        "emb_ln_b": params["emb_ln_b"].reshape(1, H).astype(jnp.float32),
        "wqkv": stack(lambda lp: jnp.concatenate(
            [lp["wq"] * scale, lp["wk"], lp["wv"]], axis=1)).astype(COMPUTE_DTYPE),
        "bqkv": stack(lambda lp: jnp.concatenate(
            [lp["bq"] * scale, lp["bk"], lp["bv"]]).reshape(1, 3 * H)).astype(jnp.float32),
        "wo": stack(lambda lp: lp["wo"]).astype(COMPUTE_DTYPE),
        "bo": stack(lambda lp: lp["bo"].reshape(1, H)).astype(jnp.float32),
        "ln1_g": stack(lambda lp: lp["ln1_g"].reshape(1, H)).astype(jnp.float32),
        "ln1_b": stack(lambda lp: lp["ln1_b"].reshape(1, H)).astype(jnp.float32),
        "w1": stack(lambda lp: lp["w1"]).astype(COMPUTE_DTYPE),
        "b1": stack(lambda lp: lp["b1"].reshape(1, FFN)).astype(jnp.float32),
        "w2": stack(lambda lp: lp["w2"]).astype(COMPUTE_DTYPE),
        "b2": stack(lambda lp: lp["b2"].reshape(1, H)).astype(jnp.float32),
        "ln2_g": stack(lambda lp: lp["ln2_g"].reshape(1, H)).astype(jnp.float32),
        "ln2_b": stack(lambda lp: lp["ln2_b"].reshape(1, H)).astype(jnp.float32),
    }


def embedding_model_forward(fp, input_ids, attention_mask, token_type_ids):
    """Equivalent of EmbeddingModel.forward: encoder last_hidden_state[:, 0]."""
    b, s = input_ids.shape

    # --- embeddings (table gathers = glue in plain JAX) ---
    we = jnp.take(fp["word_emb"], input_ids, axis=0)                 # (B,S,H)
    pe = jnp.take(fp["pos_emb"], jnp.arange(s), axis=0)[None, :, :]  # (1,S,H)
    te = jnp.take(fp["type_emb"], token_type_ids, axis=0)            # (B,S,H)
    emb = (we + pe + te).reshape(b * s, H).astype(jnp.float32)       # (M,H)
    mask = attention_mask.astype(jnp.float32)                        # (B,S)

    # --- whole encoder (emb LN + all layers + CLS select) in ONE pallas_call ---
    return encoder_forward(fp, emb, mask)                            # (B,H) f32


if __name__ == "__main__":
    key = jax.random.PRNGKey(0)
    k_params, k_ids = jax.random.split(key)

    params = init_params(k_params)
    fparams = fuse_params(params)

    B, S = 2, 8
    input_ids = jax.random.randint(k_ids, (B, S), 0, VOCAB, dtype=jnp.int32)
    attention_mask = jnp.ones((B, S), dtype=jnp.int32)
    token_type_ids = jnp.zeros((B, S), dtype=jnp.int32)

    forward = jax.jit(embedding_model_forward)
    cls_emb = forward(fparams, input_ids, attention_mask, token_type_ids)
    cls_emb = jax.block_until_ready(cls_emb)
    assert cls_emb.shape == (B, H)
    assert bool(jnp.all(jnp.isfinite(cls_emb)))
    print("KERNEL_OK")
</pallas_src>

<mosaic_0001>
module attributes {stable_mosaic.version = 11 : i64} {
  func.func @_encoder_kernel(%arg0: memref<16x32xf32, #tpu.memory_space<vmem>>, %arg1: memref<2x8xf32, #tpu.memory_space<vmem>>, %arg2: memref<1x32xf32, #tpu.memory_space<vmem>>, %arg3: memref<1x32xf32, #tpu.memory_space<vmem>>, %arg4: memref<2x32x96xbf16, #tpu.memory_space<vmem>>, %arg5: memref<2x1x96xf32, #tpu.memory_space<vmem>>, %arg6: memref<2x32x32xbf16, #tpu.memory_space<vmem>>, %arg7: memref<2x1x32xf32, #tpu.memory_space<vmem>>, %arg8: memref<2x1x32xf32, #tpu.memory_space<vmem>>, %arg9: memref<2x1x32xf32, #tpu.memory_space<vmem>>, %arg10: memref<2x32x64xbf16, #tpu.memory_space<vmem>>, %arg11: memref<2x1x64xf32, #tpu.memory_space<vmem>>, %arg12: memref<2x64x32xbf16, #tpu.memory_space<vmem>>, %arg13: memref<2x1x32xf32, #tpu.memory_space<vmem>>, %arg14: memref<2x1x32xf32, #tpu.memory_space<vmem>>, %arg15: memref<2x1x32xf32, #tpu.memory_space<vmem>>, %arg16: memref<2x32xf32, #tpu.memory_space<vmem>>, %arg17: memref<16x32xf32, #tpu.memory_space<vmem>>) attributes {dimension_semantics = [], scalar_prefetch = 0 : i64, scratch_operands = 1 : i64, tpu.core_type = #tpu.core_type<tc>} {
    %c0 = arith.constant 0 : index
    %c0_0 = arith.constant 0 : index
    %0 = vector.load %arg1[%c0, %c0_0] : memref<2x8xf32, #tpu.memory_space<vmem>>, vector<2x8xf32>
    %cst = arith.constant 1.000000e+00 : f32
    %1 = vector.broadcast %cst : f32 to vector<2x8xf32>
    %2 = arith.subf %1, %0 : vector<2x8xf32>
    %cst_1 = arith.constant -1.000000e+09 : f32
    %3 = vector.broadcast %cst_1 : f32 to vector<2x8xf32>
    %4 = arith.mulf %2, %3 : vector<2x8xf32>
    %c0_2 = arith.constant 0 : index
    %c0_3 = arith.constant 0 : index
    %5 = vector.load %arg0[%c0_2, %c0_3] : memref<16x32xf32, #tpu.memory_space<vmem>>, vector<16x32xf32>
    %c0_4 = arith.constant 0 : index
    %c0_5 = arith.constant 0 : index
    %6 = vector.load %arg2[%c0_4, %c0_5] : memref<1x32xf32, #tpu.memory_space<vmem>>, vector<1x32xf32>
    %c0_6 = arith.constant 0 : index
    %c0_7 = arith.constant 0 : index
    %7 = vector.load %arg3[%c0_6, %c0_7] : memref<1x32xf32, #tpu.memory_space<vmem>>, vector<1x32xf32>
    %cst_8 = arith.constant dense<0.000000e+00> : vector<16xf32>
    %8 = vector.multi_reduction <add>, %5, %cst_8 [1] : vector<16x32xf32> to vector<16xf32>
    %9 = vector.shape_cast %8 : vector<16xf32> to vector<16x1xf32>
    %cst_9 = arith.constant 3.200000e+01 : f32
    %10 = vector.broadcast %cst_9 : f32 to vector<16x1xf32>
    %11 = arith.divf %9, %10 : vector<16x1xf32>
    %12 = vector.broadcast %11 : vector<16x1xf32> to vector<16x32xf32>
    %13 = arith.subf %5, %12 : vector<16x32xf32>
    %14 = arith.mulf %13, %13 : vector<16x32xf32>
    %cst_10 = arith.constant dense<0.000000e+00> : vector<16xf32>
    %15 = vector.multi_reduction <add>, %14, %cst_10 [1] : vector<16x32xf32> to vector<16xf32>
    %16 = vector.shape_cast %15 : vector<16xf32> to vector<16x1xf32>
    %cst_11 = arith.constant 3.200000e+01 : f32
    %17 = vector.broadcast %cst_11 : f32 to vector<16x1xf32>
    %18 = arith.divf %16, %17 : vector<16x1xf32>
    %19 = vector.broadcast %11 : vector<16x1xf32> to vector<16x32xf32>
    %20 = arith.subf %5, %19 : vector<16x32xf32>
    %cst_12 = arith.constant 9.99999996E-13 : f32
    %21 = vector.broadcast %cst_12 : f32 to vector<16x1xf32>
    %22 = arith.addf %18, %21 : vector<16x1xf32>
    %23 = math.rsqrt %22 : vector<16x1xf32>
    %24 = vector.broadcast %23 : vector<16x1xf32> to vector<16x32xf32>
    %25 = arith.mulf %20, %24 : vector<16x32xf32>
    %26 = vector.broadcast %6 : vector<1x32xf32> to vector<16x32xf32>
    %27 = arith.mulf %25, %26 : vector<16x32xf32>
    %28 = vector.broadcast %7 : vector<1x32xf32> to vector<16x32xf32>
    %29 = arith.addf %27, %28 : vector<16x32xf32>
    %30 = arith.truncf %29 : vector<16x32xf32> to vector<16x32xbf16>
    %c0_13 = arith.constant 0 : index
    %c0_14 = arith.constant 0 : index
    %c0_15 = arith.constant 0 : index
    %31 = vector.load %arg4[%c0_13, %c0_14, %c0_15] : memref<2x32x96xbf16, #tpu.memory_space<vmem>>, vector<1x32x96xbf16>
    %32 = vector.shape_cast %31 : vector<1x32x96xbf16> to vector<32x96xbf16>
    %cst_16 = arith.constant dense<0.000000e+00> : vector<16x96xf32>
    %33 = tpu.matmul %30, %32, %cst_16 {dimension_numbers = #tpu.dot_dimension_numbers<[1], [0], [0], [1], [0, 0, 1, 1], [], []>} : vector<16x32xbf16>, vector<32x96xbf16>, vector<16x96xf32> -> vector<16x96xf32>
    %c0_17 = arith.constant 0 : index
    %c0_18 = arith.constant 0 : index
    %c0_19 = arith.constant 0 : index
    %34 = vector.load %arg5[%c0_17, %c0_18, %c0_19] : memref<2x1x96xf32, #tpu.memory_space<vmem>>, vector<1x1x96xf32>
    %35 = vector.shape_cast %34 : vector<1x1x96xf32> to vector<1x96xf32>
    %36 = vector.broadcast %35 : vector<1x96xf32> to vector<16x96xf32>
    %37 = arith.addf %33, %36 : vector<16x96xf32>
    %38 = arith.truncf %37 : vector<16x96xf32> to vector<16x96xbf16>
    %39 = vector.extract_strided_slice %4 {offsets = [0, 0], sizes = [1, 8], strides = [1, 1]} : vector<2x8xf32> to vector<1x8xf32>
    %40 = vector.extract_strided_slice %38 {offsets = [0, 0], sizes = [8, 8], strides = [1, 1]} : vector<16x96xbf16> to vector<8x8xbf16>
    %41 = vector.extract_strided_slice %38 {offsets = [0, 32], sizes = [8, 8], strides = [1, 1]} : vector<16x96xbf16> to vector<8x8xbf16>
    %42 = vector.extract_strided_slice %38 {offsets = [0, 64], sizes = [8, 8], strides = [1, 1]} : vector<16x96xbf16> to vector<8x8xbf16>
    %cst_20 = arith.constant dense<0.000000e+00> : vector<8x8xf32>
    %43 = tpu.matmul %40, %41, %cst_20 {dimension_numbers = #tpu.dot_dimension_numbers<[1], [1], [0], [0], [0, 0, 1, 0], [], []>} : vector<8x8xbf16>, vector<8x8xbf16>, vector<8x8xf32> -> vector<8x8xf32>
    %44 = vector.broadcast %39 : vector<1x8xf32> to vector<8x8xf32>
    %45 = arith.addf %43, %44 : vector<8x8xf32>
    %cst_21 = arith.constant dense<0xFF800000> : vector<8xf32>
    %46 = vector.multi_reduction <maximumf>, %45, %cst_21 [1] : vector<8x8xf32> to vector<8xf32>
    %47 = vector.shape_cast %46 : vector<8xf32> to vector<8x1xf32>
    %48 = vector.broadcast %47 : vector<8x1xf32> to vector<8x8xf32>
    %49 = arith.subf %45, %48 : vector<8x8xf32>
    %50 = math.exp %49 : vector<8x8xf32>
    %cst_22 = arith.constant dense<0.000000e+00> : vector<8xf32>
    %51 = vector.multi_reduction <add>, %50, %cst_22 [1] : vector<8x8xf32> to vector<8xf32>
    %52 = vector.shape_cast %51 : vector<8xf32> to vector<8x1xf32>
    %53 = tpu.reciprocal %52 {approx = true} : vector<8x1xf32> -> vector<8x1xf32>
    %54 = vector.broadcast %53 : vector<8x1xf32> to vector<8x8xf32>
    %55 = arith.mulf %50, %54 : vector<8x8xf32>
    %56 = arith.truncf %55 : vector<8x8xf32> to vector<8x8xbf16>
    %cst_23 = arith.constant dense<0.000000e+00> : vector<8x8xf32>
    %57 = tpu.matmul %56, %42, %cst_23 {dimension_numbers = #tpu.dot_dimension_numbers<[1], [0], [0], [1], [0, 0, 1, 1], [], []>} : vector<8x8xbf16>, vector<8x8xbf16>, vector<8x8xf32> -> vector<8x8xf32>
    %c0_24 = arith.constant 0 : index
    %c0_25 = arith.constant 0 : index
    %58 = vector.load %arg17[%c0_24, %c0_25] : memref<16x32xf32, #tpu.memory_space<vmem>>, vector<8x8xf32>
    tpu.vector_store %arg17[%c0_24, %c0_25], %57 {strides = array<i32>} : memref<16x32xf32, #tpu.memory_space<vmem>>, vector<8x8xf32>,
    %59 = vector.extract_strided_slice %38 {offsets = [0, 8], sizes = [8, 8], strides = [1, 1]} : vector<16x96xbf16> to vector<8x8xbf16>
    %60 = vector.extract_strided_slice %38 {offsets = [0, 40], sizes = [8, 8], strides = [1, 1]} : vector<16x96xbf16> to vector<8x8xbf16>
    %61 = vector.extract_strided_slice %38 {offsets = [0, 72], sizes = [8, 8], strides = [1, 1]} : vector<16x96xbf16> to vector<8x8xbf16>
    %cst_26 = arith.constant dense<0.000000e+00> : vector<8x8xf32>
    %62 = tpu.matmul %59, %60, %cst_26 {dimension_numbers = #tpu.dot_dimension_numbers<[1], [1], [0], [0], [0, 0, 1, 0], [], []>} : vector<8x8xbf16>, vector<8x8xbf16>, vector<8x8xf32> -> vector<8x8xf32>
    %63 = vector.broadcast %39 : vector<1x8xf32> to vector<8x8xf32>
    %64 = arith.addf %62, %63 : vector<8x8xf32>
    %cst_27 = arith.constant dense<0xFF800000> : vector<8xf32>
    %65 = vector.multi_reduction <maximumf>, %64, %cst_27 [1] : vector<8x8xf32> to vector<8xf32>
    %66 = vector.shape_cast %65 : vector<8xf32> to vector<8x1xf32>
    %67 = vector.broadcast %66 : vector<8x1xf32> to vector<8x8xf32>
    %68 = arith.subf %64, %67 : vector<8x8xf32>
    %69 = math.exp %68 : vector<8x8xf32>
    %cst_28 = arith.constant dense<0.000000e+00> : vector<8xf32>
    %70 = vector.multi_reduction <add>, %69, %cst_28 [1] : vector<8x8xf32> to vector<8xf32>
    %71 = vector.shape_cast %70 : vector<8xf32> to vector<8x1xf32>
    %72 = tpu.reciprocal %71 {approx = true} : vector<8x1xf32> -> vector<8x1xf32>
    %73 = vector.broadcast %72 : vector<8x1xf32> to vector<8x8xf32>
    %74 = arith.mulf %69, %73 : vector<8x8xf32>
    %75 = arith.truncf %74 : vector<8x8xf32> to vector<8x8xbf16>
    %cst_29 = arith.constant dense<0.000000e+00> : vector<8x8xf32>
    %76 = tpu.matmul %75, %61, %cst_29 {dimension_numbers = #tpu.dot_dimension_numbers<[1], [0], [0], [1], [0, 0, 1, 1], [], []>} : vector<8x8xbf16>, vector<8x8xbf16>, vector<8x8xf32> -> vector<8x8xf32>
    %c0_30 = arith.constant 0 : index
    %c8 = arith.constant 8 : index
    %77 = vector.load %arg17[%c0_30, %c8] : memref<16x32xf32, #tpu.memory_space<vmem>>, vector<8x8xf32>
    tpu.vector_store %arg17[%c0_30, %c8], %76 {strides = array<i32>} : memref<16x32xf32, #tpu.memory_space<vmem>>, vector<8x8xf32>,
    %78 = vector.extract_strided_slice %38 {offsets = [0, 16], sizes = [8, 8], strides = [1, 1]} : vector<16x96xbf16> to vector<8x8xbf16>
    %79 = vector.extract_strided_slice %38 {offsets = [0, 48], sizes = [8, 8], strides = [1, 1]} : vector<16x96xbf16> to vector<8x8xbf16>
    %80 = vector.extract_strided_slice %38 {offsets = [0, 80], sizes = [8, 8], strides = [1, 1]} : vector<16x96xbf16> to vector<8x8xbf16>
    %cst_31 = arith.constant dense<0.000000e+00> : vector<8x8xf32>
    %81 = tpu.matmul %78, %79, %cst_31 {dimension_numbers = #tpu.dot_dimension_numbers<[1], [1], [0], [0], [0, 0, 1, 0], [], []>} : vector<8x8xbf16>, vector<8x8xbf16>, vector<8x8xf32> -> vector<8x8xf32>
    %82 = vector.broadcast %39 : vector<1x8xf32> to vector<8x8xf32>
    %83 = arith.addf %81, %82 : vector<8x8xf32>
    %cst_32 = arith.constant dense<0xFF800000> : vector<8xf32>
    %84 = vector.multi_reduction <maximumf>, %83, %cst_32 [1] : vector<8x8xf32> to vector<8xf32>
    %85 = vector.shape_cast %84 : vector<8xf32> to vector<8x1xf32>
    %86 = vector.broadcast %85 : vector<8x1xf32> to vector<8x8xf32>
    %87 = arith.subf %83, %86 : vector<8x8xf32>
    %88 = math.exp %87 : vector<8x8xf32>
    %cst_33 = arith.constant dense<0.000000e+00> : vector<8xf32>
    %89 = vector.multi_reduction <add>, %88, %cst_33 [1] : vector<8x8xf32> to vector<8xf32>
    %90 = vector.shape_cast %89 : vector<8xf32> to vector<8x1xf32>
    %91 = tpu.reciprocal %90 {approx = true} : vector<8x1xf32> -> vector<8x1xf32>
    %92 = vector.broadcast %91 : vector<8x1xf32> to vector<8x8xf32>
    %93 = arith.mulf %88, %92 : vector<8x8xf32>
    %94 = arith.truncf %93 : vector<8x8xf32> to vector<8x8xbf16>
    %cst_34 = arith.constant dense<0.000000e+00> : vector<8x8xf32>
    %95 = tpu.matmul %94, %80, %cst_34 {dimension_numbers = #tpu.dot_dimension_numbers<[1], [0], [0], [1], [0, 0, 1, 1], [], []>} : vector<8x8xbf16>, vector<8x8xbf16>, vector<8x8xf32> -> vector<8x8xf32>
    %c0_35 = arith.constant 0 : index
    %c16 = arith.constant 16 : index
    %96 = vector.load %arg17[%c0_35, %c16] : memref<16x32xf32, #tpu.memory_space<vmem>>, vector<8x8xf32>
    tpu.vector_store %arg17[%c0_35, %c16], %95 {strides = array<i32>} : memref<16x32xf32, #tpu.memory_space<vmem>>, vector<8x8xf32>,
    %97 = vector.extract_strided_slice %38 {offsets = [0, 24], sizes = [8, 8], strides = [1, 1]} : vector<16x96xbf16> to vector<8x8xbf16>
    %98 = vector.extract_strided_slice %38 {offsets = [0, 56], sizes = [8, 8], strides = [1, 1]} : vector<16x96xbf16> to vector<8x8xbf16>
    %99 = vector.extract_strided_slice %38 {offsets = [0, 88], sizes = [8, 8], strides = [1, 1]} : vector<16x96xbf16> to vector<8x8xbf16>
    %cst_36 = arith.constant dense<0.000000e+00> : vector<8x8xf32>
    %100 = tpu.matmul %97, %98, %cst_36 {dimension_numbers = #tpu.dot_dimension_numbers<[1], [1], [0], [0], [0, 0, 1, 0], [], []>} : vector<8x8xbf16>, vector<8x8xbf16>, vector<8x8xf32> -> vector<8x8xf32>
    %101 = vector.broadcast %39 : vector<1x8xf32> to vector<8x8xf32>
    %102 = arith.addf %100, %101 : vector<8x8xf32>
    %cst_37 = arith.constant dense<0xFF800000> : vector<8xf32>
    %103 = vector.multi_reduction <maximumf>, %102, %cst_37 [1] : vector<8x8xf32> to vector<8xf32>
    %104 = vector.shape_cast %103 : vector<8xf32> to vector<8x1xf32>
    %105 = vector.broadcast %104 : vector<8x1xf32> to vector<8x8xf32>
    %106 = arith.subf %102, %105 : vector<8x8xf32>
    %107 = math.exp %106 : vector<8x8xf32>
    %cst_38 = arith.constant dense<0.000000e+00> : vector<8xf32>
    %108 = vector.multi_reduction <add>, %107, %cst_38 [1] : vector<8x8xf32> to vector<8xf32>
    %109 = vector.shape_cast %108 : vector<8xf32> to vector<8x1xf32>
    %110 = tpu.reciprocal %109 {approx = true} : vector<8x1xf32> -> vector<8x1xf32>
    %111 = vector.broadcast %110 : vector<8x1xf32> to vector<8x8xf32>
    %112 = arith.mulf %107, %111 : vector<8x8xf32>
    %113 = arith.truncf %112 : vector<8x8xf32> to vector<8x8xbf16>
    %cst_39 = arith.constant dense<0.000000e+00> : vector<8x8xf32>
    %114 = tpu.matmul %113, %99, %cst_39 {dimension_numbers = #tpu.dot_dimension_numbers<[1], [0], [0], [1], [0, 0, 1, 1], [], []>} : vector<8x8xbf16>, vector<8x8xbf16>, vector<8x8xf32> -> vector<8x8xf32>
    %c0_40 = arith.constant 0 : index
    %c24 = arith.constant 24 : index
    %115 = vector.load %arg17[%c0_40, %c24] : memref<16x32xf32, #tpu.memory_space<vmem>>, vector<8x8xf32>
    tpu.vector_store %arg17[%c0_40, %c24], %114 {strides = array<i32>} : memref<16x32xf32, #tpu.memory_space<vmem>>, vector<8x8xf32>,
    %116 = vector.extract_strided_slice %4 {offsets = [1, 0], sizes = [1, 8], strides = [1, 1]} : vector<2x8xf32> to vector<1x8xf32>
    %117 = vector.extract_strided_slice %38 {offsets = [8, 0], sizes = [8, 8], strides = [1, 1]} : vector<16x96xbf16> to vector<8x8xbf16>
    %118 = vector.extract_strided_slice %38 {offsets = [8, 32], sizes = [8, 8], strides = [1, 1]} : vector<16x96xbf16> to vector<8x8xbf16>
    %119 = vector.extract_strided_slice %38 {offsets = [8, 64], sizes = [8, 8], strides = [1, 1]} : vector<16x96xbf16> to vector<8x8xbf16>
    %cst_41 = arith.constant dense<0.000000e+00> : vector<8x8xf32>
    %120 = tpu.matmul %117, %118, %cst_41 {dimension_numbers = #tpu.dot_dimension_numbers<[1], [1], [0], [0], [0, 0, 1, 0], [], []>} : vector<8x8xbf16>, vector<8x8xbf16>, vector<8x8xf32> -> vector<8x8xf32>
    %121 = vector.broadcast %116 : vector<1x8xf32> to vector<8x8xf32>
    %122 = arith.addf %120, %121 : vector<8x8xf32>
    %cst_42 = arith.constant dense<0xFF800000> : vector<8xf32>
    %123 = vector.multi_reduction <maximumf>, %122, %cst_42 [1] : vector<8x8xf32> to vector<8xf32>
    %124 = vector.shape_cast %123 : vector<8xf32> to vector<8x1xf32>
    %125 = vector.broadcast %124 : vector<8x1xf32> to vector<8x8xf32>
    %126 = arith.subf %122, %125 : vector<8x8xf32>
    %127 = math.exp %126 : vector<8x8xf32>
    %cst_43 = arith.constant dense<0.000000e+00> : vector<8xf32>
    %128 = vector.multi_reduction <add>, %127, %cst_43 [1] : vector<8x8xf32> to vector<8xf32>
    %129 = vector.shape_cast %128 : vector<8xf32> to vector<8x1xf32>
    %130 = tpu.reciprocal %129 {approx = true} : vector<8x1xf32> -> vector<8x1xf32>
    %131 = vector.broadcast %130 : vector<8x1xf32> to vector<8x8xf32>
    %132 = arith.mulf %127, %131 : vector<8x8xf32>
    %133 = arith.truncf %132 : vector<8x8xf32> to vector<8x8xbf16>
    %cst_44 = arith.constant dense<0.000000e+00> : vector<8x8xf32>
    %134 = tpu.matmul %133, %119, %cst_44 {dimension_numbers = #tpu.dot_dimension_numbers<[1], [0], [0], [1], [0, 0, 1, 1], [], []>} : vector<8x8xbf16>, vector<8x8xbf16>, vector<8x8xf32> -> vector<8x8xf32>
    %c8_45 = arith.constant 8 : index
    %c0_46 = arith.constant 0 : index
    %135 = vector.load %arg17[%c8_45, %c0_46] : memref<16x32xf32, #tpu.memory_space<vmem>>, vector<8x8xf32>
    tpu.vector_store %arg17[%c8_45, %c0_46], %134 {strides = array<i32>} : memref<16x32xf32, #tpu.memory_space<vmem>>, vector<8x8xf32>,
    %136 = vector.extract_strided_slice %38 {offsets = [8, 8], sizes = [8, 8], strides = [1, 1]} : vector<16x96xbf16> to vector<8x8xbf16>
    %137 = vector.extract_strided_slice %38 {offsets = [8, 40], sizes = [8, 8], strides = [1, 1]} : vector<16x96xbf16> to vector<8x8xbf16>
    %138 = vector.extract_strided_slice %38 {offsets = [8, 72], sizes = [8, 8], strides = [1, 1]} : vector<16x96xbf16> to vector<8x8xbf16>
    %cst_47 = arith.constant dense<0.000000e+00> : vector<8x8xf32>
    %139 = tpu.matmul %136, %137, %cst_47 {dimension_numbers = #tpu.dot_dimension_numbers<[1], [1], [0], [0], [0, 0, 1, 0], [], []>} : vector<8x8xbf16>, vector<8x8xbf16>, vector<8x8xf32> -> vector<8x8xf32>
    %140 = vector.broadcast %116 : vector<1x8xf32> to vector<8x8xf32>
    %141 = arith.addf %139, %140 : vector<8x8xf32>
    %cst_48 = arith.constant dense<0xFF800000> : vector<8xf32>
    %142 = vector.multi_reduction <maximumf>, %141, %cst_48 [1] : vector<8x8xf32> to vector<8xf32>
    %143 = vector.shape_cast %142 : vector<8xf32> to vector<8x1xf32>
    %144 = vector.broadcast %143 : vector<8x1xf32> to vector<8x8xf32>
    %145 = arith.subf %141, %144 : vector<8x8xf32>
    %146 = math.exp %145 : vector<8x8xf32>
    %cst_49 = arith.constant dense<0.000000e+00> : vector<8xf32>
    %147 = vector.multi_reduction <add>, %146, %cst_49 [1] : vector<8x8xf32> to vector<8xf32>
    %148 = vector.shape_cast %147 : vector<8xf32> to vector<8x1xf32>
    %149 = tpu.reciprocal %148 {approx = true} : vector<8x1xf32> -> vector<8x1xf32>
    %150 = vector.broadcast %149 : vector<8x1xf32> to vector<8x8xf32>
    %151 = arith.mulf %146, %150 : vector<8x8xf32>
    %152 = arith.truncf %151 : vector<8x8xf32> to vector<8x8xbf16>
    %cst_50 = arith.constant dense<0.000000e+00> : vector<8x8xf32>
    %153 = tpu.matmul %152, %138, %cst_50 {dimension_numbers = #tpu.dot_dimension_numbers<[1], [0], [0], [1], [0, 0, 1, 1], [], []>} : vector<8x8xbf16>, vector<8x8xbf16>, vector<8x8xf32> -> vector<8x8xf32>
    %c8_51 = arith.constant 8 : index
    %c8_52 = arith.constant 8 : index
    %154 = vector.load %arg17[%c8_51, %c8_52] : memref<16x32xf32, #tpu.memory_space<vmem>>, vector<8x8xf32>
    tpu.vector_store %arg17[%c8_51, %c8_52], %153 {strides = array<i32>} : memref<16x32xf32, #tpu.memory_space<vmem>>, vector<8x8xf32>,
    %155 = vector.extract_strided_slice %38 {offsets = [8, 16], sizes = [8, 8], strides = [1, 1]} : vector<16x96xbf16> to vector<8x8xbf16>
    %156 = vector.extract_strided_slice %38 {offsets = [8, 48], sizes = [8, 8], strides = [1, 1]} : vector<16x96xbf16> to vector<8x8xbf16>
    %157 = vector.extract_strided_slice %38 {offsets = [8, 80], sizes = [8, 8], strides = [1, 1]} : vector<16x96xbf16> to vector<8x8xbf16>
    %cst_53 = arith.constant dense<0.000000e+00> : vector<8x8xf32>
    %158 = tpu.matmul %155, %156, %cst_53 {dimension_numbers = #tpu.dot_dimension_numbers<[1], [1], [0], [0], [0, 0, 1, 0], [], []>} : vector<8x8xbf16>, vector<8x8xbf16>, vector<8x8xf32> -> vector<8x8xf32>
    %159 = vector.broadcast %116 : vector<1x8xf32> to vector<8x8xf32>
    %160 = arith.addf %158, %159 : vector<8x8xf32>
    %cst_54 = arith.constant dense<0xFF800000> : vector<8xf32>
    %161 = vector.multi_reduction <maximumf>, %160, %cst_54 [1] : vector<8x8xf32> to vector<8xf32>
    %162 = vector.shape_cast %161 : vector<8xf32> to vector<8x1xf32>
    %163 = vector.broadcast %162 : vector<8x1xf32> to vector<8x8xf32>
    %164 = arith.subf %160, %163 : vector<8x8xf32>
    %165 = math.exp %164 : vector<8x8xf32>
    %cst_55 = arith.constant dense<0.000000e+00> : vector<8xf32>
    %166 = vector.multi_reduction <add>, %165, %cst_55 [1] : vector<8x8xf32> to vector<8xf32>
    %167 = vector.shape_cast %166 : vector<8xf32> to vector<8x1xf32>
    %168 = tpu.reciprocal %167 {approx = true} : vector<8x1xf32> -> vector<8x1xf32>
    %169 = vector.broadcast %168 : vector<8x1xf32> to vector<8x8xf32>
    %170 = arith.mulf %165, %169 : vector<8x8xf32>
    %171 = arith.truncf %170 : vector<8x8xf32> to vector<8x8xbf16>
    %cst_56 = arith.constant dense<0.000000e+00> : vector<8x8xf32>
    %172 = tpu.matmul %171, %157, %cst_56 {dimension_numbers = #tpu.dot_dimension_numbers<[1], [0], [0], [1], [0, 0, 1, 1], [], []>} : vector<8x8xbf16>, vector<8x8xbf16>, vector<8x8xf32> -> vector<8x8xf32>
    %c8_57 = arith.constant 8 : index
    %c16_58 = arith.constant 16 : index
    %173 = vector.load %arg17[%c8_57, %c16_58] : memref<16x32xf32, #tpu.memory_space<vmem>>, vector<8x8xf32>
    tpu.vector_store %arg17[%c8_57, %c16_58], %172 {strides = array<i32>} : memref<16x32xf32, #tpu.memory_space<vmem>>, vector<8x8xf32>,
    %174 = vector.extract_strided_slice %38 {offsets = [8, 24], sizes = [8, 8], strides = [1, 1]} : vector<16x96xbf16> to vector<8x8xbf16>
    %175 = vector.extract_strided_slice %38 {offsets = [8, 56], sizes = [8, 8], strides = [1, 1]} : vector<16x96xbf16> to vector<8x8xbf16>
    %176 = vector.extract_strided_slice %38 {offsets = [8, 88], sizes = [8, 8], strides = [1, 1]} : vector<16x96xbf16> to vector<8x8xbf16>
    %cst_59 = arith.constant dense<0.000000e+00> : vector<8x8xf32>
    %177 = tpu.matmul %174, %175, %cst_59 {dimension_numbers = #tpu.dot_dimension_numbers<[1], [1], [0], [0], [0, 0, 1, 0], [], []>} : vector<8x8xbf16>, vector<8x8xbf16>, vector<8x8xf32> -> vector<8x8xf32>
    %178 = vector.broadcast %116 : vector<1x8xf32> to vector<8x8xf32>
    %179 = arith.addf %177, %178 : vector<8x8xf32>
    %cst_60 = arith.constant dense<0xFF800000> : vector<8xf32>
    %180 = vector.multi_reduction <maximumf>, %179, %cst_60 [1] : vector<8x8xf32> to vector<8xf32>
    %181 = vector.shape_cast %180 : vector<8xf32> to vector<8x1xf32>
    %182 = vector.broadcast %181 : vector<8x1xf32> to vector<8x8xf32>
    %183 = arith.subf %179, %182 : vector<8x8xf32>
    %184 = math.exp %183 : vector<8x8xf32>
    %cst_61 = arith.constant dense<0.000000e+00> : vector<8xf32>
    %185 = vector.multi_reduction <add>, %184, %cst_61 [1] : vector<8x8xf32> to vector<8xf32>
    %186 = vector.shape_cast %185 : vector<8xf32> to vector<8x1xf32>
    %187 = tpu.reciprocal %186 {approx = true} : vector<8x1xf32> -> vector<8x1xf32>
    %188 = vector.broadcast %187 : vector<8x1xf32> to vector<8x8xf32>
    %189 = arith.mulf %184, %188 : vector<8x8xf32>
    %190 = arith.truncf %189 : vector<8x8xf32> to vector<8x8xbf16>
    %cst_62 = arith.constant dense<0.000000e+00> : vector<8x8xf32>
    %191 = tpu.matmul %190, %176, %cst_62 {dimension_numbers = #tpu.dot_dimension_numbers<[1], [0], [0], [1], [0, 0, 1, 1], [], []>} : vector<8x8xbf16>, vector<8x8xbf16>, vector<8x8xf32> -> vector<8x8xf32>
    %c8_63 = arith.constant 8 : index
    %c24_64 = arith.constant 24 : index
    %192 = vector.load %arg17[%c8_63, %c24_64] : memref<16x32xf32, #tpu.memory_space<vmem>>, vector<8x8xf32>
    tpu.vector_store %arg17[%c8_63, %c24_64], %191 {strides = array<i32>} : memref<16x32xf32, #tpu.memory_space<vmem>>, vector<8x8xf32>,
    %c0_65 = arith.constant 0 : index
    %c0_66 = arith.constant 0 : index
    %193 = vector.load %arg17[%c0_65, %c0_66] : memref<16x32xf32, #tpu.memory_space<vmem>>, vector<16x32xf32>
    %194 = arith.truncf %193 : vector<16x32xf32> to vector<16x32xbf16>
    %c0_67 = arith.constant 0 : index
    %c0_68 = arith.constant 0 : index
    %c0_69 = arith.constant 0 : index
    %195 = vector.load %arg6[%c0_67, %c0_68, %c0_69] : memref<2x32x32xbf16, #tpu.memory_space<vmem>>, vector<1x32x32xbf16>
    %196 = vector.shape_cast %195 : vector<1x32x32xbf16> to vector<32x32xbf16>
    %cst_70 = arith.constant dense<0.000000e+00> : vector<16x32xf32>
    %197 = tpu.matmul %194, %196, %cst_70 {dimension_numbers = #tpu.dot_dimension_numbers<[1], [0], [0], [1], [0, 0, 1, 1], [], []>} : vector<16x32xbf16>, vector<32x32xbf16>, vector<16x32xf32> -> vector<16x32xf32>
    %c0_71 = arith.constant 0 : index
    %c0_72 = arith.constant 0 : index
    %c0_73 = arith.constant 0 : index
    %198 = vector.load %arg7[%c0_71, %c0_72, %c0_73] : memref<2x1x32xf32, #tpu.memory_space<vmem>>, vector<1x1x32xf32>
    %199 = vector.shape_cast %198 : vector<1x1x32xf32> to vector<1x32xf32>
    %200 = vector.broadcast %199 : vector<1x32xf32> to vector<16x32xf32>
    %201 = arith.addf %197, %200 : vector<16x32xf32>
    %202 = arith.addf %201, %29 : vector<16x32xf32>
    %c0_74 = arith.constant 0 : index
    %c0_75 = arith.constant 0 : index
    %c0_76 = arith.constant 0 : index
    %203 = vector.load %arg8[%c0_74, %c0_75, %c0_76] : memref<2x1x32xf32, #tpu.memory_space<vmem>>, vector<1x1x32xf32>
    %204 = vector.shape_cast %203 : vector<1x1x32xf32> to vector<1x32xf32>
    %c0_77 = arith.constant 0 : index
    %c0_78 = arith.constant 0 : index
    %c0_79 = arith.constant 0 : index
    %205 = vector.load %arg9[%c0_77, %c0_78, %c0_79] : memref<2x1x32xf32, #tpu.memory_space<vmem>>, vector<1x1x32xf32>
    %206 = vector.shape_cast %205 : vector<1x1x32xf32> to vector<1x32xf32>
    %cst_80 = arith.constant dense<0.000000e+00> : vector<16xf32>
    %207 = vector.multi_reduction <add>, %202, %cst_80 [1] : vector<16x32xf32> to vector<16xf32>
    %208 = vector.shape_cast %207 : vector<16xf32> to vector<16x1xf32>
    %cst_81 = arith.constant 3.200000e+01 : f32
    %209 = vector.broadcast %cst_81 : f32 to vector<16x1xf32>
    %210 = arith.divf %208, %209 : vector<16x1xf32>
    %211 = vector.broadcast %210 : vector<16x1xf32> to vector<16x32xf32>
    %212 = arith.subf %202, %211 : vector<16x32xf32>
    %213 = arith.mulf %212, %212 : vector<16x32xf32>
    %cst_82 = arith.constant dense<0.000000e+00> : vector<16xf32>
    %214 = vector.multi_reduction <add>, %213, %cst_82 [1] : vector<16x32xf32> to vector<16xf32>
    %215 = vector.shape_cast %214 : vector<16xf32> to vector<16x1xf32>
    %cst_83 = arith.constant 3.200000e+01 : f32
    %216 = vector.broadcast %cst_83 : f32 to vector<16x1xf32>
    %217 = arith.divf %215, %216 : vector<16x1xf32>
    %218 = vector.broadcast %210 : vector<16x1xf32> to vector<16x32xf32>
    %219 = arith.subf %202, %218 : vector<16x32xf32>
    %cst_84 = arith.constant 9.99999996E-13 : f32
    %220 = vector.broadcast %cst_84 : f32 to vector<16x1xf32>
    %221 = arith.addf %217, %220 : vector<16x1xf32>
    %222 = math.rsqrt %221 : vector<16x1xf32>
    %223 = vector.broadcast %222 : vector<16x1xf32> to vector<16x32xf32>
    %224 = arith.mulf %219, %223 : vector<16x32xf32>
    %225 = vector.broadcast %204 : vector<1x32xf32> to vector<16x32xf32>
    %226 = arith.mulf %224, %225 : vector<16x32xf32>
    %227 = vector.broadcast %206 : vector<1x32xf32> to vector<16x32xf32>
    %228 = arith.addf %226, %227 : vector<16x32xf32>
    %229 = arith.truncf %228 : vector<16x32xf32> to vector<16x32xbf16>
    %c0_85 = arith.constant 0 : index
    %c0_86 = arith.constant 0 : index
    %c0_87 = arith.constant 0 : index
    %230 = vector.load %arg10[%c0_85, %c0_86, %c0_87] : memref<2x32x64xbf16, #tpu.memory_space<vmem>>, vector<1x32x64xbf16>
    %231 = vector.shape_cast %230 : vector<1x32x64xbf16> to vector<32x64xbf16>
    %cst_88 = arith.constant dense<0.000000e+00> : vector<16x64xf32>
    %232 = tpu.matmul %229, %231, %cst_88 {dimension_numbers = #tpu.dot_dimension_numbers<[1], [0], [0], [1], [0, 0, 1, 1], [], []>} : vector<16x32xbf16>, vector<32x64xbf16>, vector<16x64xf32> -> vector<16x64xf32>
    %c0_89 = arith.constant 0 : index
    %c0_90 = arith.constant 0 : index
    %c0_91 = arith.constant 0 : index
    %233 = vector.load %arg11[%c0_89, %c0_90, %c0_91] : memref<2x1x64xf32, #tpu.memory_space<vmem>>, vector<1x1x64xf32>
    %234 = vector.shape_cast %233 : vector<1x1x64xf32> to vector<1x64xf32>
    %235 = vector.broadcast %234 : vector<1x64xf32> to vector<16x64xf32>
    %236 = arith.addf %232, %235 : vector<16x64xf32>
    %cst_92 = arith.constant 5.000000e-01 : f32
    %237 = vector.broadcast %cst_92 : f32 to vector<16x64xf32>
    %238 = arith.mulf %237, %236 : vector<16x64xf32>
    %cst_93 = arith.constant 4.471500e-02 : f32
    %239 = vector.broadcast %cst_93 : f32 to vector<16x64xf32>
    %240 = arith.mulf %239, %236 : vector<16x64xf32>
    %241 = arith.mulf %240, %236 : vector<16x64xf32>
    %242 = arith.mulf %241, %236 : vector<16x64xf32>
    %243 = arith.addf %236, %242 : vector<16x64xf32>
    %cst_94 = arith.constant 0.797884583 : f32
    %244 = vector.broadcast %cst_94 : f32 to vector<16x64xf32>
    %245 = arith.mulf %244, %243 : vector<16x64xf32>
    %246 = math.tanh %245 : vector<16x64xf32>
    %cst_95 = arith.constant 1.000000e+00 : f32
    %247 = vector.broadcast %cst_95 : f32 to vector<16x64xf32>
    %248 = arith.addf %247, %246 : vector<16x64xf32>
    %249 = arith.mulf %238, %248 : vector<16x64xf32>
    %250 = arith.truncf %249 : vector<16x64xf32> to vector<16x64xbf16>
    %c0_96 = arith.constant 0 : index
    %c0_97 = arith.constant 0 : index
    %c0_98 = arith.constant 0 : index
    %251 = vector.load %arg12[%c0_96, %c0_97, %c0_98] : memref<2x64x32xbf16, #tpu.memory_space<vmem>>, vector<1x64x32xbf16>
    %252 = vector.shape_cast %251 : vector<1x64x32xbf16> to vector<64x32xbf16>
    %cst_99 = arith.constant dense<0.000000e+00> : vector<16x32xf32>
    %253 = tpu.matmul %250, %252, %cst_99 {dimension_numbers = #tpu.dot_dimension_numbers<[1], [0], [0], [1], [0, 0, 1, 1], [], []>} : vector<16x64xbf16>, vector<64x32xbf16>, vector<16x32xf32> -> vector<16x32xf32>
    %c0_100 = arith.constant 0 : index
    %c0_101 = arith.constant 0 : index
    %c0_102 = arith.constant 0 : index
    %254 = vector.load %arg13[%c0_100, %c0_101, %c0_102] : memref<2x1x32xf32, #tpu.memory_space<vmem>>, vector<1x1x32xf32>
    %255 = vector.shape_cast %254 : vector<1x1x32xf32> to vector<1x32xf32>
    %256 = vector.broadcast %255 : vector<1x32xf32> to vector<16x32xf32>
    %257 = arith.addf %253, %256 : vector<16x32xf32>
    %258 = arith.addf %257, %228 : vector<16x32xf32>
    %c0_103 = arith.constant 0 : index
    %c0_104 = arith.constant 0 : index
    %c0_105 = arith.constant 0 : index
    %259 = vector.load %arg14[%c0_103, %c0_104, %c0_105] : memref<2x1x32xf32, #tpu.memory_space<vmem>>, vector<1x1x32xf32>
    %260 = vector.shape_cast %259 : vector<1x1x32xf32> to vector<1x32xf32>
    %c0_106 = arith.constant 0 : index
    %c0_107 = arith.constant 0 : index
    %c0_108 = arith.constant 0 : index
    %261 = vector.load %arg15[%c0_106, %c0_107, %c0_108] : memref<2x1x32xf32, #tpu.memory_space<vmem>>, vector<1x1x32xf32>
    %262 = vector.shape_cast %261 : vector<1x1x32xf32> to vector<1x32xf32>
    %cst_109 = arith.constant dense<0.000000e+00> : vector<16xf32>
    %263 = vector.multi_reduction <add>, %258, %cst_109 [1] : vector<16x32xf32> to vector<16xf32>
    %264 = vector.shape_cast %263 : vector<16xf32> to vector<16x1xf32>
    %cst_110 = arith.constant 3.200000e+01 : f32
    %265 = vector.broadcast %cst_110 : f32 to vector<16x1xf32>
    %266 = arith.divf %264, %265 : vector<16x1xf32>
    %267 = vector.broadcast %266 : vector<16x1xf32> to vector<16x32xf32>
    %268 = arith.subf %258, %267 : vector<16x32xf32>
    %269 = arith.mulf %268, %268 : vector<16x32xf32>
    %cst_111 = arith.constant dense<0.000000e+00> : vector<16xf32>
    %270 = vector.multi_reduction <add>, %269, %cst_111 [1] : vector<16x32xf32> to vector<16xf32>
    %271 = vector.shape_cast %270 : vector<16xf32> to vector<16x1xf32>
    %cst_112 = arith.constant 3.200000e+01 : f32
    %272 = vector.broadcast %cst_112 : f32 to vector<16x1xf32>
    %273 = arith.divf %271, %272 : vector<16x1xf32>
    %274 = vector.broadcast %266 : vector<16x1xf32> to vector<16x32xf32>
    %275 = arith.subf %258, %274 : vector<16x32xf32>
    %cst_113 = arith.constant 9.99999996E-13 : f32
    %276 = vector.broadcast %cst_113 : f32 to vector<16x1xf32>
    %277 = arith.addf %273, %276 : vector<16x1xf32>
    %278 = math.rsqrt %277 : vector<16x1xf32>
    %279 = vector.broadcast %278 : vector<16x1xf32> to vector<16x32xf32>
    %280 = arith.mulf %275, %279 : vector<16x32xf32>
    %281 = vector.broadcast %260 : vector<1x32xf32> to vector<16x32xf32>
    %282 = arith.mulf %280, %281 : vector<16x32xf32>
    %283 = vector.broadcast %262 : vector<1x32xf32> to vector<16x32xf32>
    %284 = arith.addf %282, %283 : vector<16x32xf32>
    %285 = arith.truncf %284 : vector<16x32xf32> to vector<16x32xbf16>
    %c1 = arith.constant 1 : index
    %c0_114 = arith.constant 0 : index
    %c0_115 = arith.constant 0 : index
    %286 = vector.load %arg4[%c1, %c0_114, %c0_115] : memref<2x32x96xbf16, #tpu.memory_space<vmem>>, vector<1x32x96xbf16>
    %287 = vector.shape_cast %286 : vector<1x32x96xbf16> to vector<32x96xbf16>
    %cst_116 = arith.constant dense<0.000000e+00> : vector<16x96xf32>
    %288 = tpu.matmul %285, %287, %cst_116 {dimension_numbers = #tpu.dot_dimension_numbers<[1], [0], [0], [1], [0, 0, 1, 1], [], []>} : vector<16x32xbf16>, vector<32x96xbf16>, vector<16x96xf32> -> vector<16x96xf32>
    %c1_117 = arith.constant 1 : index
    %c0_118 = arith.constant 0 : index
    %c0_119 = arith.constant 0 : index
    %289 = vector.load %arg5[%c1_117, %c0_118, %c0_119] : memref<2x1x96xf32, #tpu.memory_space<vmem>>, vector<1x1x96xf32>
    %290 = vector.shape_cast %289 : vector<1x1x96xf32> to vector<1x96xf32>
    %291 = vector.broadcast %290 : vector<1x96xf32> to vector<16x96xf32>
    %292 = arith.addf %288, %291 : vector<16x96xf32>
    %293 = arith.truncf %292 : vector<16x96xf32> to vector<16x96xbf16>
    %294 = vector.extract_strided_slice %4 {offsets = [0, 0], sizes = [1, 8], strides = [1, 1]} : vector<2x8xf32> to vector<1x8xf32>
    %295 = vector.extract_strided_slice %293 {offsets = [0, 0], sizes = [8, 8], strides = [1, 1]} : vector<16x96xbf16> to vector<8x8xbf16>
    %296 = vector.extract_strided_slice %293 {offsets = [0, 32], sizes = [8, 8], strides = [1, 1]} : vector<16x96xbf16> to vector<8x8xbf16>
    %297 = vector.extract_strided_slice %293 {offsets = [0, 64], sizes = [8, 8], strides = [1, 1]} : vector<16x96xbf16> to vector<8x8xbf16>
    %cst_120 = arith.constant dense<0.000000e+00> : vector<8x8xf32>
    %298 = tpu.matmul %295, %296, %cst_120 {dimension_numbers = #tpu.dot_dimension_numbers<[1], [1], [0], [0], [0, 0, 1, 0], [], []>} : vector<8x8xbf16>, vector<8x8xbf16>, vector<8x8xf32> -> vector<8x8xf32>
    %299 = vector.broadcast %294 : vector<1x8xf32> to vector<8x8xf32>
    %300 = arith.addf %298, %299 : vector<8x8xf32>
    %cst_121 = arith.constant dense<0xFF800000> : vector<8xf32>
    %301 = vector.multi_reduction <maximumf>, %300, %cst_121 [1] : vector<8x8xf32> to vector<8xf32>
    %302 = vector.shape_cast %301 : vector<8xf32> to vector<8x1xf32>
    %303 = vector.broadcast %302 : vector<8x1xf32> to vector<8x8xf32>
    %304 = arith.subf %300, %303 : vector<8x8xf32>
    %305 = math.exp %304 : vector<8x8xf32>
    %cst_122 = arith.constant dense<0.000000e+00> : vector<8xf32>
    %306 = vector.multi_reduction <add>, %305, %cst_122 [1] : vector<8x8xf32> to vector<8xf32>
    %307 = vector.shape_cast %306 : vector<8xf32> to vector<8x1xf32>
    %308 = tpu.reciprocal %307 {approx = true} : vector<8x1xf32> -> vector<8x1xf32>
    %309 = vector.broadcast %308 : vector<8x1xf32> to vector<8x8xf32>
    %310 = arith.mulf %305, %309 : vector<8x8xf32>
    %311 = arith.truncf %310 : vector<8x8xf32> to vector<8x8xbf16>
    %cst_123 = arith.constant dense<0.000000e+00> : vector<8x8xf32>
    %312 = tpu.matmul %311, %297, %cst_123 {dimension_numbers = #tpu.dot_dimension_numbers<[1], [0], [0], [1], [0, 0, 1, 1], [], []>} : vector<8x8xbf16>, vector<8x8xbf16>, vector<8x8xf32> -> vector<8x8xf32>
    %c0_124 = arith.constant 0 : index
    %c0_125 = arith.constant 0 : index
    %313 = vector.load %arg17[%c0_124, %c0_125] : memref<16x32xf32, #tpu.memory_space<vmem>>, vector<8x8xf32>
    tpu.vector_store %arg17[%c0_124, %c0_125], %312 {strides = array<i32>} : memref<16x32xf32, #tpu.memory_space<vmem>>, vector<8x8xf32>,
    %314 = vector.extract_strided_slice %293 {offsets = [0, 8], sizes = [8, 8], strides = [1, 1]} : vector<16x96xbf16> to vector<8x8xbf16>
    %315 = vector.extract_strided_slice %293 {offsets = [0, 40], sizes = [8, 8], strides = [1, 1]} : vector<16x96xbf16> to vector<8x8xbf16>
    %316 = vector.extract_strided_slice %293 {offsets = [0, 72], sizes = [8, 8], strides = [1, 1]} : vector<16x96xbf16> to vector<8x8xbf16>
    %cst_126 = arith.constant dense<0.000000e+00> : vector<8x8xf32>
    %317 = tpu.matmul %314, %315, %cst_126 {dimension_numbers = #tpu.dot_dimension_numbers<[1], [1], [0], [0], [0, 0, 1, 0], [], []>} : vector<8x8xbf16>, vector<8x8xbf16>, vector<8x8xf32> -> vector<8x8xf32>
    %318 = vector.broadcast %294 : vector<1x8xf32> to vector<8x8xf32>
    %319 = arith.addf %317, %318 : vector<8x8xf32>
    %cst_127 = arith.constant dense<0xFF800000> : vector<8xf32>
    %320 = vector.multi_reduction <maximumf>, %319, %cst_127 [1] : vector<8x8xf32> to vector<8xf32>
    %321 = vector.shape_cast %320 : vector<8xf32> to vector<8x1xf32>
    %322 = vector.broadcast %321 : vector<8x1xf32> to vector<8x8xf32>
    %323 = arith.subf %319, %322 : vector<8x8xf32>
    %324 = math.exp %323 : vector<8x8xf32>
    %cst_128 = arith.constant dense<0.000000e+00> : vector<8xf32>
    %325 = vector.multi_reduction <add>, %324, %cst_128 [1] : vector<8x8xf32> to vector<8xf32>
    %326 = vector.shape_cast %325 : vector<8xf32> to vector<8x1xf32>
    %327 = tpu.reciprocal %326 {approx = true} : vector<8x1xf32> -> vector<8x1xf32>
    %328 = vector.broadcast %327 : vector<8x1xf32> to vector<8x8xf32>
    %329 = arith.mulf %324, %328 : vector<8x8xf32>
    %330 = arith.truncf %329 : vector<8x8xf32> to vector<8x8xbf16>
    %cst_129 = arith.constant dense<0.000000e+00> : vector<8x8xf32>
    %331 = tpu.matmul %330, %316, %cst_129 {dimension_numbers = #tpu.dot_dimension_numbers<[1], [0], [0], [1], [0, 0, 1, 1], [], []>} : vector<8x8xbf16>, vector<8x8xbf16>, vector<8x8xf32> -> vector<8x8xf32>
    %c0_130 = arith.constant 0 : index
    %c8_131 = arith.constant 8 : index
    %332 = vector.load %arg17[%c0_130, %c8_131] : memref<16x32xf32, #tpu.memory_space<vmem>>, vector<8x8xf32>
    tpu.vector_store %arg17[%c0_130, %c8_131], %331 {strides = array<i32>} : memref<16x32xf32, #tpu.memory_space<vmem>>, vector<8x8xf32>,
    %333 = vector.extract_strided_slice %293 {offsets = [0, 16], sizes = [8, 8], strides = [1, 1]} : vector<16x96xbf16> to vector<8x8xbf16>
    %334 = vector.extract_strided_slice %293 {offsets = [0, 48], sizes = [8, 8], strides = [1, 1]} : vector<16x96xbf16> to vector<8x8xbf16>
    %335 = vector.extract_strided_slice %293 {offsets = [0, 80], sizes = [8, 8], strides = [1, 1]} : vector<16x96xbf16> to vector<8x8xbf16>
    %cst_132 = arith.constant dense<0.000000e+00> : vector<8x8xf32>
    %336 = tpu.matmul %333, %334, %cst_132 {dimension_numbers = #tpu.dot_dimension_numbers<[1], [1], [0], [0], [0, 0, 1, 0], [], []>} : vector<8x8xbf16>, vector<8x8xbf16>, vector<8x8xf32> -> vector<8x8xf32>
    %337 = vector.broadcast %294 : vector<1x8xf32> to vector<8x8xf32>
    %338 = arith.addf %336, %337 : vector<8x8xf32>
    %cst_133 = arith.constant dense<0xFF800000> : vector<8xf32>
    %339 = vector.multi_reduction <maximumf>, %338, %cst_133 [1] : vector<8x8xf32> to vector<8xf32>
    %340 = vector.shape_cast %339 : vector<8xf32> to vector<8x1xf32>
    %341 = vector.broadcast %340 : vector<8x1xf32> to vector<8x8xf32>
    %342 = arith.subf %338, %341 : vector<8x8xf32>
    %343 = math.exp %342 : vector<8x8xf32>
    %cst_134 = arith.constant dense<0.000000e+00> : vector<8xf32>
    %344 = vector.multi_reduction <add>, %343, %cst_134 [1] : vector<8x8xf32> to vector<8xf32>
    %345 = vector.shape_cast %344 : vector<8xf32> to vector<8x1xf32>
    %346 = tpu.reciprocal %345 {approx = true} : vector<8x1xf32> -> vector<8x1xf32>
    %347 = vector.broadcast %346 : vector<8x1xf32> to vector<8x8xf32>
    %348 = arith.mulf %343, %347 : vector<8x8xf32>
    %349 = arith.truncf %348 : vector<8x8xf32> to vector<8x8xbf16>
    %cst_135 = arith.constant dense<0.000000e+00> : vector<8x8xf32>
    %350 = tpu.matmul %349, %335, %cst_135 {dimension_numbers = #tpu.dot_dimension_numbers<[1], [0], [0], [1], [0, 0, 1, 1], [], []>} : vector<8x8xbf16>, vector<8x8xbf16>, vector<8x8xf32> -> vector<8x8xf32>
    %c0_136 = arith.constant 0 : index
    %c16_137 = arith.constant 16 : index
    %351 = vector.load %arg17[%c0_136, %c16_137] : memref<16x32xf32, #tpu.memory_space<vmem>>, vector<8x8xf32>
    tpu.vector_store %arg17[%c0_136, %c16_137], %350 {strides = array<i32>} : memref<16x32xf32, #tpu.memory_space<vmem>>, vector<8x8xf32>,
    %352 = vector.extract_strided_slice %293 {offsets = [0, 24], sizes = [8, 8], strides = [1, 1]} : vector<16x96xbf16> to vector<8x8xbf16>
    %353 = vector.extract_strided_slice %293 {offsets = [0, 56], sizes = [8, 8], strides = [1, 1]} : vector<16x96xbf16> to vector<8x8xbf16>
    %354 = vector.extract_strided_slice %293 {offsets = [0, 88], sizes = [8, 8], strides = [1, 1]} : vector<16x96xbf16> to vector<8x8xbf16>
    %cst_138 = arith.constant dense<0.000000e+00> : vector<8x8xf32>
    %355 = tpu.matmul %352, %353, %cst_138 {dimension_numbers = #tpu.dot_dimension_numbers<[1], [1], [0], [0], [0, 0, 1, 0], [], []>} : vector<8x8xbf16>, vector<8x8xbf16>, vector<8x8xf32> -> vector<8x8xf32>
    %356 = vector.broadcast %294 : vector<1x8xf32> to vector<8x8xf32>
    %357 = arith.addf %355, %356 : vector<8x8xf32>
    %cst_139 = arith.constant dense<0xFF800000> : vector<8xf32>
    %358 = vector.multi_reduction <maximumf>, %357, %cst_139 [1] : vector<8x8xf32> to vector<8xf32>
    %359 = vector.shape_cast %358 : vector<8xf32> to vector<8x1xf32>
    %360 = vector.broadcast %359 : vector<8x1xf32> to vector<8x8xf32>
    %361 = arith.subf %357, %360 : vector<8x8xf32>
    %362 = math.exp %361 : vector<8x8xf32>
    %cst_140 = arith.constant dense<0.000000e+00> : vector<8xf32>
    %363 = vector.multi_reduction <add>, %362, %cst_140 [1] : vector<8x8xf32> to vector<8xf32>
    %364 = vector.shape_cast %363 : vector<8xf32> to vector<8x1xf32>
    %365 = tpu.reciprocal %364 {approx = true} : vector<8x1xf32> -> vector<8x1xf32>
    %366 = vector.broadcast %365 : vector<8x1xf32> to vector<8x8xf32>
    %367 = arith.mulf %362, %366 : vector<8x8xf32>
    %368 = arith.truncf %367 : vector<8x8xf32> to vector<8x8xbf16>
    %cst_141 = arith.constant dense<0.000000e+00> : vector<8x8xf32>
    %369 = tpu.matmul %368, %354, %cst_141 {dimension_numbers = #tpu.dot_dimension_numbers<[1], [0], [0], [1], [0, 0, 1, 1], [], []>} : vector<8x8xbf16>, vector<8x8xbf16>, vector<8x8xf32> -> vector<8x8xf32>
    %c0_142 = arith.constant 0 : index
    %c24_143 = arith.constant 24 : index
    %370 = vector.load %arg17[%c0_142, %c24_143] : memref<16x32xf32, #tpu.memory_space<vmem>>, vector<8x8xf32>
    tpu.vector_store %arg17[%c0_142, %c24_143], %369 {strides = array<i32>} : memref<16x32xf32, #tpu.memory_space<vmem>>, vector<8x8xf32>,
    %371 = vector.extract_strided_slice %4 {offsets = [1, 0], sizes = [1, 8], strides = [1, 1]} : vector<2x8xf32> to vector<1x8xf32>
    %372 = vector.extract_strided_slice %293 {offsets = [8, 0], sizes = [8, 8], strides = [1, 1]} : vector<16x96xbf16> to vector<8x8xbf16>
    %373 = vector.extract_strided_slice %293 {offsets = [8, 32], sizes = [8, 8], strides = [1, 1]} : vector<16x96xbf16> to vector<8x8xbf16>
    %374 = vector.extract_strided_slice %293 {offsets = [8, 64], sizes = [8, 8], strides = [1, 1]} : vector<16x96xbf16> to vector<8x8xbf16>
    %cst_144 = arith.constant dense<0.000000e+00> : vector<8x8xf32>
    %375 = tpu.matmul %372, %373, %cst_144 {dimension_numbers = #tpu.dot_dimension_numbers<[1], [1], [0], [0], [0, 0, 1, 0], [], []>} : vector<8x8xbf16>, vector<8x8xbf16>, vector<8x8xf32> -> vector<8x8xf32>
    %376 = vector.broadcast %371 : vector<1x8xf32> to vector<8x8xf32>
    %377 = arith.addf %375, %376 : vector<8x8xf32>
    %cst_145 = arith.constant dense<0xFF800000> : vector<8xf32>
    %378 = vector.multi_reduction <maximumf>, %377, %cst_145 [1] : vector<8x8xf32> to vector<8xf32>
    %379 = vector.shape_cast %378 : vector<8xf32> to vector<8x1xf32>
    %380 = vector.broadcast %379 : vector<8x1xf32> to vector<8x8xf32>
    %381 = arith.subf %377, %380 : vector<8x8xf32>
    %382 = math.exp %381 : vector<8x8xf32>
    %cst_146 = arith.constant dense<0.000000e+00> : vector<8xf32>
    %383 = vector.multi_reduction <add>, %382, %cst_146 [1] : vector<8x8xf32> to vector<8xf32>
    %384 = vector.shape_cast %383 : vector<8xf32> to vector<8x1xf32>
    %385 = tpu.reciprocal %384 {approx = true} : vector<8x1xf32> -> vector<8x1xf32>
    %386 = vector.broadcast %385 : vector<8x1xf32> to vector<8x8xf32>
    %387 = arith.mulf %382, %386 : vector<8x8xf32>
    %388 = arith.truncf %387 : vector<8x8xf32> to vector<8x8xbf16>
    %cst_147 = arith.constant dense<0.000000e+00> : vector<8x8xf32>
    %389 = tpu.matmul %388, %374, %cst_147 {dimension_numbers = #tpu.dot_dimension_numbers<[1], [0], [0], [1], [0, 0, 1, 1], [], []>} : vector<8x8xbf16>, vector<8x8xbf16>, vector<8x8xf32> -> vector<8x8xf32>
    %c8_148 = arith.constant 8 : index
    %c0_149 = arith.constant 0 : index
    %390 = vector.load %arg17[%c8_148, %c0_149] : memref<16x32xf32, #tpu.memory_space<vmem>>, vector<8x8xf32>
    tpu.vector_store %arg17[%c8_148, %c0_149], %389 {strides = array<i32>} : memref<16x32xf32, #tpu.memory_space<vmem>>, vector<8x8xf32>,
    %391 = vector.extract_strided_slice %293 {offsets = [8, 8], sizes = [8, 8], strides = [1, 1]} : vector<16x96xbf16> to vector<8x8xbf16>
    %392 = vector.extract_strided_slice %293 {offsets = [8, 40], sizes = [8, 8], strides = [1, 1]} : vector<16x96xbf16> to vector<8x8xbf16>
    %393 = vector.extract_strided_slice %293 {offsets = [8, 72], sizes = [8, 8], strides = [1, 1]} : vector<16x96xbf16> to vector<8x8xbf16>
    %cst_150 = arith.constant dense<0.000000e+00> : vector<8x8xf32>
    %394 = tpu.matmul %391, %392, %cst_150 {dimension_numbers = #tpu.dot_dimension_numbers<[1], [1], [0], [0], [0, 0, 1, 0], [], []>} : vector<8x8xbf16>, vector<8x8xbf16>, vector<8x8xf32> -> vector<8x8xf32>
    %395 = vector.broadcast %371 : vector<1x8xf32> to vector<8x8xf32>
    %396 = arith.addf %394, %395 : vector<8x8xf32>
    %cst_151 = arith.constant dense<0xFF800000> : vector<8xf32>
    %397 = vector.multi_reduction <maximumf>, %396, %cst_151 [1] : vector<8x8xf32> to vector<8xf32>
    %398 = vector.shape_cast %397 : vector<8xf32> to vector<8x1xf32>
    %399 = vector.broadcast %398 : vector<8x1xf32> to vector<8x8xf32>
    %400 = arith.subf %396, %399 : vector<8x8xf32>
    %401 = math.exp %400 : vector<8x8xf32>
    %cst_152 = arith.constant dense<0.000000e+00> : vector<8xf32>
    %402 = vector.multi_reduction <add>, %401, %cst_152 [1] : vector<8x8xf32> to vector<8xf32>
    %403 = vector.shape_cast %402 : vector<8xf32> to vector<8x1xf32>
    %404 = tpu.reciprocal %403 {approx = true} : vector<8x1xf32> -> vector<8x1xf32>
    %405 = vector.broadcast %404 : vector<8x1xf32> to vector<8x8xf32>
    %406 = arith.mulf %401, %405 : vector<8x8xf32>
    %407 = arith.truncf %406 : vector<8x8xf32> to vector<8x8xbf16>
    %cst_153 = arith.constant dense<0.000000e+00> : vector<8x8xf32>
    %408 = tpu.matmul %407, %393, %cst_153 {dimension_numbers = #tpu.dot_dimension_numbers<[1], [0], [0], [1], [0, 0, 1, 1], [], []>} : vector<8x8xbf16>, vector<8x8xbf16>, vector<8x8xf32> -> vector<8x8xf32>
    %c8_154 = arith.constant 8 : index
    %c8_155 = arith.constant 8 : index
    %409 = vector.load %arg17[%c8_154, %c8_155] : memref<16x32xf32, #tpu.memory_space<vmem>>, vector<8x8xf32>
    tpu.vector_store %arg17[%c8_154, %c8_155], %408 {strides = array<i32>} : memref<16x32xf32, #tpu.memory_space<vmem>>, vector<8x8xf32>,
    %410 = vector.extract_strided_slice %293 {offsets = [8, 16], sizes = [8, 8], strides = [1, 1]} : vector<16x96xbf16> to vector<8x8xbf16>
    %411 = vector.extract_strided_slice %293 {offsets = [8, 48], sizes = [8, 8], strides = [1, 1]} : vector<16x96xbf16> to vector<8x8xbf16>
    %412 = vector.extract_strided_slice %293 {offsets = [8, 80], sizes = [8, 8], strides = [1, 1]} : vector<16x96xbf16> to vector<8x8xbf16>
    %cst_156 = arith.constant dense<0.000000e+00> : vector<8x8xf32>
    %413 = tpu.matmul %410, %411, %cst_156 {dimension_numbers = #tpu.dot_dimension_numbers<[1], [1], [0], [0], [0, 0, 1, 0], [], []>} : vector<8x8xbf16>, vector<8x8xbf16>, vector<8x8xf32> -> vector<8x8xf32>
    %414 = vector.broadcast %371 : vector<1x8xf32> to vector<8x8xf32>
    %415 = arith.addf %413, %414 : vector<8x8xf32>
    %cst_157 = arith.constant dense<0xFF800000> : vector<8xf32>
    %416 = vector.multi_reduction <maximumf>, %415, %cst_157 [1] : vector<8x8xf32> to vector<8xf32>
    %417 = vector.shape_cast %416 : vector<8xf32> to vector<8x1xf32>
    %418 = vector.broadcast %417 : vector<8x1xf32> to vector<8x8xf32>
    %419 = arith.subf %415, %418 : vector<8x8xf32>
    %420 = math.exp %419 : vector<8x8xf32>
    %cst_158 = arith.constant dense<0.000000e+00> : vector<8xf32>
    %421 = vector.multi_reduction <add>, %420, %cst_158 [1] : vector<8x8xf32> to vector<8xf32>
    %422 = vector.shape_cast %421 : vector<8xf32> to vector<8x1xf32>
    %423 = tpu.reciprocal %422 {approx = true} : vector<8x1xf32> -> vector<8x1xf32>
    %424 = vector.broadcast %423 : vector<8x1xf32> to vector<8x8xf32>
    %425 = arith.mulf %420, %424 : vector<8x8xf32>
    %426 = arith.truncf %425 : vector<8x8xf32> to vector<8x8xbf16>
    %cst_159 = arith.constant dense<0.000000e+00> : vector<8x8xf32>
    %427 = tpu.matmul %426, %412, %cst_159 {dimension_numbers = #tpu.dot_dimension_numbers<[1], [0], [0], [1], [0, 0, 1, 1], [], []>} : vector<8x8xbf16>, vector<8x8xbf16>, vector<8x8xf32> -> vector<8x8xf32>
    %c8_160 = arith.constant 8 : index
    %c16_161 = arith.constant 16 : index
    %428 = vector.load %arg17[%c8_160, %c16_161] : memref<16x32xf32, #tpu.memory_space<vmem>>, vector<8x8xf32>
    tpu.vector_store %arg17[%c8_160, %c16_161], %427 {strides = array<i32>} : memref<16x32xf32, #tpu.memory_space<vmem>>, vector<8x8xf32>,
    %429 = vector.extract_strided_slice %293 {offsets = [8, 24], sizes = [8, 8], strides = [1, 1]} : vector<16x96xbf16> to vector<8x8xbf16>
    %430 = vector.extract_strided_slice %293 {offsets = [8, 56], sizes = [8, 8], strides = [1, 1]} : vector<16x96xbf16> to vector<8x8xbf16>
    %431 = vector.extract_strided_slice %293 {offsets = [8, 88], sizes = [8, 8], strides = [1, 1]} : vector<16x96xbf16> to vector<8x8xbf16>
    %cst_162 = arith.constant dense<0.000000e+00> : vector<8x8xf32>
    %432 = tpu.matmul %429, %430, %cst_162 {dimension_numbers = #tpu.dot_dimension_numbers<[1], [1], [0], [0], [0, 0, 1, 0], [], []>} : vector<8x8xbf16>, vector<8x8xbf16>, vector<8x8xf32> -> vector<8x8xf32>
    %433 = vector.broadcast %371 : vector<1x8xf32> to vector<8x8xf32>
    %434 = arith.addf %432, %433 : vector<8x8xf32>
    %cst_163 = arith.constant dense<0xFF800000> : vector<8xf32>
    %435 = vector.multi_reduction <maximumf>, %434, %cst_163 [1] : vector<8x8xf32> to vector<8xf32>
    %436 = vector.shape_cast %435 : vector<8xf32> to vector<8x1xf32>
    %437 = vector.broadcast %436 : vector<8x1xf32> to vector<8x8xf32>
    %438 = arith.subf %434, %437 : vector<8x8xf32>
    %439 = math.exp %438 : vector<8x8xf32>
    %cst_164 = arith.constant dense<0.000000e+00> : vector<8xf32>
    %440 = vector.multi_reduction <add>, %439, %cst_164 [1] : vector<8x8xf32> to vector<8xf32>
    %441 = vector.shape_cast %440 : vector<8xf32> to vector<8x1xf32>
    %442 = tpu.reciprocal %441 {approx = true} : vector<8x1xf32> -> vector<8x1xf32>
    %443 = vector.broadcast %442 : vector<8x1xf32> to vector<8x8xf32>
    %444 = arith.mulf %439, %443 : vector<8x8xf32>
    %445 = arith.truncf %444 : vector<8x8xf32> to vector<8x8xbf16>
    %cst_165 = arith.constant dense<0.000000e+00> : vector<8x8xf32>
    %446 = tpu.matmul %445, %431, %cst_165 {dimension_numbers = #tpu.dot_dimension_numbers<[1], [0], [0], [1], [0, 0, 1, 1], [], []>} : vector<8x8xbf16>, vector<8x8xbf16>, vector<8x8xf32> -> vector<8x8xf32>
    %c8_166 = arith.constant 8 : index
    %c24_167 = arith.constant 24 : index
    %447 = vector.load %arg17[%c8_166, %c24_167] : memref<16x32xf32, #tpu.memory_space<vmem>>, vector<8x8xf32>
    tpu.vector_store %arg17[%c8_166, %c24_167], %446 {strides = array<i32>} : memref<16x32xf32, #tpu.memory_space<vmem>>, vector<8x8xf32>,
    %c0_168 = arith.constant 0 : index
    %c0_169 = arith.constant 0 : index
    %448 = vector.load %arg17[%c0_168, %c0_169] : memref<16x32xf32, #tpu.memory_space<vmem>>, vector<16x32xf32>
    %449 = arith.truncf %448 : vector<16x32xf32> to vector<16x32xbf16>
    %c1_170 = arith.constant 1 : index
    %c0_171 = arith.constant 0 : index
    %c0_172 = arith.constant 0 : index
    %450 = vector.load %arg6[%c1_170, %c0_171, %c0_172] : memref<2x32x32xbf16, #tpu.memory_space<vmem>>, vector<1x32x32xbf16>
    %451 = vector.shape_cast %450 : vector<1x32x32xbf16> to vector<32x32xbf16>
    %cst_173 = arith.constant dense<0.000000e+00> : vector<16x32xf32>
    %452 = tpu.matmul %449, %451, %cst_173 {dimension_numbers = #tpu.dot_dimension_numbers<[1], [0], [0], [1], [0, 0, 1, 1], [], []>} : vector<16x32xbf16>, vector<32x32xbf16>, vector<16x32xf32> -> vector<16x32xf32>
    %c1_174 = arith.constant 1 : index
    %c0_175 = arith.constant 0 : index
    %c0_176 = arith.constant 0 : index
    %453 = vector.load %arg7[%c1_174, %c0_175, %c0_176] : memref<2x1x32xf32, #tpu.memory_space<vmem>>, vector<1x1x32xf32>
    %454 = vector.shape_cast %453 : vector<1x1x32xf32> to vector<1x32xf32>
    %455 = vector.broadcast %454 : vector<1x32xf32> to vector<16x32xf32>
    %456 = arith.addf %452, %455 : vector<16x32xf32>
    %457 = arith.addf %456, %284 : vector<16x32xf32>
    %c1_177 = arith.constant 1 : index
    %c0_178 = arith.constant 0 : index
    %c0_179 = arith.constant 0 : index
    %458 = vector.load %arg8[%c1_177, %c0_178, %c0_179] : memref<2x1x32xf32, #tpu.memory_space<vmem>>, vector<1x1x32xf32>
    %459 = vector.shape_cast %458 : vector<1x1x32xf32> to vector<1x32xf32>
    %c1_180 = arith.constant 1 : index
    %c0_181 = arith.constant 0 : index
    %c0_182 = arith.constant 0 : index
    %460 = vector.load %arg9[%c1_180, %c0_181, %c0_182] : memref<2x1x32xf32, #tpu.memory_space<vmem>>, vector<1x1x32xf32>
    %461 = vector.shape_cast %460 : vector<1x1x32xf32> to vector<1x32xf32>
    %cst_183 = arith.constant dense<0.000000e+00> : vector<16xf32>
    %462 = vector.multi_reduction <add>, %457, %cst_183 [1] : vector<16x32xf32> to vector<16xf32>
    %463 = vector.shape_cast %462 : vector<16xf32> to vector<16x1xf32>
    %cst_184 = arith.constant 3.200000e+01 : f32
    %464 = vector.broadcast %cst_184 : f32 to vector<16x1xf32>
    %465 = arith.divf %463, %464 : vector<16x1xf32>
    %466 = vector.broadcast %465 : vector<16x1xf32> to vector<16x32xf32>
    %467 = arith.subf %457, %466 : vector<16x32xf32>
    %468 = arith.mulf %467, %467 : vector<16x32xf32>
    %cst_185 = arith.constant dense<0.000000e+00> : vector<16xf32>
    %469 = vector.multi_reduction <add>, %468, %cst_185 [1] : vector<16x32xf32> to vector<16xf32>
    %470 = vector.shape_cast %469 : vector<16xf32> to vector<16x1xf32>
    %cst_186 = arith.constant 3.200000e+01 : f32
    %471 = vector.broadcast %cst_186 : f32 to vector<16x1xf32>
    %472 = arith.divf %470, %471 : vector<16x1xf32>
    %473 = vector.broadcast %465 : vector<16x1xf32> to vector<16x32xf32>
    %474 = arith.subf %457, %473 : vector<16x32xf32>
    %cst_187 = arith.constant 9.99999996E-13 : f32
    %475 = vector.broadcast %cst_187 : f32 to vector<16x1xf32>
    %476 = arith.addf %472, %475 : vector<16x1xf32>
    %477 = math.rsqrt %476 : vector<16x1xf32>
    %478 = vector.broadcast %477 : vector<16x1xf32> to vector<16x32xf32>
    %479 = arith.mulf %474, %478 : vector<16x32xf32>
    %480 = vector.broadcast %459 : vector<1x32xf32> to vector<16x32xf32>
    %481 = arith.mulf %479, %480 : vector<16x32xf32>
    %482 = vector.broadcast %461 : vector<1x32xf32> to vector<16x32xf32>
    %483 = arith.addf %481, %482 : vector<16x32xf32>
    %484 = arith.truncf %483 : vector<16x32xf32> to vector<16x32xbf16>
    %c1_188 = arith.constant 1 : index
    %c0_189 = arith.constant 0 : index
    %c0_190 = arith.constant 0 : index
    %485 = vector.load %arg10[%c1_188, %c0_189, %c0_190] : memref<2x32x64xbf16, #tpu.memory_space<vmem>>, vector<1x32x64xbf16>
    %486 = vector.shape_cast %485 : vector<1x32x64xbf16> to vector<32x64xbf16>
    %cst_191 = arith.constant dense<0.000000e+00> : vector<16x64xf32>
    %487 = tpu.matmul %484, %486, %cst_191 {dimension_numbers = #tpu.dot_dimension_numbers<[1], [0], [0], [1], [0, 0, 1, 1], [], []>} : vector<16x32xbf16>, vector<32x64xbf16>, vector<16x64xf32> -> vector<16x64xf32>
    %c1_192 = arith.constant 1 : index
    %c0_193 = arith.constant 0 : index
    %c0_194 = arith.constant 0 : index
    %488 = vector.load %arg11[%c1_192, %c0_193, %c0_194] : memref<2x1x64xf32, #tpu.memory_space<vmem>>, vector<1x1x64xf32>
    %489 = vector.shape_cast %488 : vector<1x1x64xf32> to vector<1x64xf32>
    %490 = vector.broadcast %489 : vector<1x64xf32> to vector<16x64xf32>
    %491 = arith.addf %487, %490 : vector<16x64xf32>
    %cst_195 = arith.constant 5.000000e-01 : f32
    %492 = vector.broadcast %cst_195 : f32 to vector<16x64xf32>
    %493 = arith.mulf %492, %491 : vector<16x64xf32>
    %cst_196 = arith.constant 4.471500e-02 : f32
    %494 = vector.broadcast %cst_196 : f32 to vector<16x64xf32>
    %495 = arith.mulf %494, %491 : vector<16x64xf32>
    %496 = arith.mulf %495, %491 : vector<16x64xf32>
    %497 = arith.mulf %496, %491 : vector<16x64xf32>
    %498 = arith.addf %491, %497 : vector<16x64xf32>
    %cst_197 = arith.constant 0.797884583 : f32
    %499 = vector.broadcast %cst_197 : f32 to vector<16x64xf32>
    %500 = arith.mulf %499, %498 : vector<16x64xf32>
    %501 = math.tanh %500 : vector<16x64xf32>
    %cst_198 = arith.constant 1.000000e+00 : f32
    %502 = vector.broadcast %cst_198 : f32 to vector<16x64xf32>
    %503 = arith.addf %502, %501 : vector<16x64xf32>
    %504 = arith.mulf %493, %503 : vector<16x64xf32>
    %505 = arith.truncf %504 : vector<16x64xf32> to vector<16x64xbf16>
    %c1_199 = arith.constant 1 : index
    %c0_200 = arith.constant 0 : index
    %c0_201 = arith.constant 0 : index
    %506 = vector.load %arg12[%c1_199, %c0_200, %c0_201] : memref<2x64x32xbf16, #tpu.memory_space<vmem>>, vector<1x64x32xbf16>
    %507 = vector.shape_cast %506 : vector<1x64x32xbf16> to vector<64x32xbf16>
    %cst_202 = arith.constant dense<0.000000e+00> : vector<16x32xf32>
    %508 = tpu.matmul %505, %507, %cst_202 {dimension_numbers = #tpu.dot_dimension_numbers<[1], [0], [0], [1], [0, 0, 1, 1], [], []>} : vector<16x64xbf16>, vector<64x32xbf16>, vector<16x32xf32> -> vector<16x32xf32>
    %c1_203 = arith.constant 1 : index
    %c0_204 = arith.constant 0 : index
    %c0_205 = arith.constant 0 : index
    %509 = vector.load %arg13[%c1_203, %c0_204, %c0_205] : memref<2x1x32xf32, #tpu.memory_space<vmem>>, vector<1x1x32xf32>
    %510 = vector.shape_cast %509 : vector<1x1x32xf32> to vector<1x32xf32>
    %511 = vector.broadcast %510 : vector<1x32xf32> to vector<16x32xf32>
    %512 = arith.addf %508, %511 : vector<16x32xf32>
    %513 = arith.addf %512, %483 : vector<16x32xf32>
    %c1_206 = arith.constant 1 : index
    %c0_207 = arith.constant 0 : index
    %c0_208 = arith.constant 0 : index
    %514 = vector.load %arg14[%c1_206, %c0_207, %c0_208] : memref<2x1x32xf32, #tpu.memory_space<vmem>>, vector<1x1x32xf32>
    %515 = vector.shape_cast %514 : vector<1x1x32xf32> to vector<1x32xf32>
    %c1_209 = arith.constant 1 : index
    %c0_210 = arith.constant 0 : index
    %c0_211 = arith.constant 0 : index
    %516 = vector.load %arg15[%c1_209, %c0_210, %c0_211] : memref<2x1x32xf32, #tpu.memory_space<vmem>>, vector<1x1x32xf32>
    %517 = vector.shape_cast %516 : vector<1x1x32xf32> to vector<1x32xf32>
    %cst_212 = arith.constant dense<0.000000e+00> : vector<16xf32>
    %518 = vector.multi_reduction <add>, %513, %cst_212 [1] : vector<16x32xf32> to vector<16xf32>
    %519 = vector.shape_cast %518 : vector<16xf32> to vector<16x1xf32>
    %cst_213 = arith.constant 3.200000e+01 : f32
    %520 = vector.broadcast %cst_213 : f32 to vector<16x1xf32>
    %521 = arith.divf %519, %520 : vector<16x1xf32>
    %522 = vector.broadcast %521 : vector<16x1xf32> to vector<16x32xf32>
    %523 = arith.subf %513, %522 : vector<16x32xf32>
    %524 = arith.mulf %523, %523 : vector<16x32xf32>
    %cst_214 = arith.constant dense<0.000000e+00> : vector<16xf32>
    %525 = vector.multi_reduction <add>, %524, %cst_214 [1] : vector<16x32xf32> to vector<16xf32>
    %526 = vector.shape_cast %525 : vector<16xf32> to vector<16x1xf32>
    %cst_215 = arith.constant 3.200000e+01 : f32
    %527 = vector.broadcast %cst_215 : f32 to vector<16x1xf32>
    %528 = arith.divf %526, %527 : vector<16x1xf32>
    %529 = vector.broadcast %521 : vector<16x1xf32> to vector<16x32xf32>
    %530 = arith.subf %513, %529 : vector<16x32xf32>
    %cst_216 = arith.constant 9.99999996E-13 : f32
    %531 = vector.broadcast %cst_216 : f32 to vector<16x1xf32>
    %532 = arith.addf %528, %531 : vector<16x1xf32>
    %533 = math.rsqrt %532 : vector<16x1xf32>
    %534 = vector.broadcast %533 : vector<16x1xf32> to vector<16x32xf32>
    %535 = arith.mulf %530, %534 : vector<16x32xf32>
    %536 = vector.broadcast %515 : vector<1x32xf32> to vector<16x32xf32>
    %537 = arith.mulf %535, %536 : vector<16x32xf32>
    %538 = vector.broadcast %517 : vector<1x32xf32> to vector<16x32xf32>
    %539 = arith.addf %537, %538 : vector<16x32xf32>
    %540 = vector.extract_strided_slice %539 {offsets = [0, 0], sizes = [1, 32], strides = [1, 1]} : vector<16x32xf32> to vector<1x32xf32>
    %541 = vector.extract_strided_slice %539 {offsets = [8, 0], sizes = [1, 32], strides = [1, 1]} : vector<16x32xf32> to vector<1x32xf32>
    %542 = tpu.concatenate %540, %541 in 0 : vector<1x32xf32>, vector<1x32xf32> -> vector<2x32xf32>
    %c0_217 = arith.constant 0 : index
    %c0_218 = arith.constant 0 : index
    %543 = vector.load %arg16[%c0_217, %c0_218] : memref<2x32xf32, #tpu.memory_space<vmem>>, vector<2x32xf32>
    tpu.vector_store %arg16[%c0_217, %c0_218], %542 {strides = array<i32>} : memref<2x32xf32, #tpu.memory_space<vmem>>, vector<2x32xf32>,
    return
  }
}

</mosaic_0001>

<llo_original>
// kernel: embedding_model_forward.1
$region0: #{embedding_model_forward.1}
  #allocation0 [shape = 'u32[]', space=smem, size = 0x4, offset = 0x4, fixed_abs, tag = 'smem constant byte address 0x4 - core index']
  #allocation1 [shape = 'u32[144,128]{1,0:T(1,128)}', space=vmem, size = 0x12000, scoped, tag = 'internal scratch']
  #allocation2 [shape = 'f32[16,32]{1,0:T(8,128)}', space=vmem, size = 0x2000, scoped, tag = 'scratch operand']
  %s0 = inlined_call_operand.vmem [shape: f32[16,32], index: 0, kind: input, shape index: {}]
  %s1 = inlined_call_operand.vmem [shape: f32[2,8], index: 1, kind: input, shape index: {}]
  %s2 = inlined_call_operand.vmem [shape: f32[1,32], index: 2, kind: input, shape index: {}]
  %s3 = inlined_call_operand.vmem [shape: f32[1,32], index: 3, kind: input, shape index: {}]
  %s4 = inlined_call_operand.vmem [shape: bf16[2,32,96], index: 4, kind: input, shape index: {}]
  %s5 = inlined_call_operand.vmem [shape: f32[2,1,96], index: 5, kind: input, shape index: {}]
  %s6 = inlined_call_operand.vmem [shape: bf16[2,32,32], index: 6, kind: input, shape index: {}]
  %s7 = inlined_call_operand.vmem [shape: f32[2,1,32], index: 7, kind: input, shape index: {}]
  %s8 = inlined_call_operand.vmem [shape: f32[2,1,32], index: 8, kind: input, shape index: {}]
  %s9 = inlined_call_operand.vmem [shape: f32[2,1,32], index: 9, kind: input, shape index: {}]
  %s10 = inlined_call_operand.vmem [shape: bf16[2,32,64], index: 10, kind: input, shape index: {}]
  %s11 = inlined_call_operand.vmem [shape: f32[2,1,64], index: 11, kind: input, shape index: {}]
  %s12 = inlined_call_operand.vmem [shape: bf16[2,64,32], index: 12, kind: input, shape index: {}]
  %s13 = inlined_call_operand.vmem [shape: f32[2,1,32], index: 13, kind: input, shape index: {}]
  %s14 = inlined_call_operand.vmem [shape: f32[2,1,32], index: 14, kind: input, shape index: {}]
  %s15 = inlined_call_operand.vmem [shape: f32[2,1,32], index: 15, kind: input, shape index: {}]
  %s16 = inlined_call_operand.hbm [shape: f32[2,32], index: 16, kind: output, shape index: {}]
  %s17 = sld [smem:[#allocation0]]
  $region74: #{embedding_model_forward.1} parent=0
    _
  %s19 = ssub.s32 1, %s17
  %s20 = scalar_select 0, %s19, %s17
  $region1: #{embedding_model_forward.1} parent=0
    #allocation3 [shape = 'u8[1024]{0}', space=vmem, size = 0x400, scoped, tag = 'output window, operand 0, single buffered']
    #allocation4 [shape = 's32[1]{0}', space=sflag, size = 0x4, scoped, tag = 'scoped memory for embedding_model_forward.1']
    %21 = vsyncpa [#allocation4], 0
    // Predicated region
    $region2: #{embedding_model_forward.1} parent=1 // pred_check
      _
    $region3: #{embedding_model_forward.1} parent=1 // pred_check_branch
      %23 = sbr.rel (0) target = $region5
    $region4: #{embedding_model_forward.1} parent=1 // pred_region
      _
    $region5: #{embedding_model_forward.1} parent=1 // pred_fallthru
      _
    // Predicated region
    $region6: #{embedding_model_forward.1} parent=1 // pred_check
      _
    $region7: #{embedding_model_forward.1} parent=1 // pred_check_branch
      %25 = sbr.rel (0) target = $region9
    $region8: #{embedding_model_forward.1} parent=1 // pred_region
      _
    $region9: #{embedding_model_forward.1} parent=1 // pred_fallthru
      _
    // Predicated region
    $region10: #{embedding_model_forward.1} parent=1 // pred_check
      _
    $region11: #{embedding_model_forward.1} parent=1 // pred_check_branch
      %27 = sbr.rel (0) target = $region13
    $region12: #{embedding_model_forward.1} parent=1 // pred_region
      _
    $region13: #{embedding_model_forward.1} parent=1 // pred_fallthru
      _
    // Predicated region
    $region14: #{embedding_model_forward.1} parent=1 // pred_check
      _
    $region15: #{embedding_model_forward.1} parent=1 // pred_check_branch
      %29 = sbr.rel (0) target = $region17
    $region16: #{embedding_model_forward.1} parent=1 // pred_region
      _
    $region17: #{embedding_model_forward.1} parent=1 // pred_fallthru
      _
    // Predicated region
    $region18: #{embedding_model_forward.1} parent=1 // pred_check
      _
    $region19: #{embedding_model_forward.1} parent=1 // pred_check_branch
      %31 = sbr.rel (0) target = $region21
    $region20: #{embedding_model_forward.1} parent=1 // pred_region
      _
    $region21: #{embedding_model_forward.1} parent=1 // pred_fallthru
      _
    // Predicated region
    $region22: #{embedding_model_forward.1} parent=1 // pred_check
      _
    $region23: #{embedding_model_forward.1} parent=1 // pred_check_branch
      %33 = sbr.rel (0) target = $region25
    $region24: #{embedding_model_forward.1} parent=1 // pred_region
      _
    $region25: #{embedding_model_forward.1} parent=1 // pred_fallthru
      _
    // Predicated region
    $region26: #{embedding_model_forward.1} parent=1 // pred_check
      _
    $region27: #{embedding_model_forward.1} parent=1 // pred_check_branch
      %35 = sbr.rel (0) target = $region29
    $region28: #{embedding_model_forward.1} parent=1 // pred_region
      _
    $region29: #{embedding_model_forward.1} parent=1 // pred_fallthru
      _
    // Predicated region
    $region30: #{embedding_model_forward.1} parent=1 // pred_check
      _
    $region31: #{embedding_model_forward.1} parent=1 // pred_check_branch
      %37 = sbr.rel (0) target = $region33
    $region32: #{embedding_model_forward.1} parent=1 // pred_region
      _
    $region33: #{embedding_model_forward.1} parent=1 // pred_fallthru
      _
    // Predicated region
    $region34: #{embedding_model_forward.1} parent=1 // pred_check
      _
    $region35: #{embedding_model_forward.1} parent=1 // pred_check_branch
      %39 = sbr.rel (0) target = $region37
    $region36: #{embedding_model_forward.1} parent=1 // pred_region
      _
    $region37: #{embedding_model_forward.1} parent=1 // pred_fallthru
      _
    // Predicated region
    $region38: #{embedding_model_forward.1} parent=1 // pred_check
      _
    $region39: #{embedding_model_forward.1} parent=1 // pred_check_branch
      %41 = sbr.rel (0) target = $region41
    $region40: #{embedding_model_forward.1} parent=1 // pred_region
      _
    $region41: #{embedding_model_forward.1} parent=1 // pred_fallthru
      _
    // Predicated region
    $region42: #{embedding_model_forward.1} parent=1 // pred_check
      _
    $region43: #{embedding_model_forward.1} parent=1 // pred_check_branch
      %43 = sbr.rel (0) target = $region45
    $region44: #{embedding_model_forward.1} parent=1 // pred_region
      _
    $region45: #{embedding_model_forward.1} parent=1 // pred_fallthru
      _
    // Predicated region
    $region46: #{embedding_model_forward.1} parent=1 // pred_check
      _
    $region47: #{embedding_model_forward.1} parent=1 // pred_check_branch
      %45 = sbr.rel (0) target = $region49
    $region48: #{embedding_model_forward.1} parent=1 // pred_region
      _
    $region49: #{embedding_model_forward.1} parent=1 // pred_fallthru
      _
    // Predicated region
    $region50: #{embedding_model_forward.1} parent=1 // pred_check
      _
    $region51: #{embedding_model_forward.1} parent=1 // pred_check_branch
      %47 = sbr.rel (0) target = $region53
    $region52: #{embedding_model_forward.1} parent=1 // pred_region
      _
    $region53: #{embedding_model_forward.1} parent=1 // pred_fallthru
      _
    // Predicated region
    $region54: #{embedding_model_forward.1} parent=1 // pred_check
      _
    $region55: #{embedding_model_forward.1} parent=1 // pred_check_branch
      %49 = sbr.rel (0) target = $region57
    $region56: #{embedding_model_forward.1} parent=1 // pred_region
      _
    $region57: #{embedding_model_forward.1} parent=1 // pred_fallthru
      _
    // Predicated region
    $region58: #{embedding_model_forward.1} parent=1 // pred_check
      _
    $region59: #{embedding_model_forward.1} parent=1 // pred_check_branch
      %51 = sbr.rel (0) target = $region61
    $region60: #{embedding_model_forward.1} parent=1 // pred_region
      _
    $region61: #{embedding_model_forward.1} parent=1 // pred_fallthru
      _
    // Predicated region
    $region62: #{embedding_model_forward.1} parent=1 // pred_check
      _
    $region63: #{embedding_model_forward.1} parent=1 // pred_check_branch
      %53 = sbr.rel (0) target = $region65
    $region64: #{embedding_model_forward.1} parent=1 // pred_region
      _
    $region65: #{embedding_model_forward.1} parent=1 // pred_fallthru
      _
    %v55 = vld [vmem:[%s1] sm:$0x3]
    %v56 = vsub.f32 1.0, %v55
    %v57 = vmul.f32 %v56, -1e+09
    %v58 = vld [vmem:[%s0] sm:$0xff]
    %v59 = vld [vmem:[%s0 + $0x8] sm:$0xff]
    %v60 = vld [vmem:[%s2] sm:$0x1]
    %v61 = vld [vmem:[%s3] sm:$0x1]
    %vm62 = vcmask 261120
    %v63 = vsel %vm62, %v58, 0.0
    %64 = vadd.xlane.f32.xlu0 %v63
    %v65 = vpop.xlane.xlu0 %64
    %v66 = vsel %vm62, %v59, 0.0
    %67 = vadd.xlane.f32.xlu0 %v66
    %v68 = vpop.xlane.xlu0 %67
    %v69 = vrcp.pop 32.0
    %v70 = vmul.f32 %v65, %v69
    %v71 = vmul.f32 %v68, %v69
    %v72 = vsub.f32 %v58, %v70
    %v73 = vsub.f32 %v59, %v71
    %v74 = vmul.f32 %v72, %v72
    %v75 = vmul.f32 %v73, %v73
    %v76 = vsel %vm62, %v74, 0.0
    %77 = vadd.xlane.f32.xlu0 %v76
    %v78 = vpop.xlane.xlu0 %77
    %v79 = vsel %vm62, %v75, 0.0
    %80 = vadd.xlane.f32.xlu0 %v79
    %v81 = vpop.xlane.xlu0 %80
    %v82 = vmul.f32 %v78, %v69
    %v83 = vmul.f32 %v81, %v69
    %v84 = vadd.f32 %v82, 1e-12
    %v85 = vadd.f32 %v83, 1e-12
    %v86 = vrsqrt.pop %v84
    %v87 = vrsqrt.pop %v85
    %v88 = vmul.f32 %v72, %v86
    %v89 = vmul.f32 %v73, %v87
    %v91 = vlaneseq
    %v92 = vshrl.u32 %v91, 7
    %v93 = vsub.s32 0, %v92
    %v94 = vrot.slane %v60, %v93
    %v96 = vmul.f32 %v88, %v94
    %v97 = vmul.f32 %v89, %v94
    %v99 = vlaneseq
    %v100 = vshrl.u32 %v99, 7
    %v101 = vsub.s32 0, %v100
    %v102 = vrot.slane %v61, %v101
    %v104 = vadd.f32 %v96, %v102
    %v105 = vadd.f32 %v97, %v102
    %v106 = vpack.c.bf16 %v105, %v104
    %v107 = vld [vmem:[%s4] sm:$0xf]
    %v108 = vld [vmem:[%s4 + $0x4] sm:$0xf]
    %v109 = vld [vmem:[%s4 + $0x8] sm:$0xf]
    %v110 = vld [vmem:[%s4 + $0xc] sm:$0xf]
    %v111 = vld [vmem:[%s5] sm:$0x1]
    %v113 = vlaneseq
    %v114 = vshrl.u32 %v113, 7
    %v115 = vsub.s32 0, %v114
    %v116 = vrot.slane %v111, %v115
    %v122 = vunpack.c.l.b16 %v107
    %v123 = vunpack.c.l.b16 %v108
    %v124 = vunpack.c.l.b16 %v109
    %v125 = vunpack.c.l.b16 %v110
    %v126 = vpack.c.b16 %v123, %v122
    %v127 = vpack.c.b16 %v125, %v124
    %v131 = vsel %vm62, %v106, 0
    %133 = vmatprep.subr.bf16.mxu0 0
    %134 = vmatpush1.bf16.msra.mxu0 0
    %135 = vmatprep.subr.bf16.mxu0 0
    %136 = vmatpush1.bf16.msra.mxu0 0
    %137 = vmatprep.subr.bf16.mxu0 0
    %138 = vmatpush1.bf16.msra.mxu0 0
    %139 = vmatprep.subr.bf16.mxu0 0
    %140 = vmatpush1.bf16.msra.mxu0 0
    %141 = vmatprep.subr.bf16.mxu0 0
    %142 = vmatpush1.bf16.msra.mxu0 0
    %143 = vmatprep.subr.bf16.mxu0 0
    %144 = vmatpush1.bf16.msra.mxu0 0
    %145 = vmatprep.subr.bf16.mxu0 0
    %146 = vmatpush1.bf16.msra.mxu0 %v127
    %147 = vmatprep.subr.bf16.mxu0 0
    %148 = vmatpush1.bf16.msra.mxu0 %v126
    %149 = vmatprep.subr.bf16.mxu0 0
    %150 = vmatpush2.bf16.msra.mxu0 0
    %151 = vmatprep.subr.bf16.mxu0 0
    %152 = vmatpush2.bf16.msra.mxu0 0
    %153 = vmatprep.subr.bf16.mxu0 0
    %154 = vmatpush2.bf16.msra.mxu0 0
    %155 = vmatprep.subr.bf16.mxu0 0
    %156 = vmatpush2.bf16.msra.mxu0 0
    %157 = vmatprep.subr.bf16.mxu0 0
    %158 = vmatpush2.bf16.msra.mxu0 0
    %159 = vmatprep.subr.bf16.mxu0 0
    %160 = vmatpush2.bf16.msra.mxu0 0
    %161 = vmatprep.subr.bf16.mxu0 0
    %162 = vmatpush2.bf16.msra.mxu0 0
    %163 = vmatprep.subr.bf16.mxu0 0
    %164 = vmatpush2.bf16.msra.mxu0 0
    %165 = vmatprep.mubr.bf16.mxu0 0
    %166 = vmatmul.mubr.bf16.gmra.mxu0 %v131
    %v167 = vpop.f32.mrf.mxu0
    %v168 = vadd.f32 %v116, %v167
    %v169 = vpop.f32.mrf.mxu0
    %v170 = vpop.f32.mrf.mxu0
    %v171 = vadd.f32 %v116, %v170
    %v172 = vpop.f32.mrf.mxu0
    %173 = vdwg.mxu0
    %v174 = vpack.c.bf16 %v171, %v168
    %v175 = vlaneseq
    %v176 = vshrl.u32 %v175, 7
    %v177 = vsub.s32 0, %v176
    %v178 = vrot.slane %v57, %v177
    %180 = vrot.lane.b32.xlu0 %v174, 96
    %v181 = vpop.permute.xlu0 %180
    %vm182 = vcmask 64512
    %v184 = vsel %vm182, %v174, 0
    %v187 = vsel %vm182, %v181, 0
    %189 = vmatprep.subr.bf16.mxu0 0
    %190 = vmatpush1.bf16.xpose.msra.mxu0 0
    %191 = vmatprep.subr.bf16.mxu0 0
    %192 = vmatpush1.bf16.xpose.msra.mxu0 0
    %193 = vmatprep.subr.bf16.mxu0 0
    %194 = vmatpush1.bf16.xpose.msra.mxu0 0
    %195 = vmatprep.subr.bf16.mxu0 0
    %196 = vmatpush1.bf16.xpose.msra.mxu0 0
    %197 = vmatprep.subr.bf16.mxu0 0
    %198 = vmatpush1.bf16.xpose.msra.mxu0 0
    %199 = vmatprep.subr.bf16.mxu0 0
    %200 = vmatpush1.bf16.xpose.msra.mxu0 0
    %201 = vmatprep.subr.bf16.mxu0 0
    %202 = vmatpush1.bf16.xpose.msra.mxu0 0
    %203 = vmatprep.subr.bf16.mxu0 0
    %204 = vmatpush1.bf16.xpose.msra.mxu0 %v187
    %205 = vmatprep.subr.bf16.mxu0 0
    %206 = vmatpush2.bf16.xpose.msra.mxu0 0
    %207 = vmatprep.subr.bf16.mxu0 0
    %208 = vmatpush2.bf16.xpose.msra.mxu0 0
    %209 = vmatprep.subr.bf16.mxu0 0
    %210 = vmatpush2.bf16.xpose.msra.mxu0 0
    %211 = vmatprep.subr.bf16.mxu0 0
    %212 = vmatpush2.bf16.xpose.msra.mxu0 0
    %213 = vmatprep.subr.bf16.mxu0 0
    %214 = vmatpush2.bf16.xpose.msra.mxu0 0
    %215 = vmatprep.subr.bf16.mxu0 0
    %216 = vmatpush2.bf16.xpose.msra.mxu0 0
    %217 = vmatprep.subr.bf16.mxu0 0
    %218 = vmatpush2.bf16.xpose.msra.mxu0 0
    %219 = vmatprep.subr.bf16.mxu0 0
    %220 = vmatpush2.bf16.xpose.msra.mxu0 0
    %221 = vmatprep.mubr.bf16.mxu0 0
    %222 = vmatmul.mubr.bf16.gmra.mxu0 %v184
    %v223 = vpop.f32.mrf.mxu0
    %v224 = vadd.f32 %v178, %v223
    %v225 = vpop.f32.mrf.mxu0
    %v226 = vpop.f32.mrf.mxu0
    %v227 = vpop.f32.mrf.mxu0
    %228 = vdwg.mxu0
    %v229 = vsel %vm182, %v224, -inf
    %230 = vmax.xlane.f32.xlu0 %v229
    %v231 = vpop.xlane.xlu0 %230
    %v232 = vsub.f32 %v224, %v231
    %v233 = vmul.f32 %v232, 1.442695
    %v234 = vpow.pop %v233
    %v235 = vsel %vm182, %v234, 0.0
    %236 = vadd.xlane.f32.xlu0 %v235
    %v237 = vpop.xlane.xlu0 %236
    %v238 = vrcp.pop %v237
    %v239 = vmul.f32 %v234, %v238
    %v240 = vpack.c.bf16 %v239, %v239
    %241 = vrot.lane.b32.xlu0 %v174, 64
    %v242 = vpop.permute.xlu0 %241
    %v244 = vsel %vm182, %v240, 0
    %vm246 = vcmask 1043456
    %v248 = vsel %vm246, %v242, 0
    %250 = vmatprep.subr.bf16.mxu0 0
    %251 = vmatpush1.bf16.msra.mxu0 0
    %252 = vmatprep.subr.bf16.mxu0 0
    %253 = vmatpush1.bf16.msra.mxu0 0
    %254 = vmatprep.subr.bf16.mxu0 0
    %255 = vmatpush1.bf16.msra.mxu0 0
    %256 = vmatprep.subr.bf16.mxu0 0
    %257 = vmatpush1.bf16.msra.mxu0 0
    %258 = vmatprep.subr.bf16.mxu0 0
    %259 = vmatpush1.bf16.msra.mxu0 0
    %260 = vmatprep.subr.bf16.mxu0 0
    %261 = vmatpush1.bf16.msra.mxu0 0
    %262 = vmatprep.subr.bf16.mxu0 0
    %263 = vmatpush1.bf16.msra.mxu0 0
    %264 = vmatprep.subr.bf16.mxu0 0
    %265 = vmatpush1.bf16.msra.mxu0 %v248
    %266 = vmatprep.subr.bf16.mxu0 0
    %267 = vmatpush2.bf16.msra.mxu0 0
    %268 = vmatprep.subr.bf16.mxu0 0
    %269 = vmatpush2.bf16.msra.mxu0 0
    %270 = vmatprep.subr.bf16.mxu0 0
    %271 = vmatpush2.bf16.msra.mxu0 0
    %272 = vmatprep.subr.bf16.mxu0 0
    %273 = vmatpush2.bf16.msra.mxu0 0
    %274 = vmatprep.subr.bf16.mxu0 0
    %275 = vmatpush2.bf16.msra.mxu0 0
    %276 = vmatprep.subr.bf16.mxu0 0
    %277 = vmatpush2.bf16.msra.mxu0 0
    %278 = vmatprep.subr.bf16.mxu0 0
    %279 = vmatpush2.bf16.msra.mxu0 0
    %280 = vmatprep.subr.bf16.mxu0 0
    %281 = vmatpush2.bf16.msra.mxu0 0
    %282 = vmatprep.mubr.bf16.mxu0 0
    %283 = vmatmul.mubr.bf16.gmra.mxu0 %v244
    %v284 = vpop.f32.mrf.mxu0
    %v285 = vadd.f32 0.0, %v284
    %v286 = vpop.f32.mrf.mxu0
    %v287 = vpop.f32.mrf.mxu0
    %v288 = vpop.f32.mrf.mxu0
    %289 = vdwg.mxu0
    %290 = vst.msk [vmem:[#allocation2] sm:$0xff] %vm182, %v285
    %291 = vrot.lane.b32.xlu0 %v174, 120
    %v292 = vpop.permute.xlu0 %291
    %293 = vrot.lane.b32.xlu0 %v174, 88
    %v294 = vpop.permute.xlu0 %293
    %v296 = vsel %vm182, %v292, 0
    %v299 = vsel %vm182, %v294, 0
    %301 = vmatprep.subr.bf16.mxu0 0
    %302 = vmatpush1.bf16.xpose.msra.mxu0 0
    %303 = vmatprep.subr.bf16.mxu0 0
    %304 = vmatpush1.bf16.xpose.msra.mxu0 0
    %305 = vmatprep.subr.bf16.mxu0 0
    %306 = vmatpush1.bf16.xpose.msra.mxu0 0
    %307 = vmatprep.subr.bf16.mxu0 0
    %308 = vmatpush1.bf16.xpose.msra.mxu0 0
    %309 = vmatprep.subr.bf16.mxu0 0
    %310 = vmatpush1.bf16.xpose.msra.mxu0 0
    %311 = vmatprep.subr.bf16.mxu0 0
    %312 = vmatpush1.bf16.xpose.msra.mxu0 0
    %313 = vmatprep.subr.bf16.mxu0 0
    %314 = vmatpush1.bf16.xpose.msra.mxu0 0
    %315 = vmatprep.subr.bf16.mxu0 0
    %316 = vmatpush1.bf16.xpose.msra.mxu0 %v299
    %317 = vmatprep.subr.bf16.mxu0 0
    %318 = vmatpush2.bf16.xpose.msra.mxu0 0
    %319 = vmatprep.subr.bf16.mxu0 0
    %320 = vmatpush2.bf16.xpose.msra.mxu0 0
    %321 = vmatprep.subr.bf16.mxu0 0
    %322 = vmatpush2.bf16.xpose.msra.mxu0 0
    %323 = vmatprep.subr.bf16.mxu0 0
    %324 = vmatpush2.bf16.xpose.msra.mxu0 0
    %325 = vmatprep.subr.bf16.mxu0 0
    %326 = vmatpush2.bf16.xpose.msra.mxu0 0
    %327 = vmatprep.subr.bf16.mxu0 0
    %328 = vmatpush2.bf16.xpose.msra.mxu0 0
    %329 = vmatprep.subr.bf16.mxu0 0
    %330 = vmatpush2.bf16.xpose.msra.mxu0 0
    %331 = vmatprep.subr.bf16.mxu0 0
    %332 = vmatpush2.bf16.xpose.msra.mxu0 0
    %333 = vmatprep.mubr.bf16.mxu0 0
    %334 = vmatmul.mubr.bf16.gmra.mxu0 %v296
    %v335 = vpop.f32.mrf.mxu0
    %v336 = vadd.f32 %v178, %v335
    %v337 = vpop.f32.mrf.mxu0
    %v338 = vpop.f32.mrf.mxu0
    %v339 = vpop.f32.mrf.mxu0
    %340 = vdwg.mxu0
    %v341 = vsel %vm182, %v336, -inf
    %342 = vmax.xlane.f32.xlu0 %v341
    %v343 = vpop.xlane.xlu0 %342
    %v344 = vsub.f32 %v336, %v343
    %v345 = vmul.f32 %v344, 1.442695
    %v346 = vpow.pop %v345
    %v347 = vsel %vm182, %v346, 0.0
    %348 = vadd.xlane.f32.xlu0 %v347
    %v349 = vpop.xlane.xlu0 %348
    %v350 = vrcp.pop %v349
    %v351 = vmul.f32 %v346, %v350
    %v352 = vpack.c.bf16 %v351, %v351
    %353 = vrot.lane.b32.xlu0 %v174, 56
    %v354 = vpop.permute.xlu0 %353
    %v356 = vsel %vm182, %v352, 0
    %v359 = vsel %vm246, %v354, 0
    %361 = vmatprep.subr.bf16.mxu0 0
    %362 = vmatpush1.bf16.msra.mxu0 0
    %363 = vmatprep.subr.bf16.mxu0 0
    %364 = vmatpush1.bf16.msra.mxu0 0
    %365 = vmatprep.subr.bf16.mxu0 0
    %366 = vmatpush1.bf16.msra.mxu0 0
    %367 = vmatprep.subr.bf16.mxu0 0
    %368 = vmatpush1.bf16.msra.mxu0 0
    %369 = vmatprep.subr.bf16.mxu0 0
    %370 = vmatpush1.bf16.msra.mxu0 0
    %371 = vmatprep.subr.bf16.mxu0 0
    %372 = vmatpush1.bf16.msra.mxu0 0
    %373 = vmatprep.subr.bf16.mxu0 0
    %374 = vmatpush1.bf16.msra.mxu0 0
    %375 = vmatprep.subr.bf16.mxu0 0
    %376 = vmatpush1.bf16.msra.mxu0 %v359
    %377 = vmatprep.subr.bf16.mxu0 0
    %378 = vmatpush2.bf16.msra.mxu0 0
    %379 = vmatprep.subr.bf16.mxu0 0
    %380 = vmatpush2.bf16.msra.mxu0 0
    %381 = vmatprep.subr.bf16.mxu0 0
    %382 = vmatpush2.bf16.msra.mxu0 0
    %383 = vmatprep.subr.bf16.mxu0 0
    %384 = vmatpush2.bf16.msra.mxu0 0
    %385 = vmatprep.subr.bf16.mxu0 0
    %386 = vmatpush2.bf16.msra.mxu0 0
    %387 = vmatprep.subr.bf16.mxu0 0
    %388 = vmatpush2.bf16.msra.mxu0 0
    %389 = vmatprep.subr.bf16.mxu0 0
    %390 = vmatpush2.bf16.msra.mxu0 0
    %391 = vmatprep.subr.bf16.mxu0 0
    %392 = vmatpush2.bf16.msra.mxu0 0
    %393 = vmatprep.mubr.bf16.mxu0 0
    %394 = vmatmul.mubr.bf16.gmra.mxu0 %v356
    %v395 = vpop.f32.mrf.mxu0
    %v396 = vadd.f32 0.0, %v395
    %v397 = vpop.f32.mrf.mxu0
    %v398 = vpop.f32.mrf.mxu0
    %v399 = vpop.f32.mrf.mxu0
    %400 = vdwg.mxu0
    %402 = vrot.lane.b32.xlu0 %v396, 8
    %v403 = vpop.permute.xlu0 %402
    %vm405 = vcmask 130112
    %406 = vst.msk [vmem:[#allocation2] sm:$0xff] %vm405, %v403
    %407 = vrot.lane.b32.xlu0 %v174, 112
    %v408 = vpop.permute.xlu0 %407
    %409 = vrot.lane.b32.xlu0 %v174, 80
    %v410 = vpop.permute.xlu0 %409
    %v412 = vsel %vm182, %v408, 0
    %v415 = vsel %vm182, %v410, 0
    %417 = vmatprep.subr.bf16.mxu0 0
    %418 = vmatpush1.bf16.xpose.msra.mxu0 0
    %419 = vmatprep.subr.bf16.mxu0 0
    %420 = vmatpush1.bf16.xpose.msra.mxu0 0
    %421 = vmatprep.subr.bf16.mxu0 0
    %422 = vmatpush1.bf16.xpose.msra.mxu0 0
    %423 = vmatprep.subr.bf16.mxu0 0
    %424 = vmatpush1.bf16.xpose.msra.mxu0 0
    %425 = vmatprep.subr.bf16.mxu0 0
    %426 = vmatpush1.bf16.xpose.msra.mxu0 0
    %427 = vmatprep.subr.bf16.mxu0 0
    %428 = vmatpush1.bf16.xpose.msra.mxu0 0
    %429 = vmatprep.subr.bf16.mxu0 0
    %430 = vmatpush1.bf16.xpose.msra.mxu0 0
    %431 = vmatprep.subr.bf16.mxu0 0
    %432 = vmatpush1.bf16.xpose.msra.mxu0 %v415
    %433 = vmatprep.subr.bf16.mxu0 0
    %434 = vmatpush2.bf16.xpose.msra.mxu0 0
    %435 = vmatprep.subr.bf16.mxu0 0
    %436 = vmatpush2.bf16.xpose.msra.mxu0 0
    %437 = vmatprep.subr.bf16.mxu0 0
    %438 = vmatpush2.bf16.xpose.msra.mxu0 0
    %439 = vmatprep.subr.bf16.mxu0 0
    %440 = vmatpush2.bf16.xpose.msra.mxu0 0
    %441 = vmatprep.subr.bf16.mxu0 0
    %442 = vmatpush2.bf16.xpose.msra.mxu0 0
    %443 = vmatprep.subr.bf16.mxu0 0
    %444 = vmatpush2.bf16.xpose.msra.mxu0 0
    %445 = vmatprep.subr.bf16.mxu0 0
    %446 = vmatpush2.bf16.xpose.msra.mxu0 0
    %447 = vmatprep.subr.bf16.mxu0 0
    %448 = vmatpush2.bf16.xpose.msra.mxu0 0
    %449 = vmatprep.mubr.bf16.mxu0 0
    %450 = vmatmul.mubr.bf16.gmra.mxu0 %v412
    %v451 = vpop.f32.mrf.mxu0
    %v452 = vadd.f32 %v178, %v451
    %v453 = vpop.f32.mrf.mxu0
    %v454 = vpop.f32.mrf.mxu0
    %v455 = vpop.f32.mrf.mxu0
    %456 = vdwg.mxu0
    %v457 = vsel %vm182, %v452, -inf
    %458 = vmax.xlane.f32.xlu0 %v457
    %v459 = vpop.xlane.xlu0 %458
    %v460 = vsub.f32 %v452, %v459
    %v461 = vmul.f32 %v460, 1.442695
    %v462 = vpow.pop %v461
    %v463 = vsel %vm182, %v462, 0.0
    %464 = vadd.xlane.f32.xlu0 %v463
    %v465 = vpop.xlane.xlu0 %464
    %v466 = vrcp.pop %v465
    %v467 = vmul.f32 %v462, %v466
    %v468 = vpack.c.bf16 %v467, %v467
    %469 = vrot.lane.b32.xlu0 %v174, 48
    %v470 = vpop.permute.xlu0 %469
    %v472 = vsel %vm182, %v468, 0
    %v475 = vsel %vm246, %v470, 0
    %477 = vmatprep.subr.bf16.mxu0 0
    %478 = vmatpush1.bf16.msra.mxu0 0
    %479 = vmatprep.subr.bf16.mxu0 0
    %480 = vmatpush1.bf16.msra.mxu0 0
    %481 = vmatprep.subr.bf16.mxu0 0
    %482 = vmatpush1.bf16.msra.mxu0 0
    %483 = vmatprep.subr.bf16.mxu0 0
    %484 = vmatpush1.bf16.msra.mxu0 0
    %485 = vmatprep.subr.bf16.mxu0 0
    %486 = vmatpush1.bf16.msra.mxu0 0
    %487 = vmatprep.subr.bf16.mxu0 0
    %488 = vmatpush1.bf16.msra.mxu0 0
    %489 = vmatprep.subr.bf16.mxu0 0
    %490 = vmatpush1.bf16.msra.mxu0 0
    %491 = vmatprep.subr.bf16.mxu0 0
    %492 = vmatpush1.bf16.msra.mxu0 %v475
    %493 = vmatprep.subr.bf16.mxu0 0
    %494 = vmatpush2.bf16.msra.mxu0 0
    %495 = vmatprep.subr.bf16.mxu0 0
    %496 = vmatpush2.bf16.msra.mxu0 0
    %497 = vmatprep.subr.bf16.mxu0 0
    %498 = vmatpush2.bf16.msra.mxu0 0
    %499 = vmatprep.subr.bf16.mxu0 0
    %500 = vmatpush2.bf16.msra.mxu0 0
    %501 = vmatprep.subr.bf16.mxu0 0
    %502 = vmatpush2.bf16.msra.mxu0 0
    %503 = vmatprep.subr.bf16.mxu0 0
    %504 = vmatpush2.bf16.msra.mxu0 0
    %505 = vmatprep.subr.bf16.mxu0 0
    %506 = vmatpush2.bf16.msra.mxu0 0
    %507 = vmatprep.subr.bf16.mxu0 0
    %508 = vmatpush2.bf16.msra.mxu0 0
    %509 = vmatprep.mubr.bf16.mxu0 0
    %510 = vmatmul.mubr.bf16.gmra.mxu0 %v472
    %v511 = vpop.f32.mrf.mxu0
    %v512 = vadd.f32 0.0, %v511
    %v513 = vpop.f32.mrf.mxu0
    %v514 = vpop.f32.mrf.mxu0
    %v515 = vpop.f32.mrf.mxu0
    %516 = vdwg.mxu0
    %518 = vrot.lane.b32.xlu0 %v512, 16
    %v519 = vpop.permute.xlu0 %518
    %vm521 = vcmask 195712
    %522 = vst.msk [vmem:[#allocation2] sm:$0xff] %vm521, %v519
    %523 = vrot.lane.b32.xlu0 %v174, 104
    %v524 = vpop.permute.xlu0 %523
    %525 = vrot.lane.b32.xlu0 %v174, 72
    %v526 = vpop.permute.xlu0 %525
    %v528 = vsel %vm182, %v524, 0
    %v531 = vsel %vm182, %v526, 0
    %533 = vmatprep.subr.bf16.mxu0 0
    %534 = vmatpush1.bf16.xpose.msra.mxu0 0
    %535 = vmatprep.subr.bf16.mxu0 0
    %536 = vmatpush1.bf16.xpose.msra.mxu0 0
    %537 = vmatprep.subr.bf16.mxu0 0
    %538 = vmatpush1.bf16.xpose.msra.mxu0 0
    %539 = vmatprep.subr.bf16.mxu0 0
    %540 = vmatpush1.bf16.xpose.msra.mxu0 0
    %541 = vmatprep.subr.bf16.mxu0 0
    %542 = vmatpush1.bf16.xpose.msra.mxu0 0
    %543 = vmatprep.subr.bf16.mxu0 0
    %544 = vmatpush1.bf16.xpose.msra.mxu0 0
    %545 = vmatprep.subr.bf16.mxu0 0
    %546 = vmatpush1.bf16.xpose.msra.mxu0 0
    %547 = vmatprep.subr.bf16.mxu0 0
    %548 = vmatpush1.bf16.xpose.msra.mxu0 %v531
    %549 = vmatprep.subr.bf16.mxu0 0
    %550 = vmatpush2.bf16.xpose.msra.mxu0 0
    %551 = vmatprep.subr.bf16.mxu0 0
    %552 = vmatpush2.bf16.xpose.msra.mxu0 0
    %553 = vmatprep.subr.bf16.mxu0 0
    %554 = vmatpush2.bf16.xpose.msra.mxu0 0
    %555 = vmatprep.subr.bf16.mxu0 0
    %556 = vmatpush2.bf16.xpose.msra.mxu0 0
    %557 = vmatprep.subr.bf16.mxu0 0
    %558 = vmatpush2.bf16.xpose.msra.mxu0 0
    %559 = vmatprep.subr.bf16.mxu0 0
    %560 = vmatpush2.bf16.xpose.msra.mxu0 0
    %561 = vmatprep.subr.bf16.mxu0 0
    %562 = vmatpush2.bf16.xpose.msra.mxu0 0
    %563 = vmatprep.subr.bf16.mxu0 0
    %564 = vmatpush2.bf16.xpose.msra.mxu0 0
    %565 = vmatprep.mubr.bf16.mxu0 0
    %566 = vmatmul.mubr.bf16.gmra.mxu0 %v528
    %v567 = vpop.f32.mrf.mxu0
    %v568 = vadd.f32 %v178, %v567
    %v569 = vpop.f32.mrf.mxu0
    %v570 = vpop.f32.mrf.mxu0
    %v571 = vpop.f32.mrf.mxu0
    %572 = vdwg.mxu0
    %v573 = vsel %vm182, %v568, -inf
    %574 = vmax.xlane.f32.xlu0 %v573
    %v575 = vpop.xlane.xlu0 %574
    %v576 = vsub.f32 %v568, %v575
    %v577 = vmul.f32 %v576, 1.442695
    %v578 = vpow.pop %v577
    %v579 = vsel %vm182, %v578, 0.0
    %580 = vadd.xlane.f32.xlu0 %v579
    %v581 = vpop.xlane.xlu0 %580
    %v582 = vrcp.pop %v581
    %v583 = vmul.f32 %v578, %v582
    %v584 = vpack.c.bf16 %v583, %v583
    %585 = vrot.lane.b32.xlu0 %v174, 40
    %v586 = vpop.permute.xlu0 %585
    %v588 = vsel %vm182, %v584, 0
    %v591 = vsel %vm246, %v586, 0
    %593 = vmatprep.subr.bf16.mxu0 0
    %594 = vmatpush1.bf16.msra.mxu0 0
    %595 = vmatprep.subr.bf16.mxu0 0
    %596 = vmatpush1.bf16.msra.mxu0 0
    %597 = vmatprep.subr.bf16.mxu0 0
    %598 = vmatpush1.bf16.msra.mxu0 0
    %599 = vmatprep.subr.bf16.mxu0 0
    %600 = vmatpush1.bf16.msra.mxu0 0
    %601 = vmatprep.subr.bf16.mxu0 0
    %602 = vmatpush1.bf16.msra.mxu0 0
    %603 = vmatprep.subr.bf16.mxu0 0
    %604 = vmatpush1.bf16.msra.mxu0 0
    %605 = vmatprep.subr.bf16.mxu0 0
    %606 = vmatpush1.bf16.msra.mxu0 0
    %607 = vmatprep.subr.bf16.mxu0 0
    %608 = vmatpush1.bf16.msra.mxu0 %v591
    %609 = vmatprep.subr.bf16.mxu0 0
    %610 = vmatpush2.bf16.msra.mxu0 0
    %611 = vmatprep.subr.bf16.mxu0 0
    %612 = vmatpush2.bf16.msra.mxu0 0
    %613 = vmatprep.subr.bf16.mxu0 0
    %614 = vmatpush2.bf16.msra.mxu0 0
    %615 = vmatprep.subr.bf16.mxu0 0
    %616 = vmatpush2.bf16.msra.mxu0 0
    %617 = vmatprep.subr.bf16.mxu0 0
    %618 = vmatpush2.bf16.msra.mxu0 0
    %619 = vmatprep.subr.bf16.mxu0 0
    %620 = vmatpush2.bf16.msra.mxu0 0
    %621 = vmatprep.subr.bf16.mxu0 0
    %622 = vmatpush2.bf16.msra.mxu0 0
    %623 = vmatprep.subr.bf16.mxu0 0
    %624 = vmatpush2.bf16.msra.mxu0 0
    %625 = vmatprep.mubr.bf16.mxu0 0
    %626 = vmatmul.mubr.bf16.gmra.mxu0 %v588
    %v627 = vpop.f32.mrf.mxu0
    %v628 = vadd.f32 0.0, %v627
    %v629 = vpop.f32.mrf.mxu0
    %v630 = vpop.f32.mrf.mxu0
    %v631 = vpop.f32.mrf.mxu0
    %632 = vdwg.mxu0
    %634 = vrot.lane.b32.xlu0 %v628, 24
    %v635 = vpop.permute.xlu0 %634
    %vm637 = vcmask 261312
    %638 = vst.msk [vmem:[#allocation2] sm:$0xff] %vm637, %v635
    %v639 = vlaneseq
    %v640 = vshrl.u32 %v639, 7
    %v641 = vsub.s32 1, %v640
    %v642 = vrot.slane %v57, %v641
    %v643 = vrot.slane %v174, 4
    %644 = vrot.lane.b32.xlu0 %v643, 96
    %v645 = vpop.permute.xlu0 %644
    %v647 = vsel %vm182, %v643, 0
    %v650 = vsel %vm182, %v645, 0
    %652 = vmatprep.subr.bf16.mxu0 0
    %653 = vmatpush1.bf16.xpose.msra.mxu0 0
    %654 = vmatprep.subr.bf16.mxu0 0
    %655 = vmatpush1.bf16.xpose.msra.mxu0 0
    %656 = vmatprep.subr.bf16.mxu0 0
    %657 = vmatpush1.bf16.xpose.msra.mxu0 0
    %658 = vmatprep.subr.bf16.mxu0 0
    %659 = vmatpush1.bf16.xpose.msra.mxu0 0
    %660 = vmatprep.subr.bf16.mxu0 0
    %661 = vmatpush1.bf16.xpose.msra.mxu0 0
    %662 = vmatprep.subr.bf16.mxu0 0
    %663 = vmatpush1.bf16.xpose.msra.mxu0 0
    %664 = vmatprep.subr.bf16.mxu0 0
    %665 = vmatpush1.bf16.xpose.msra.mxu0 0
    %666 = vmatprep.subr.bf16.mxu0 0
    %667 = vmatpush1.bf16.xpose.msra.mxu0 %v650
    %668 = vmatprep.subr.bf16.mxu0 0
    %669 = vmatpush2.bf16.xpose.msra.mxu0 0
    %670 = vmatprep.subr.bf16.mxu0 0
    %671 = vmatpush2.bf16.xpose.msra.mxu0 0
    %672 = vmatprep.subr.bf16.mxu0 0
    %673 = vmatpush2.bf16.xpose.msra.mxu0 0
    %674 = vmatprep.subr.bf16.mxu0 0
    %675 = vmatpush2.bf16.xpose.msra.mxu0 0
    %676 = vmatprep.subr.bf16.mxu0 0
    %677 = vmatpush2.bf16.xpose.msra.mxu0 0
    %678 = vmatprep.subr.bf16.mxu0 0
    %679 = vmatpush2.bf16.xpose.msra.mxu0 0
    %680 = vmatprep.subr.bf16.mxu0 0
    %681 = vmatpush2.bf16.xpose.msra.mxu0 0
    %682 = vmatprep.subr.bf16.mxu0 0
    %683 = vmatpush2.bf16.xpose.msra.mxu0 0
    %684 = vmatprep.mubr.bf16.mxu0 0
    %685 = vmatmul.mubr.bf16.gmra.mxu0 %v647
    %v686 = vpop.f32.mrf.mxu0
    %v687 = vadd.f32 %v642, %v686
    %v688 = vpop.f32.mrf.mxu0
    %v689 = vpop.f32.mrf.mxu0
    %v690 = vpop.f32.mrf.mxu0
    %691 = vdwg.mxu0
    %v692 = vsel %vm182, %v687, -inf
    %693 = vmax.xlane.f32.xlu0 %v692
    %v694 = vpop.xlane.xlu0 %693
    %v695 = vsub.f32 %v687, %v694
    %v696 = vmul.f32 %v695, 1.442695
    %v697 = vpow.pop %v696
    %v698 = vsel %vm182, %v697, 0.0
    %699 = vadd.xlane.f32.xlu0 %v698
    %v700 = vpop.xlane.xlu0 %699
    %v701 = vrcp.pop %v700
    %v702 = vmul.f32 %v697, %v701
    %v703 = vpack.c.bf16 %v702, %v702
    %704 = vrot.lane.b32.xlu0 %v643, 64
    %v705 = vpop.permute.xlu0 %704
    %v707 = vsel %vm182, %v703, 0
    %v710 = vsel %vm246, %v705, 0
    %712 = vmatprep.subr.bf16.mxu0 0
    %713 = vmatpush1.bf16.msra.mxu0 0
    %714 = vmatprep.subr.bf16.mxu0 0
    %715 = vmatpush1.bf16.msra.mxu0 0
    %716 = vmatprep.subr.bf16.mxu0 0
    %717 = vmatpush1.bf16.msra.mxu0 0
    %718 = vmatprep.subr.bf16.mxu0 0
    %719 = vmatpush1.bf16.msra.mxu0 0
    %720 = vmatprep.subr.bf16.mxu0 0
    %721 = vmatpush1.bf16.msra.mxu0 0
    %722 = vmatprep.subr.bf16.mxu0 0
    %723 = vmatpush1.bf16.msra.mxu0 0
    %724 = vmatprep.subr.bf16.mxu0 0
    %725 = vmatpush1.bf16.msra.mxu0 0
    %726 = vmatprep.subr.bf16.mxu0 0
    %727 = vmatpush1.bf16.msra.mxu0 %v710
    %728 = vmatprep.subr.bf16.mxu0 0
    %729 = vmatpush2.bf16.msra.mxu0 0
    %730 = vmatprep.subr.bf16.mxu0 0
    %731 = vmatpush2.bf16.msra.mxu0 0
    %732 = vmatprep.subr.bf16.mxu0 0
    %733 = vmatpush2.bf16.msra.mxu0 0
    %734 = vmatprep.subr.bf16.mxu0 0
    %735 = vmatpush2.bf16.msra.mxu0 0
    %736 = vmatprep.subr.bf16.mxu0 0
    %737 = vmatpush2.bf16.msra.mxu0 0
    %738 = vmatprep.subr.bf16.mxu0 0
    %739 = vmatpush2.bf16.msra.mxu0 0
    %740 = vmatprep.subr.bf16.mxu0 0
    %741 = vmatpush2.bf16.msra.mxu0 0
    %742 = vmatprep.subr.bf16.mxu0 0
    %743 = vmatpush2.bf16.msra.mxu0 0
    %744 = vmatprep.mubr.bf16.mxu0 0
    %745 = vmatmul.mubr.bf16.gmra.mxu0 %v707
    %v746 = vpop.f32.mrf.mxu0
    %v747 = vadd.f32 0.0, %v746
    %v748 = vpop.f32.mrf.mxu0
    %v749 = vpop.f32.mrf.mxu0
    %v750 = vpop.f32.mrf.mxu0
    %751 = vdwg.mxu0
    %752 = vst.msk [vmem:[#allocation2 + $0x8] sm:$0xff] %vm182, %v747
    %753 = vrot.lane.b32.xlu0 %v643, 120
    %v754 = vpop.permute.xlu0 %753
    %755 = vrot.lane.b32.xlu0 %v643, 88
    %v756 = vpop.permute.xlu0 %755
    %v758 = vsel %vm182, %v754, 0
    %v761 = vsel %vm182, %v756, 0
    %763 = vmatprep.subr.bf16.mxu0 0
    %764 = vmatpush1.bf16.xpose.msra.mxu0 0
    %765 = vmatprep.subr.bf16.mxu0 0
    %766 = vmatpush1.bf16.xpose.msra.mxu0 0
    %767 = vmatprep.subr.bf16.mxu0 0
    %768 = vmatpush1.bf16.xpose.msra.mxu0 0
    %769 = vmatprep.subr.bf16.mxu0 0
    %770 = vmatpush1.bf16.xpose.msra.mxu0 0
    %771 = vmatprep.subr.bf16.mxu0 0
    %772 = vmatpush1.bf16.xpose.msra.mxu0 0
    %773 = vmatprep.subr.bf16.mxu0 0
    %774 = vmatpush1.bf16.xpose.msra.mxu0 0
    %775 = vmatprep.subr.bf16.mxu0 0
    %776 = vmatpush1.bf16.xpose.msra.mxu0 0
    %777 = vmatprep.subr.bf16.mxu0 0
    %778 = vmatpush1.bf16.xpose.msra.mxu0 %v761
    %779 = vmatprep.subr.bf16.mxu0 0
    %780 = vmatpush2.bf16.xpose.msra.mxu0 0
    %781 = vmatprep.subr.bf16.mxu0 0
    %782 = vmatpush2.bf16.xpose.msra.mxu0 0
    %783 = vmatprep.subr.bf16.mxu0 0
    %784 = vmatpush2.bf16.xpose.msra.mxu0 0
    %785 = vmatprep.subr.bf16.mxu0 0
    %786 = vmatpush2.bf16.xpose.msra.mxu0 0
    %787 = vmatprep.subr.bf16.mxu0 0
    %788 = vmatpush2.bf16.xpose.msra.mxu0 0
    %789 = vmatprep.subr.bf16.mxu0 0
    %790 = vmatpush2.bf16.xpose.msra.mxu0 0
    %791 = vmatprep.subr.bf16.mxu0 0
    %792 = vmatpush2.bf16.xpose.msra.mxu0 0
    %793 = vmatprep.subr.bf16.mxu0 0
    %794 = vmatpush2.bf16.xpose.msra.mxu0 0
    %795 = vmatprep.mubr.bf16.mxu0 0
    %796 = vmatmul.mubr.bf16.gmra.mxu0 %v758
    %v797 = vpop.f32.mrf.mxu0
    %v798 = vadd.f32 %v642, %v797
    %v799 = vpop.f32.mrf.mxu0
    %v800 = vpop.f32.mrf.mxu0
    %v801 = vpop.f32.mrf.mxu0
    %802 = vdwg.mxu0
    %v803 = vsel %vm182, %v798, -inf
    %804 = vmax.xlane.f32.xlu0 %v803
    %v805 = vpop.xlane.xlu0 %804
    %v806 = vsub.f32 %v798, %v805
    %v807 = vmul.f32 %v806, 1.442695
    %v808 = vpow.pop %v807
    %v809 = vsel %vm182, %v808, 0.0
    %810 = vadd.xlane.f32.xlu0 %v809
    %v811 = vpop.xlane.xlu0 %810
    %v812 = vrcp.pop %v811
    %v813 = vmul.f32 %v808, %v812
    %v814 = vpack.c.bf16 %v813, %v813
    %815 = vrot.lane.b32.xlu0 %v643, 56
    %v816 = vpop.permute.xlu0 %815
    %v818 = vsel %vm182, %v814, 0
    %v821 = vsel %vm246, %v816, 0
    %823 = vmatprep.subr.bf16.mxu0 0
    %824 = vmatpush1.bf16.msra.mxu0 0
    %825 = vmatprep.subr.bf16.mxu0 0
    %826 = vmatpush1.bf16.msra.mxu0 0
    %827 = vmatprep.subr.bf16.mxu0 0
    %828 = vmatpush1.bf16.msra.mxu0 0
    %829 = vmatprep.subr.bf16.mxu0 0
    %830 = vmatpush1.bf16.msra.mxu0 0
    %831 = vmatprep.subr.bf16.mxu0 0
    %832 = vmatpush1.bf16.msra.mxu0 0
    %833 = vmatprep.subr.bf16.mxu0 0
    %834 = vmatpush1.bf16.msra.mxu0 0
    %835 = vmatprep.subr.bf16.mxu0 0
    %836 = vmatpush1.bf16.msra.mxu0 0
    %837 = vmatprep.subr.bf16.mxu0 0
    %838 = vmatpush1.bf16.msra.mxu0 %v821
    %839 = vmatprep.subr.bf16.mxu0 0
    %840 = vmatpush2.bf16.msra.mxu0 0
    %841 = vmatprep.subr.bf16.mxu0 0
    %842 = vmatpush2.bf16.msra.mxu0 0
    %843 = vmatprep.subr.bf16.mxu0 0
    %844 = vmatpush2.bf16.msra.mxu0 0
    %845 = vmatprep.subr.bf16.mxu0 0
    %846 = vmatpush2.bf16.msra.mxu0 0
    %847 = vmatprep.subr.bf16.mxu0 0
    %848 = vmatpush2.bf16.msra.mxu0 0
    %849 = vmatprep.subr.bf16.mxu0 0
    %850 = vmatpush2.bf16.msra.mxu0 0
    %851 = vmatprep.subr.bf16.mxu0 0
    %852 = vmatpush2.bf16.msra.mxu0 0
    %853 = vmatprep.subr.bf16.mxu0 0
    %854 = vmatpush2.bf16.msra.mxu0 0
    %855 = vmatprep.mubr.bf16.mxu0 0
    %856 = vmatmul.mubr.bf16.gmra.mxu0 %v818
    %v857 = vpop.f32.mrf.mxu0
    %v858 = vadd.f32 0.0, %v857
    %v859 = vpop.f32.mrf.mxu0
    %v860 = vpop.f32.mrf.mxu0
    %v861 = vpop.f32.mrf.mxu0
    %862 = vdwg.mxu0
    %864 = vrot.lane.b32.xlu0 %v858, 8
    %v865 = vpop.permute.xlu0 %864
    %867 = vst.msk [vmem:[#allocation2 + $0x8] sm:$0xff] %vm405, %v865
    %868 = vrot.lane.b32.xlu0 %v643, 112
    %v869 = vpop.permute.xlu0 %868
    %870 = vrot.lane.b32.xlu0 %v643, 80
    %v871 = vpop.permute.xlu0 %870
    %v873 = vsel %vm182, %v869, 0
    %v876 = vsel %vm182, %v871, 0
    %878 = vmatprep.subr.bf16.mxu0 0
    %879 = vmatpush1.bf16.xpose.msra.mxu0 0
    %880 = vmatprep.subr.bf16.mxu0 0
    %881 = vmatpush1.bf16.xpose.msra.mxu0 0
    %882 = vmatprep.subr.bf16.mxu0 0
    %883 = vmatpush1.bf16.xpose.msra.mxu0 0
    %884 = vmatprep.subr.bf16.mxu0 0
    %885 = vmatpush1.bf16.xpose.msra.mxu0 0
    %886 = vmatprep.subr.bf16.mxu0 0
    %887 = vmatpush1.bf16.xpose.msra.mxu0 0
    %888 = vmatprep.subr.bf16.mxu0 0
    %889 = vmatpush1.bf16.xpose.msra.mxu0 0
    %890 = vmatprep.subr.bf16.mxu0 0
    %891 = vmatpush1.bf16.xpose.msra.mxu0 0
    %892 = vmatprep.subr.bf16.mxu0 0
    %893 = vmatpush1.bf16.xpose.msra.mxu0 %v876
    %894 = vmatprep.subr.bf16.mxu0 0
    %895 = vmatpush2.bf16.xpose.msra.mxu0 0
    %896 = vmatprep.subr.bf16.mxu0 0
    %897 = vmatpush2.bf16.xpose.msra.mxu0 0
    %898 = vmatprep.subr.bf16.mxu0 0
    %899 = vmatpush2.bf16.xpose.msra.mxu0 0
    %900 = vmatprep.subr.bf16.mxu0 0
    %901 = vmatpush2.bf16.xpose.msra.mxu0 0
    %902 = vmatprep.subr.bf16.mxu0 0
    %903 = vmatpush2.bf16.xpose.msra.mxu0 0
    %904 = vmatprep.subr.bf16.mxu0 0
    %905 = vmatpush2.bf16.xpose.msra.mxu0 0
    %906 = vmatprep.subr.bf16.mxu0 0
    %907 = vmatpush2.bf16.xpose.msra.mxu0 0
    %908 = vmatprep.subr.bf16.mxu0 0
    %909 = vmatpush2.bf16.xpose.msra.mxu0 0
    %910 = vmatprep.mubr.bf16.mxu0 0
    %911 = vmatmul.mubr.bf16.gmra.mxu0 %v873
    %v912 = vpop.f32.mrf.mxu0
    %v913 = vadd.f32 %v642, %v912
    %v914 = vpop.f32.mrf.mxu0
    %v915 = vpop.f32.mrf.mxu0
    %v916 = vpop.f32.mrf.mxu0
    %917 = vdwg.mxu0
    %v918 = vsel %vm182, %v913, -inf
    %919 = vmax.xlane.f32.xlu0 %v918
    %v920 = vpop.xlane.xlu0 %919
    %v921 = vsub.f32 %v913, %v920
    %v922 = vmul.f32 %v921, 1.442695
    %v923 = vpow.pop %v922
    %v924 = vsel %vm182, %v923, 0.0
    %925 = vadd.xlane.f32.xlu0 %v924
    %v926 = vpop.xlane.xlu0 %925
    %v927 = vrcp.pop %v926
    %v928 = vmul.f32 %v923, %v927
    %v929 = vpack.c.bf16 %v928, %v928
    %930 = vrot.lane.b32.xlu0 %v643, 48
    %v931 = vpop.permute.xlu0 %930
    %v933 = vsel %vm182, %v929, 0
    %v936 = vsel %vm246, %v931, 0
    %938 = vmatprep.subr.bf16.mxu0 0
    %939 = vmatpush1.bf16.msra.mxu0 0
    %940 = vmatprep.subr.bf16.mxu0 0
    %941 = vmatpush1.bf16.msra.mxu0 0
    %942 = vmatprep.subr.bf16.mxu0 0
    %943 = vmatpush1.bf16.msra.mxu0 0
    %944 = vmatprep.subr.bf16.mxu0 0
    %945 = vmatpush1.bf16.msra.mxu0 0
    %946 = vmatprep.subr.bf16.mxu0 0
    %947 = vmatpush1.bf16.msra.mxu0 0
    %948 = vmatprep.subr.bf16.mxu0 0
    %949 = vmatpush1.bf16.msra.mxu0 0
    %950 = vmatprep.subr.bf16.mxu0 0
    %951 = vmatpush1.bf16.msra.mxu0 0
    %952 = vmatprep.subr.bf16.mxu0 0
    %953 = vmatpush1.bf16.msra.mxu0 %v936
    %954 = vmatprep.subr.bf16.mxu0 0
    %955 = vmatpush2.bf16.msra.mxu0 0
    %956 = vmatprep.subr.bf16.mxu0 0
    %957 = vmatpush2.bf16.msra.mxu0 0
    %958 = vmatprep.subr.bf16.mxu0 0
    %959 = vmatpush2.bf16.msra.mxu0 0
    %960 = vmatprep.subr.bf16.mxu0 0
    %961 = vmatpush2.bf16.msra.mxu0 0
    %962 = vmatprep.subr.bf16.mxu0 0
    %963 = vmatpush2.bf16.msra.mxu0 0
    %964 = vmatprep.subr.bf16.mxu0 0
    %965 = vmatpush2.bf16.msra.mxu0 0
    %966 = vmatprep.subr.bf16.mxu0 0
    %967 = vmatpush2.bf16.msra.mxu0 0
    %968 = vmatprep.subr.bf16.mxu0 0
    %969 = vmatpush2.bf16.msra.mxu0 0
    %970 = vmatprep.mubr.bf16.mxu0 0
    %971 = vmatmul.mubr.bf16.gmra.mxu0 %v933
    %v972 = vpop.f32.mrf.mxu0
    %v973 = vadd.f32 0.0, %v972
    %v974 = vpop.f32.mrf.mxu0
    %v975 = vpop.f32.mrf.mxu0
    %v976 = vpop.f32.mrf.mxu0
    %977 = vdwg.mxu0
    %979 = vrot.lane.b32.xlu0 %v973, 16
    %v980 = vpop.permute.xlu0 %979
    %982 = vst.msk [vmem:[#allocation2 + $0x8] sm:$0xff] %vm521, %v980
    %983 = vrot.lane.b32.xlu0 %v643, 104
    %v984 = vpop.permute.xlu0 %983
    %985 = vrot.lane.b32.xlu0 %v643, 72
    %v986 = vpop.permute.xlu0 %985
    %v988 = vsel %vm182, %v984, 0
    %v991 = vsel %vm182, %v986, 0
    %993 = vmatprep.subr.bf16.mxu0 0
    %994 = vmatpush1.bf16.xpose.msra.mxu0 0
    %995 = vmatprep.subr.bf16.mxu0 0
    %996 = vmatpush1.bf16.xpose.msra.mxu0 0
    %997 = vmatprep.subr.bf16.mxu0 0
    %998 = vmatpush1.bf16.xpose.msra.mxu0 0
    %999 = vmatprep.subr.bf16.mxu0 0
    %1000 = vmatpush1.bf16.xpose.msra.mxu0 0
    %1001 = vmatprep.subr.bf16.mxu0 0
    %1002 = vmatpush1.bf16.xpose.msra.mxu0 0
    %1003 = vmatprep.subr.bf16.mxu0 0
    %1004 = vmatpush1.bf16.xpose.msra.mxu0 0
    %1005 = vmatprep.subr.bf16.mxu0 0
    %1006 = vmatpush1.bf16.xpose.msra.mxu0 0
    %1007 = vmatprep.subr.bf16.mxu0 0
    %1008 = vmatpush1.bf16.xpose.msra.mxu0 %v991
    %1009 = vmatprep.subr.bf16.mxu0 0
    %1010 = vmatpush2.bf16.xpose.msra.mxu0 0
    %1011 = vmatprep.subr.bf16.mxu0 0
    %1012 = vmatpush2.bf16.xpose.msra.mxu0 0
    %1013 = vmatprep.subr.bf16.mxu0 0
    %1014 = vmatpush2.bf16.xpose.msra.mxu0 0
    %1015 = vmatprep.subr.bf16.mxu0 0
    %1016 = vmatpush2.bf16.xpose.msra.mxu0 0
    %1017 = vmatprep.subr.bf16.mxu0 0
    %1018 = vmatpush2.bf16.xpose.msra.mxu0 0
    %1019 = vmatprep.subr.bf16.mxu0 0
    %1020 = vmatpush2.bf16.xpose.msra.mxu0 0
    %1021 = vmatprep.subr.bf16.mxu0 0
    %1022 = vmatpush2.bf16.xpose.msra.mxu0 0
    %1023 = vmatprep.subr.bf16.mxu0 0
    %1024 = vmatpush2.bf16.xpose.msra.mxu0 0
    %1025 = vmatprep.mubr.bf16.mxu0 0
    %1026 = vmatmul.mubr.bf16.gmra.mxu0 %v988
    %v1027 = vpop.f32.mrf.mxu0
    %v1028 = vadd.f32 %v642, %v1027
    %v1029 = vpop.f32.mrf.mxu0
    %v1030 = vpop.f32.mrf.mxu0
    %v1031 = vpop.f32.mrf.mxu0
    %1032 = vdwg.mxu0
    %v1033 = vsel %vm182, %v1028, -inf
    %1034 = vmax.xlane.f32.xlu0 %v1033
    %v1035 = vpop.xlane.xlu0 %1034
    %v1036 = vsub.f32 %v1028, %v1035
    %v1037 = vmul.f32 %v1036, 1.442695
    %v1038 = vpow.pop %v1037
    %v1039 = vsel %vm182, %v1038, 0.0
    %1040 = vadd.xlane.f32.xlu0 %v1039
    %v1041 = vpop.xlane.xlu0 %1040
    %v1042 = vrcp.pop %v1041
    %v1043 = vmul.f32 %v1038, %v1042
    %v1044 = vpack.c.bf16 %v1043, %v1043
    %1045 = vrot.lane.b32.xlu0 %v643, 40
    %v1046 = vpop.permute.xlu0 %1045
    %v1048 = vsel %vm182, %v1044, 0
    %v1051 = vsel %vm246, %v1046, 0
    %1053 = vmatprep.subr.bf16.mxu0 0
    %1054 = vmatpush1.bf16.msra.mxu0 0
    %1055 = vmatprep.subr.bf16.mxu0 0
    %1056 = vmatpush1.bf16.msra.mxu0 0
    %1057 = vmatprep.subr.bf16.mxu0 0
    %1058 = vmatpush1.bf16.msra.mxu0 0
    %1059 = vmatprep.subr.bf16.mxu0 0
    %1060 = vmatpush1.bf16.msra.mxu0 0
    %1061 = vmatprep.subr.bf16.mxu0 0
    %1062 = vmatpush1.bf16.msra.mxu0 0
    %1063 = vmatprep.subr.bf16.mxu0 0
    %1064 = vmatpush1.bf16.msra.mxu0 0
    %1065 = vmatprep.subr.bf16.mxu0 0
    %1066 = vmatpush1.bf16.msra.mxu0 0
    %1067 = vmatprep.subr.bf16.mxu0 0
    %1068 = vmatpush1.bf16.msra.mxu0 %v1051
    %1069 = vmatprep.subr.bf16.mxu0 0
    %1070 = vmatpush2.bf16.msra.mxu0 0
    %1071 = vmatprep.subr.bf16.mxu0 0
    %1072 = vmatpush2.bf16.msra.mxu0 0
    %1073 = vmatprep.subr.bf16.mxu0 0
    %1074 = vmatpush2.bf16.msra.mxu0 0
    %1075 = vmatprep.subr.bf16.mxu0 0
    %1076 = vmatpush2.bf16.msra.mxu0 0
    %1077 = vmatprep.subr.bf16.mxu0 0
    %1078 = vmatpush2.bf16.msra.mxu0 0
    %1079 = vmatprep.subr.bf16.mxu0 0
    %1080 = vmatpush2.bf16.msra.mxu0 0
    %1081 = vmatprep.subr.bf16.mxu0 0
    %1082 = vmatpush2.bf16.msra.mxu0 0
    %1083 = vmatprep.subr.bf16.mxu0 0
    %1084 = vmatpush2.bf16.msra.mxu0 0
    %1085 = vmatprep.mubr.bf16.mxu0 0
    %1086 = vmatmul.mubr.bf16.gmra.mxu0 %v1048
    %v1087 = vpop.f32.mrf.mxu0
    %v1088 = vadd.f32 0.0, %v1087
    %v1089 = vpop.f32.mrf.mxu0
    %v1090 = vpop.f32.mrf.mxu0
    %v1091 = vpop.f32.mrf.mxu0
    %1092 = vdwg.mxu0
    %1094 = vrot.lane.b32.xlu0 %v1088, 24
    %v1095 = vpop.permute.xlu0 %1094
    %1097 = vst.msk [vmem:[#allocation2 + $0x8] sm:$0xff] %vm637, %v1095
    %v1098 = vld [vmem:[#allocation2] sm:$0xff]
    %v1099 = vld [vmem:[#allocation2 + $0x8] sm:$0xff]
    %v1100 = vpack.c.bf16 %v1099, %v1098
    %v1101 = vld [vmem:[%s6] sm:$0xf]
    %v1102 = vld [vmem:[%s6 + $0x4] sm:$0xf]
    %v1103 = vld [vmem:[%s6 + $0x8] sm:$0xf]
    %v1104 = vld [vmem:[%s6 + $0xc] sm:$0xf]
    %v1105 = vld [vmem:[%s7] sm:$0x1]
    %v1107 = vlaneseq
    %v1108 = vshrl.u32 %v1107, 7
    %v1109 = vsub.s32 0, %v1108
    %v1110 = vrot.slane %v1105, %v1109
    %v1116 = vunpack.c.l.b16 %v1101
    %v1117 = vunpack.c.l.b16 %v1102
    %v1118 = vunpack.c.l.b16 %v1103
    %v1119 = vunpack.c.l.b16 %v1104
    %v1120 = vpack.c.b16 %v1117, %v1116
    %v1121 = vpack.c.b16 %v1119, %v1118
    %v1125 = vsel %vm62, %v1100, 0
    %1127 = vmatprep.subr.bf16.mxu0 0
    %1128 = vmatpush1.bf16.msra.mxu0 0
    %1129 = vmatprep.subr.bf16.mxu0 0
    %1130 = vmatpush1.bf16.msra.mxu0 0
    %1131 = vmatprep.subr.bf16.mxu0 0
    %1132 = vmatpush1.bf16.msra.mxu0 0
    %1133 = vmatprep.subr.bf16.mxu0 0
    %1134 = vmatpush1.bf16.msra.mxu0 0
    %1135 = vmatprep.subr.bf16.mxu0 0
    %1136 = vmatpush1.bf16.msra.mxu0 0
    %1137 = vmatprep.subr.bf16.mxu0 0
    %1138 = vmatpush1.bf16.msra.mxu0 0
    %1139 = vmatprep.subr.bf16.mxu0 0
    %1140 = vmatpush1.bf16.msra.mxu0 %v1121
    %1141 = vmatprep.subr.bf16.mxu0 0
    %1142 = vmatpush1.bf16.msra.mxu0 %v1120
    %1143 = vmatprep.subr.bf16.mxu0 0
    %1144 = vmatpush2.bf16.msra.mxu0 0
    %1145 = vmatprep.subr.bf16.mxu0 0
    %1146 = vmatpush2.bf16.msra.mxu0 0
    %1147 = vmatprep.subr.bf16.mxu0 0
    %1148 = vmatpush2.bf16.msra.mxu0 0
    %1149 = vmatprep.subr.bf16.mxu0 0
    %1150 = vmatpush2.bf16.msra.mxu0 0
    %1151 = vmatprep.subr.bf16.mxu0 0
    %1152 = vmatpush2.bf16.msra.mxu0 0
    %1153 = vmatprep.subr.bf16.mxu0 0
    %1154 = vmatpush2.bf16.msra.mxu0 0
    %1155 = vmatprep.subr.bf16.mxu0 0
    %1156 = vmatpush2.bf16.msra.mxu0 0
    %1157 = vmatprep.subr.bf16.mxu0 0
    %1158 = vmatpush2.bf16.msra.mxu0 0
    %1159 = vmatprep.mubr.bf16.mxu0 0
    %1160 = vmatmul.mubr.bf16.gmra.mxu0 %v1125
    %v1161 = vpop.f32.mrf.mxu0
    %v1162 = vadd.f32 %v1110, %v1161
    %v1163 = vpop.f32.mrf.mxu0
    %v1164 = vpop.f32.mrf.mxu0
    %v1165 = vadd.f32 %v1110, %v1164
    %v1166 = vpop.f32.mrf.mxu0
    %1167 = vdwg.mxu0
    %v1168 = vadd.f32 %v1162, %v104
    %v1169 = vadd.f32 %v1165, %v105
    %v1170 = vld [vmem:[%s8] sm:$0x1]
    %v1171 = vld [vmem:[%s9] sm:$0x1]
    %v1172 = vsel %vm62, %v1168, 0.0
    %1173 = vadd.xlane.f32.xlu0 %v1172
    %v1174 = vpop.xlane.xlu0 %1173
    %v1175 = vsel %vm62, %v1169, 0.0
    %1176 = vadd.xlane.f32.xlu0 %v1175
    %v1177 = vpop.xlane.xlu0 %1176
    %v1178 = vmul.f32 %v1174, %v69
    %v1179 = vmul.f32 %v1177, %v69
    %v1180 = vsub.f32 %v1168, %v1178
    %v1181 = vsub.f32 %v1169, %v1179
    %v1182 = vmul.f32 %v1180, %v1180
    %v1183 = vmul.f32 %v1181, %v1181
    %v1184 = vsel %vm62, %v1182, 0.0
    %1185 = vadd.xlane.f32.xlu0 %v1184
    %v1186 = vpop.xlane.xlu0 %1185
    %v1187 = vsel %vm62, %v1183, 0.0
    %1188 = vadd.xlane.f32.xlu0 %v1187
    %v1189 = vpop.xlane.xlu0 %1188
    %v1190 = vmul.f32 %v1186, %v69
    %v1191 = vmul.f32 %v1189, %v69
    %v1192 = vadd.f32 %v1190, 1e-12
    %v1193 = vadd.f32 %v1191, 1e-12
    %v1194 = vrsqrt.pop %v1192
    %v1195 = vrsqrt.pop %v1193
    %v1196 = vmul.f32 %v1180, %v1194
    %v1197 = vmul.f32 %v1181, %v1195
    %v1199 = vlaneseq
    %v1200 = vshrl.u32 %v1199, 7
    %v1201 = vsub.s32 0, %v1200
    %v1202 = vrot.slane %v1170, %v1201
    %v1204 = vmul.f32 %v1196, %v1202
    %v1205 = vmul.f32 %v1197, %v1202
    %v1207 = vlaneseq
    %v1208 = vshrl.u32 %v1207, 7
    %v1209 = vsub.s32 0, %v1208
    %v1210 = vrot.slane %v1171, %v1209
    %v1212 = vadd.f32 %v1204, %v1210
    %v1213 = vadd.f32 %v1205, %v1210
    %v1214 = vpack.c.bf16 %v1213, %v1212
    %v1215 = vld [vmem:[%s10] sm:$0xf]
    %v1216 = vld [vmem:[%s10 + $0x4] sm:$0xf]
    %v1217 = vld [vmem:[%s10 + $0x8] sm:$0xf]
    %v1218 = vld [vmem:[%s10 + $0xc] sm:$0xf]
    %v1219 = vld [vmem:[%s11] sm:$0x1]
    %v1221 = vlaneseq
    %v1222 = vshrl.u32 %v1221, 7
    %v1223 = vsub.s32 0, %v1222
    %v1224 = vrot.slane %v1219, %v1223
    %v1230 = vunpack.c.l.b16 %v1215
    %v1231 = vunpack.c.l.b16 %v1216
    %v1232 = vunpack.c.l.b16 %v1217
    %v1233 = vunpack.c.l.b16 %v1218
    %v1234 = vpack.c.b16 %v1231, %v1230
    %v1235 = vpack.c.b16 %v1233, %v1232
    %v1239 = vsel %vm62, %v1214, 0
    %1241 = vmatprep.subr.bf16.mxu0 0
    %1242 = vmatpush1.bf16.msra.mxu0 0
    %1243 = vmatprep.subr.bf16.mxu0 0
    %1244 = vmatpush1.bf16.msra.mxu0 0
    %1245 = vmatprep.subr.bf16.mxu0 0
    %1246 = vmatpush1.bf16.msra.mxu0 0
    %1247 = vmatprep.subr.bf16.mxu0 0
    %1248 = vmatpush1.bf16.msra.mxu0 0
    %1249 = vmatprep.subr.bf16.mxu0 0
    %1250 = vmatpush1.bf16.msra.mxu0 0
    %1251 = vmatprep.subr.bf16.mxu0 0
    %1252 = vmatpush1.bf16.msra.mxu0 0
    %1253 = vmatprep.subr.bf16.mxu0 0
    %1254 = vmatpush1.bf16.msra.mxu0 %v1235
    %1255 = vmatprep.subr.bf16.mxu0 0
    %1256 = vmatpush1.bf16.msra.mxu0 %v1234
    %1257 = vmatprep.subr.bf16.mxu0 0
    %1258 = vmatpush2.bf16.msra.mxu0 0
    %1259 = vmatprep.subr.bf16.mxu0 0
    %1260 = vmatpush2.bf16.msra.mxu0 0
    %1261 = vmatprep.subr.bf16.mxu0 0
    %1262 = vmatpush2.bf16.msra.mxu0 0
    %1263 = vmatprep.subr.bf16.mxu0 0
    %1264 = vmatpush2.bf16.msra.mxu0 0
    %1265 = vmatprep.subr.bf16.mxu0 0
    %1266 = vmatpush2.bf16.msra.mxu0 0
    %1267 = vmatprep.subr.bf16.mxu0 0
    %1268 = vmatpush2.bf16.msra.mxu0 0
    %1269 = vmatprep.subr.bf16.mxu0 0
    %1270 = vmatpush2.bf16.msra.mxu0 0
    %1271 = vmatprep.subr.bf16.mxu0 0
    %1272 = vmatpush2.bf16.msra.mxu0 0
    %1273 = vmatprep.mubr.bf16.mxu0 0
    %1274 = vmatmul.mubr.bf16.gmra.mxu0 %v1239
    %v1275 = vpop.f32.mrf.mxu0
    %v1276 = vadd.f32 %v1224, %v1275
    %v1277 = vpop.f32.mrf.mxu0
    %v1278 = vpop.f32.mrf.mxu0
    %v1279 = vadd.f32 %v1224, %v1278
    %v1280 = vpop.f32.mrf.mxu0
    %1281 = vdwg.mxu0
    %v1282 = vmul.f32 %v1276, 0.5
    %v1283 = vmul.f32 %v1279, 0.5
    %v1284 = vmul.f32 %v1276, 0.044715
    %v1285 = vmul.f32 %v1279, 0.044715
    %v1286 = vmul.f32 %v1284, %v1276
    %v1287 = vmul.f32 %v1285, %v1279
    %v1288 = vmul.f32 %v1286, %v1276
    %v1289 = vmul.f32 %v1287, %v1279
    %v1290 = vadd.f32 %v1276, %v1288
    %v1291 = vadd.f32 %v1279, %v1289
    %v1292 = vmul.f32 %v1290, 0.7978846
    %v1293 = vmul.f32 %v1291, 0.7978846
    %v1294 = vtanh.pop %v1292
    %v1295 = vtanh.pop %v1293
    %v1296 = vadd.f32 %v1294, 1.0
    %v1297 = vadd.f32 %v1295, 1.0
    %v1298 = vmul.f32 %v1282, %v1296
    %v1299 = vmul.f32 %v1283, %v1297
    %v1300 = vpack.c.bf16 %v1299, %v1298
    %v1301 = vld [vmem:[%s12] sm:$0xf]
    %v1302 = vld [vmem:[%s12 + $0x4] sm:$0xf]
    %v1303 = vld [vmem:[%s12 + $0x8] sm:$0xf]
    %v1304 = vld [vmem:[%s12 + $0xc] sm:$0xf]
    %v1305 = vld [vmem:[%s12 + $0x10] sm:$0xf]
    %v1306 = vld [vmem:[%s12 + $0x14] sm:$0xf]
    %v1307 = vld [vmem:[%s12 + $0x18] sm:$0xf]
    %v1308 = vld [vmem:[%s12 + $0x1c] sm:$0xf]
    %v1309 = vld [vmem:[%s13] sm:$0x1]
    %v1311 = vlaneseq
    %v1312 = vshrl.u32 %v1311, 7
    %v1313 = vsub.s32 0, %v1312
    %v1314 = vrot.slane %v1309, %v1313
    %v1324 = vunpack.c.l.b16 %v1301
    %v1325 = vunpack.c.l.b16 %v1302
    %v1326 = vunpack.c.l.b16 %v1303
    %v1327 = vunpack.c.l.b16 %v1304
    %v1328 = vunpack.c.l.b16 %v1305
    %v1329 = vunpack.c.l.b16 %v1306
    %v1330 = vunpack.c.l.b16 %v1307
    %v1331 = vunpack.c.l.b16 %v1308
    %v1332 = vpack.c.b16 %v1325, %v1324
    %v1333 = vpack.c.b16 %v1327, %v1326
    %v1334 = vpack.c.b16 %v1329, %v1328
    %v1335 = vpack.c.b16 %v1331, %v1330
    %vm1340 = vcmask 523264
    %v1342 = vsel %vm1340, %v1300, 0
    %1344 = vmatprep.subr.bf16.mxu0 0
    %1345 = vmatpush1.bf16.msra.mxu0 0
    %1346 = vmatprep.subr.bf16.mxu0 0
    %1347 = vmatpush1.bf16.msra.mxu0 0
    %1348 = vmatprep.subr.bf16.mxu0 0
    %1349 = vmatpush1.bf16.msra.mxu0 0
    %1350 = vmatprep.subr.bf16.mxu0 0
    %1351 = vmatpush1.bf16.msra.mxu0 0
    %1352 = vmatprep.subr.bf16.mxu0 0
    %1353 = vmatpush1.bf16.msra.mxu0 %v1335
    %1354 = vmatprep.subr.bf16.mxu0 0
    %1355 = vmatpush1.bf16.msra.mxu0 %v1334
    %1356 = vmatprep.subr.bf16.mxu0 0
    %1357 = vmatpush1.bf16.msra.mxu0 %v1333
    %1358 = vmatprep.subr.bf16.mxu0 0
    %1359 = vmatpush1.bf16.msra.mxu0 %v1332
    %1360 = vmatprep.subr.bf16.mxu0 0
    %1361 = vmatpush2.bf16.msra.mxu0 0
    %1362 = vmatprep.subr.bf16.mxu0 0
    %1363 = vmatpush2.bf16.msra.mxu0 0
    %1364 = vmatprep.subr.bf16.mxu0 0
    %1365 = vmatpush2.bf16.msra.mxu0 0
    %1366 = vmatprep.subr.bf16.mxu0 0
    %1367 = vmatpush2.bf16.msra.mxu0 0
    %1368 = vmatprep.subr.bf16.mxu0 0
    %1369 = vmatpush2.bf16.msra.mxu0 0
    %1370 = vmatprep.subr.bf16.mxu0 0
    %1371 = vmatpush2.bf16.msra.mxu0 0
    %1372 = vmatprep.subr.bf16.mxu0 0
    %1373 = vmatpush2.bf16.msra.mxu0 0
    %1374 = vmatprep.subr.bf16.mxu0 0
    %1375 = vmatpush2.bf16.msra.mxu0 0
    %1376 = vmatprep.mubr.bf16.mxu0 0
    %1377 = vmatmul.mubr.bf16.gmra.mxu0 %v1342
    %v1378 = vpop.f32.mrf.mxu0
    %v1379 = vadd.f32 %v1314, %v1378
    %v1380 = vpop.f32.mrf.mxu0
    %v1381 = vpop.f32.mrf.mxu0
    %v1382 = vadd.f32 %v1314, %v1381
    %v1383 = vpop.f32.mrf.mxu0
    %1384 = vdwg.mxu0
    %v1385 = vadd.f32 %v1379, %v1212
    %v1386 = vadd.f32 %v1382, %v1213
    %v1387 = vld [vmem:[%s14] sm:$0x1]
    %v1388 = vld [vmem:[%s15] sm:$0x1]
    %v1389 = vsel %vm62, %v1385, 0.0
    %1390 = vadd.xlane.f32.xlu0 %v1389
    %v1391 = vpop.xlane.xlu0 %1390
    %v1392 = vsel %vm62, %v1386, 0.0
    %1393 = vadd.xlane.f32.xlu0 %v1392
    %v1394 = vpop.xlane.xlu0 %1393
    %v1395 = vmul.f32 %v1391, %v69
    %v1396 = vmul.f32 %v1394, %v69
    %v1397 = vsub.f32 %v1385, %v1395
    %v1398 = vsub.f32 %v1386, %v1396
    %v1399 = vmul.f32 %v1397, %v1397
    %v1400 = vmul.f32 %v1398, %v1398
    %v1401 = vsel %vm62, %v1399, 0.0
    %1402 = vadd.xlane.f32.xlu0 %v1401
    %v1403 = vpop.xlane.xlu0 %1402
    %v1404 = vsel %vm62, %v1400, 0.0
    %1405 = vadd.xlane.f32.xlu0 %v1404
    %v1406 = vpop.xlane.xlu0 %1405
    %v1407 = vmul.f32 %v1403, %v69
    %v1408 = vmul.f32 %v1406, %v69
    %v1409 = vadd.f32 %v1407, 1e-12
    %v1410 = vadd.f32 %v1408, 1e-12
    %v1411 = vrsqrt.pop %v1409
    %v1412 = vrsqrt.pop %v1410
    %v1413 = vmul.f32 %v1397, %v1411
    %v1414 = vmul.f32 %v1398, %v1412
    %v1416 = vlaneseq
    %v1417 = vshrl.u32 %v1416, 7
    %v1418 = vsub.s32 0, %v1417
    %v1419 = vrot.slane %v1387, %v1418
    %v1421 = vmul.f32 %v1413, %v1419
    %v1422 = vmul.f32 %v1414, %v1419
    %v1424 = vlaneseq
    %v1425 = vshrl.u32 %v1424, 7
    %v1426 = vsub.s32 0, %v1425
    %v1427 = vrot.slane %v1388, %v1426
    %v1429 = vadd.f32 %v1421, %v1427
    %v1430 = vadd.f32 %v1422, %v1427
    %v1431 = vpack.c.bf16 %v1430, %v1429
    %s1432 = scalar_lea.vmem %s4, 16
    %v1433 = vld [vmem:[%s1432] sm:$0xf]
    %v1434 = vld [vmem:[%s1432 + $0x4] sm:$0xf]
    %v1435 = vld [vmem:[%s1432 + $0x8] sm:$0xf]
    %v1436 = vld [vmem:[%s1432 + $0xc] sm:$0xf]
    %s1437 = scalar_lea.vmem %s5, 1
    %v1438 = vld [vmem:[%s1437] sm:$0x1]
    %v1440 = vlaneseq
    %v1441 = vshrl.u32 %v1440, 7
    %v1442 = vsub.s32 0, %v1441
    %v1443 = vrot.slane %v1438, %v1442
    %v1449 = vunpack.c.l.b16 %v1433
    %v1450 = vunpack.c.l.b16 %v1434
    %v1451 = vunpack.c.l.b16 %v1435
    %v1452 = vunpack.c.l.b16 %v1436
    %v1453 = vpack.c.b16 %v1450, %v1449
    %v1454 = vpack.c.b16 %v1452, %v1451
    %v1458 = vsel %vm62, %v1431, 0
    %1460 = vmatprep.subr.bf16.mxu0 0
    %1461 = vmatpush1.bf16.msra.mxu0 0
    %1462 = vmatprep.subr.bf16.mxu0 0
    %1463 = vmatpush1.bf16.msra.mxu0 0
    %1464 = vmatprep.subr.bf16.mxu0 0
    %1465 = vmatpush1.bf16.msra.mxu0 0
    %1466 = vmatprep.subr.bf16.mxu0 0
    %1467 = vmatpush1.bf16.msra.mxu0 0
    %1468 = vmatprep.subr.bf16.mxu0 0
    %1469 = vmatpush1.bf16.msra.mxu0 0
    %1470 = vmatprep.subr.bf16.mxu0 0
    %1471 = vmatpush1.bf16.msra.mxu0 0
    %1472 = vmatprep.subr.bf16.mxu0 0
    %1473 = vmatpush1.bf16.msra.mxu0 %v1454
    %1474 = vmatprep.subr.bf16.mxu0 0
    %1475 = vmatpush1.bf16.msra.mxu0 %v1453
    %1476 = vmatprep.subr.bf16.mxu0 0
    %1477 = vmatpush2.bf16.msra.mxu0 0
    %1478 = vmatprep.subr.bf16.mxu0 0
    %1479 = vmatpush2.bf16.msra.mxu0 0
    %1480 = vmatprep.subr.bf16.mxu0 0
    %1481 = vmatpush2.bf16.msra.mxu0 0
    %1482 = vmatprep.subr.bf16.mxu0 0
    %1483 = vmatpush2.bf16.msra.mxu0 0
    %1484 = vmatprep.subr.bf16.mxu0 0
    %1485 = vmatpush2.bf16.msra.mxu0 0
    %1486 = vmatprep.subr.bf16.mxu0 0
    %1487 = vmatpush2.bf16.msra.mxu0 0
    %1488 = vmatprep.subr.bf16.mxu0 0
    %1489 = vmatpush2.bf16.msra.mxu0 0
    %1490 = vmatprep.subr.bf16.mxu0 0
    %1491 = vmatpush2.bf16.msra.mxu0 0
    %1492 = vmatprep.mubr.bf16.mxu0 0
    %1493 = vmatmul.mubr.bf16.gmra.mxu0 %v1458
    %v1494 = vpop.f32.mrf.mxu0
    %v1495 = vadd.f32 %v1443, %v1494
    %v1496 = vpop.f32.mrf.mxu0
    %v1497 = vpop.f32.mrf.mxu0
    %v1498 = vadd.f32 %v1443, %v1497
    %v1499 = vpop.f32.mrf.mxu0
    %1500 = vdwg.mxu0
    %v1501 = vpack.c.bf16 %v1498, %v1495
    %1503 = vrot.lane.b32.xlu0 %v1501, 96
    %v1504 = vpop.permute.xlu0 %1503
    %v1506 = vsel %vm182, %v1501, 0
    %v1509 = vsel %vm182, %v1504, 0
    %1511 = vmatprep.subr.bf16.mxu0 0
    %1512 = vmatpush1.bf16.xpose.msra.mxu0 0
    %1513 = vmatprep.subr.bf16.mxu0 0
    %1514 = vmatpush1.bf16.xpose.msra.mxu0 0
    %1515 = vmatprep.subr.bf16.mxu0 0
    %1516 = vmatpush1.bf16.xpose.msra.mxu0 0
    %1517 = vmatprep.subr.bf16.mxu0 0
    %1518 = vmatpush1.bf16.xpose.msra.mxu0 0
    %1519 = vmatprep.subr.bf16.mxu0 0
    %1520 = vmatpush1.bf16.xpose.msra.mxu0 0
    %1521 = vmatprep.subr.bf16.mxu0 0
    %1522 = vmatpush1.bf16.xpose.msra.mxu0 0
    %1523 = vmatprep.subr.bf16.mxu0 0
    %1524 = vmatpush1.bf16.xpose.msra.mxu0 0
    %1525 = vmatprep.subr.bf16.mxu0 0
    %1526 = vmatpush1.bf16.xpose.msra.mxu0 %v1509
    %1527 = vmatprep.subr.bf16.mxu0 0
    %1528 = vmatpush2.bf16.xpose.msra.mxu0 0
    %1529 = vmatprep.subr.bf16.mxu0 0
    %1530 = vmatpush2.bf16.xpose.msra.mxu0 0
    %1531 = vmatprep.subr.bf16.mxu0 0
    %1532 = vmatpush2.bf16.xpose.msra.mxu0 0
    %1533 = vmatprep.subr.bf16.mxu0 0
    %1534 = vmatpush2.bf16.xpose.msra.mxu0 0
    %1535 = vmatprep.subr.bf16.mxu0 0
    %1536 = vmatpush2.bf16.xpose.msra.mxu0 0
    %1537 = vmatprep.subr.bf16.mxu0 0
    %1538 = vmatpush2.bf16.xpose.msra.mxu0 0
    %1539 = vmatprep.subr.bf16.mxu0 0
    %1540 = vmatpush2.bf16.xpose.msra.mxu0 0
    %1541 = vmatprep.subr.bf16.mxu0 0
    %1542 = vmatpush2.bf16.xpose.msra.mxu0 0
    %1543 = vmatprep.mubr.bf16.mxu0 0
    %1544 = vmatmul.mubr.bf16.gmra.mxu0 %v1506
    %v1545 = vpop.f32.mrf.mxu0
    %v1546 = vadd.f32 %v178, %v1545
    %v1547 = vpop.f32.mrf.mxu0
    %v1548 = vpop.f32.mrf.mxu0
    %v1549 = vpop.f32.mrf.mxu0
    %1550 = vdwg.mxu0
    %v1551 = vsel %vm182, %v1546, -inf
    %1552 = vmax.xlane.f32.xlu0 %v1551
    %v1553 = vpop.xlane.xlu0 %1552
    %v1554 = vsub.f32 %v1546, %v1553
    %v1555 = vmul.f32 %v1554, 1.442695
    %v1556 = vpow.pop %v1555
    %v1557 = vsel %vm182, %v1556, 0.0
    %1558 = vadd.xlane.f32.xlu0 %v1557
    %v1559 = vpop.xlane.xlu0 %1558
    %v1560 = vrcp.pop %v1559
    %v1561 = vmul.f32 %v1556, %v1560
    %v1562 = vpack.c.bf16 %v1561, %v1561
    %1563 = vrot.lane.b32.xlu0 %v1501, 64
    %v1564 = vpop.permute.xlu0 %1563
    %v1566 = vsel %vm182, %v1562, 0
    %v1569 = vsel %vm246, %v1564, 0
    %1571 = vmatprep.subr.bf16.mxu0 0
    %1572 = vmatpush1.bf16.msra.mxu0 0
    %1573 = vmatprep.subr.bf16.mxu0 0
    %1574 = vmatpush1.bf16.msra.mxu0 0
    %1575 = vmatprep.subr.bf16.mxu0 0
    %1576 = vmatpush1.bf16.msra.mxu0 0
    %1577 = vmatprep.subr.bf16.mxu0 0
    %1578 = vmatpush1.bf16.msra.mxu0 0
    %1579 = vmatprep.subr.bf16.mxu0 0
    %1580 = vmatpush1.bf16.msra.mxu0 0
    %1581 = vmatprep.subr.bf16.mxu0 0
    %1582 = vmatpush1.bf16.msra.mxu0 0
    %1583 = vmatprep.subr.bf16.mxu0 0
    %1584 = vmatpush1.bf16.msra.mxu0 0
    %1585 = vmatprep.subr.bf16.mxu0 0
    %1586 = vmatpush1.bf16.msra.mxu0 %v1569
    %1587 = vmatprep.subr.bf16.mxu0 0
    %1588 = vmatpush2.bf16.msra.mxu0 0
    %1589 = vmatprep.subr.bf16.mxu0 0
    %1590 = vmatpush2.bf16.msra.mxu0 0
    %1591 = vmatprep.subr.bf16.mxu0 0
    %1592 = vmatpush2.bf16.msra.mxu0 0
    %1593 = vmatprep.subr.bf16.mxu0 0
    %1594 = vmatpush2.bf16.msra.mxu0 0
    %1595 = vmatprep.subr.bf16.mxu0 0
    %1596 = vmatpush2.bf16.msra.mxu0 0
    %1597 = vmatprep.subr.bf16.mxu0 0
    %1598 = vmatpush2.bf16.msra.mxu0 0
    %1599 = vmatprep.subr.bf16.mxu0 0
    %1600 = vmatpush2.bf16.msra.mxu0 0
    %1601 = vmatprep.subr.bf16.mxu0 0
    %1602 = vmatpush2.bf16.msra.mxu0 0
    %1603 = vmatprep.mubr.bf16.mxu0 0
    %1604 = vmatmul.mubr.bf16.gmra.mxu0 %v1566
    %v1605 = vpop.f32.mrf.mxu0
    %v1606 = vadd.f32 0.0, %v1605
    %v1607 = vpop.f32.mrf.mxu0
    %v1608 = vpop.f32.mrf.mxu0
    %v1609 = vpop.f32.mrf.mxu0
    %1610 = vdwg.mxu0
    %1611 = vst.msk [vmem:[#allocation2] sm:$0xff] %vm182, %v1606
    %1612 = vrot.lane.b32.xlu0 %v1501, 120
    %v1613 = vpop.permute.xlu0 %1612
    %1614 = vrot.lane.b32.xlu0 %v1501, 88
    %v1615 = vpop.permute.xlu0 %1614
    %v1617 = vsel %vm182, %v1613, 0
    %v1620 = vsel %vm182, %v1615, 0
    %1622 = vmatprep.subr.bf16.mxu0 0
    %1623 = vmatpush1.bf16.xpose.msra.mxu0 0
    %1624 = vmatprep.subr.bf16.mxu0 0
    %1625 = vmatpush1.bf16.xpose.msra.mxu0 0
    %1626 = vmatprep.subr.bf16.mxu0 0
    %1627 = vmatpush1.bf16.xpose.msra.mxu0 0
    %1628 = vmatprep.subr.bf16.mxu0 0
    %1629 = vmatpush1.bf16.xpose.msra.mxu0 0
    %1630 = vmatprep.subr.bf16.mxu0 0
    %1631 = vmatpush1.bf16.xpose.msra.mxu0 0
    %1632 = vmatprep.subr.bf16.mxu0 0
    %1633 = vmatpush1.bf16.xpose.msra.mxu0 0
    %1634 = vmatprep.subr.bf16.mxu0 0
    %1635 = vmatpush1.bf16.xpose.msra.mxu0 0
    %1636 = vmatprep.subr.bf16.mxu0 0
    %1637 = vmatpush1.bf16.xpose.msra.mxu0 %v1620
    %1638 = vmatprep.subr.bf16.mxu0 0
    %1639 = vmatpush2.bf16.xpose.msra.mxu0 0
    %1640 = vmatprep.subr.bf16.mxu0 0
    %1641 = vmatpush2.bf16.xpose.msra.mxu0 0
    %1642 = vmatprep.subr.bf16.mxu0 0
    %1643 = vmatpush2.bf16.xpose.msra.mxu0 0
    %1644 = vmatprep.subr.bf16.mxu0 0
    %1645 = vmatpush2.bf16.xpose.msra.mxu0 0
    %1646 = vmatprep.subr.bf16.mxu0 0
    %1647 = vmatpush2.bf16.xpose.msra.mxu0 0
    %1648 = vmatprep.subr.bf16.mxu0 0
    %1649 = vmatpush2.bf16.xpose.msra.mxu0 0
    %1650 = vmatprep.subr.bf16.mxu0 0
    %1651 = vmatpush2.bf16.xpose.msra.mxu0 0
    %1652 = vmatprep.subr.bf16.mxu0 0
    %1653 = vmatpush2.bf16.xpose.msra.mxu0 0
    %1654 = vmatprep.mubr.bf16.mxu0 0
    %1655 = vmatmul.mubr.bf16.gmra.mxu0 %v1617
    %v1656 = vpop.f32.mrf.mxu0
    %v1657 = vadd.f32 %v178, %v1656
    %v1658 = vpop.f32.mrf.mxu0
    %v1659 = vpop.f32.mrf.mxu0
    %v1660 = vpop.f32.mrf.mxu0
    %1661 = vdwg.mxu0
    %v1662 = vsel %vm182, %v1657, -inf
    %1663 = vmax.xlane.f32.xlu0 %v1662
    %v1664 = vpop.xlane.xlu0 %1663
    %v1665 = vsub.f32 %v1657, %v1664
    %v1666 = vmul.f32 %v1665, 1.442695
    %v1667 = vpow.pop %v1666
    %v1668 = vsel %vm182, %v1667, 0.0
    %1669 = vadd.xlane.f32.xlu0 %v1668
    %v1670 = vpop.xlane.xlu0 %1669
    %v1671 = vrcp.pop %v1670
    %v1672 = vmul.f32 %v1667, %v1671
    %v1673 = vpack.c.bf16 %v1672, %v1672
    %1674 = vrot.lane.b32.xlu0 %v1501, 56
    %v1675 = vpop.permute.xlu0 %1674
    %v1677 = vsel %vm182, %v1673, 0
    %v1680 = vsel %vm246, %v1675, 0
    %1682 = vmatprep.subr.bf16.mxu0 0
    %1683 = vmatpush1.bf16.msra.mxu0 0
    %1684 = vmatprep.subr.bf16.mxu0 0
    %1685 = vmatpush1.bf16.msra.mxu0 0
    %1686 = vmatprep.subr.bf16.mxu0 0
    %1687 = vmatpush1.bf16.msra.mxu0 0
    %1688 = vmatprep.subr.bf16.mxu0 0
    %1689 = vmatpush1.bf16.msra.mxu0 0
    %1690 = vmatprep.subr.bf16.mxu0 0
    %1691 = vmatpush1.bf16.msra.mxu0 0
    %1692 = vmatprep.subr.bf16.mxu0 0
    %1693 = vmatpush1.bf16.msra.mxu0 0
    %1694 = vmatprep.subr.bf16.mxu0 0
    %1695 = vmatpush1.bf16.msra.mxu0 0
    %1696 = vmatprep.subr.bf16.mxu0 0
    %1697 = vmatpush1.bf16.msra.mxu0 %v1680
    %1698 = vmatprep.subr.bf16.mxu0 0
    %1699 = vmatpush2.bf16.msra.mxu0 0
    %1700 = vmatprep.subr.bf16.mxu0 0
    %1701 = vmatpush2.bf16.msra.mxu0 0
    %1702 = vmatprep.subr.bf16.mxu0 0
    %1703 = vmatpush2.bf16.msra.mxu0 0
    %1704 = vmatprep.subr.bf16.mxu0 0
    %1705 = vmatpush2.bf16.msra.mxu0 0
    %1706 = vmatprep.subr.bf16.mxu0 0
    %1707 = vmatpush2.bf16.msra.mxu0 0
    %1708 = vmatprep.subr.bf16.mxu0 0
    %1709 = vmatpush2.bf16.msra.mxu0 0
    %1710 = vmatprep.subr.bf16.mxu0 0
    %1711 = vmatpush2.bf16.msra.mxu0 0
    %1712 = vmatprep.subr.bf16.mxu0 0
    %1713 = vmatpush2.bf16.msra.mxu0 0
    %1714 = vmatprep.mubr.bf16.mxu0 0
    %1715 = vmatmul.mubr.bf16.gmra.mxu0 %v1677
    %v1716 = vpop.f32.mrf.mxu0
    %v1717 = vadd.f32 0.0, %v1716
    %v1718 = vpop.f32.mrf.mxu0
    %v1719 = vpop.f32.mrf.mxu0
    %v1720 = vpop.f32.mrf.mxu0
    %1721 = vdwg.mxu0
    %1723 = vrot.lane.b32.xlu0 %v1717, 8
    %v1724 = vpop.permute.xlu0 %1723
    %1726 = vst.msk [vmem:[#allocation2] sm:$0xff] %vm405, %v1724
    %1727 = vrot.lane.b32.xlu0 %v1501, 112
    %v1728 = vpop.permute.xlu0 %1727
    %1729 = vrot.lane.b32.xlu0 %v1501, 80
    %v1730 = vpop.permute.xlu0 %1729
    %v1732 = vsel %vm182, %v1728, 0
    %v1735 = vsel %vm182, %v1730, 0
    %1737 = vmatprep.subr.bf16.mxu0 0
    %1738 = vmatpush1.bf16.xpose.msra.mxu0 0
    %1739 = vmatprep.subr.bf16.mxu0 0
    %1740 = vmatpush1.bf16.xpose.msra.mxu0 0
    %1741 = vmatprep.subr.bf16.mxu0 0
    %1742 = vmatpush1.bf16.xpose.msra.mxu0 0
    %1743 = vmatprep.subr.bf16.mxu0 0
    %1744 = vmatpush1.bf16.xpose.msra.mxu0 0
    %1745 = vmatprep.subr.bf16.mxu0 0
    %1746 = vmatpush1.bf16.xpose.msra.mxu0 0
    %1747 = vmatprep.subr.bf16.mxu0 0
    %1748 = vmatpush1.bf16.xpose.msra.mxu0 0
    %1749 = vmatprep.subr.bf16.mxu0 0
    %1750 = vmatpush1.bf16.xpose.msra.mxu0 0
    %1751 = vmatprep.subr.bf16.mxu0 0
    %1752 = vmatpush1.bf16.xpose.msra.mxu0 %v1735
    %1753 = vmatprep.subr.bf16.mxu0 0
    %1754 = vmatpush2.bf16.xpose.msra.mxu0 0
    %1755 = vmatprep.subr.bf16.mxu0 0
    %1756 = vmatpush2.bf16.xpose.msra.mxu0 0
    %1757 = vmatprep.subr.bf16.mxu0 0
    %1758 = vmatpush2.bf16.xpose.msra.mxu0 0
    %1759 = vmatprep.subr.bf16.mxu0 0
    %1760 = vmatpush2.bf16.xpose.msra.mxu0 0
    %1761 = vmatprep.subr.bf16.mxu0 0
    %1762 = vmatpush2.bf16.xpose.msra.mxu0 0
    %1763 = vmatprep.subr.bf16.mxu0 0
    %1764 = vmatpush2.bf16.xpose.msra.mxu0 0
    %1765 = vmatprep.subr.bf16.mxu0 0
    %1766 = vmatpush2.bf16.xpose.msra.mxu0 0
    %1767 = vmatprep.subr.bf16.mxu0 0
    %1768 = vmatpush2.bf16.xpose.msra.mxu0 0
    %1769 = vmatprep.mubr.bf16.mxu0 0
    %1770 = vmatmul.mubr.bf16.gmra.mxu0 %v1732
    %v1771 = vpop.f32.mrf.mxu0
    %v1772 = vadd.f32 %v178, %v1771
    %v1773 = vpop.f32.mrf.mxu0
    %v1774 = vpop.f32.mrf.mxu0
    %v1775 = vpop.f32.mrf.mxu0
    %1776 = vdwg.mxu0
    %v1777 = vsel %vm182, %v1772, -inf
    %1778 = vmax.xlane.f32.xlu0 %v1777
    %v1779 = vpop.xlane.xlu0 %1778
    %v1780 = vsub.f32 %v1772, %v1779
    %v1781 = vmul.f32 %v1780, 1.442695
    %v1782 = vpow.pop %v1781
    %v1783 = vsel %vm182, %v1782, 0.0
    %1784 = vadd.xlane.f32.xlu0 %v1783
    %v1785 = vpop.xlane.xlu0 %1784
    %v1786 = vrcp.pop %v1785
    %v1787 = vmul.f32 %v1782, %v1786
    %v1788 = vpack.c.bf16 %v1787, %v1787
    %1789 = vrot.lane.b32.xlu0 %v1501, 48
    %v1790 = vpop.permute.xlu0 %1789
    %v1792 = vsel %vm182, %v1788, 0
    %v1795 = vsel %vm246, %v1790, 0
    %1797 = vmatprep.subr.bf16.mxu0 0
    %1798 = vmatpush1.bf16.msra.mxu0 0
    %1799 = vmatprep.subr.bf16.mxu0 0
    %1800 = vmatpush1.bf16.msra.mxu0 0
    %1801 = vmatprep.subr.bf16.mxu0 0
    %1802 = vmatpush1.bf16.msra.mxu0 0
    %1803 = vmatprep.subr.bf16.mxu0 0
    %1804 = vmatpush1.bf16.msra.mxu0 0
    %1805 = vmatprep.subr.bf16.mxu0 0
    %1806 = vmatpush1.bf16.msra.mxu0 0
    %1807 = vmatprep.subr.bf16.mxu0 0
    %1808 = vmatpush1.bf16.msra.mxu0 0
    %1809 = vmatprep.subr.bf16.mxu0 0
    %1810 = vmatpush1.bf16.msra.mxu0 0
    %1811 = vmatprep.subr.bf16.mxu0 0
    %1812 = vmatpush1.bf16.msra.mxu0 %v1795
    %1813 = vmatprep.subr.bf16.mxu0 0
    %1814 = vmatpush2.bf16.msra.mxu0 0
    %1815 = vmatprep.subr.bf16.mxu0 0
    %1816 = vmatpush2.bf16.msra.mxu0 0
    %1817 = vmatprep.subr.bf16.mxu0 0
    %1818 = vmatpush2.bf16.msra.mxu0 0
    %1819 = vmatprep.subr.bf16.mxu0 0
    %1820 = vmatpush2.bf16.msra.mxu0 0
    %1821 = vmatprep.subr.bf16.mxu0 0
    %1822 = vmatpush2.bf16.msra.mxu0 0
    %1823 = vmatprep.subr.bf16.mxu0 0
    %1824 = vmatpush2.bf16.msra.mxu0 0
    %1825 = vmatprep.subr.bf16.mxu0 0
    %1826 = vmatpush2.bf16.msra.mxu0 0
    %1827 = vmatprep.subr.bf16.mxu0 0
    %1828 = vmatpush2.bf16.msra.mxu0 0
    %1829 = vmatprep.mubr.bf16.mxu0 0
    %1830 = vmatmul.mubr.bf16.gmra.mxu0 %v1792
    %v1831 = vpop.f32.mrf.mxu0
    %v1832 = vadd.f32 0.0, %v1831
    %v1833 = vpop.f32.mrf.mxu0
    %v1834 = vpop.f32.mrf.mxu0
    %v1835 = vpop.f32.mrf.mxu0
    %1836 = vdwg.mxu0
    %1838 = vrot.lane.b32.xlu0 %v1832, 16
    %v1839 = vpop.permute.xlu0 %1838
    %1841 = vst.msk [vmem:[#allocation2] sm:$0xff] %vm521, %v1839
    %1842 = vrot.lane.b32.xlu0 %v1501, 104
    %v1843 = vpop.permute.xlu0 %1842
    %1844 = vrot.lane.b32.xlu0 %v1501, 72
    %v1845 = vpop.permute.xlu0 %1844
    %v1847 = vsel %vm182, %v1843, 0
    %v1850 = vsel %vm182, %v1845, 0
    %1852 = vmatprep.subr.bf16.mxu0 0
    %1853 = vmatpush1.bf16.xpose.msra.mxu0 0
    %1854 = vmatprep.subr.bf16.mxu0 0
    %1855 = vmatpush1.bf16.xpose.msra.mxu0 0
    %1856 = vmatprep.subr.bf16.mxu0 0
    %1857 = vmatpush1.bf16.xpose.msra.mxu0 0
    %1858 = vmatprep.subr.bf16.mxu0 0
    %1859 = vmatpush1.bf16.xpose.msra.mxu0 0
    %1860 = vmatprep.subr.bf16.mxu0 0
    %1861 = vmatpush1.bf16.xpose.msra.mxu0 0
    %1862 = vmatprep.subr.bf16.mxu0 0
    %1863 = vmatpush1.bf16.xpose.msra.mxu0 0
    %1864 = vmatprep.subr.bf16.mxu0 0
    %1865 = vmatpush1.bf16.xpose.msra.mxu0 0
    %1866 = vmatprep.subr.bf16.mxu0 0
    %1867 = vmatpush1.bf16.xpose.msra.mxu0 %v1850
    %1868 = vmatprep.subr.bf16.mxu0 0
    %1869 = vmatpush2.bf16.xpose.msra.mxu0 0
    %1870 = vmatprep.subr.bf16.mxu0 0
    %1871 = vmatpush2.bf16.xpose.msra.mxu0 0
    %1872 = vmatprep.subr.bf16.mxu0 0
    %1873 = vmatpush2.bf16.xpose.msra.mxu0 0
    %1874 = vmatprep.subr.bf16.mxu0 0
    %1875 = vmatpush2.bf16.xpose.msra.mxu0 0
    %1876 = vmatprep.subr.bf16.mxu0 0
    %1877 = vmatpush2.bf16.xpose.msra.mxu0 0
    %1878 = vmatprep.subr.bf16.mxu0 0
    %1879 = vmatpush2.bf16.xpose.msra.mxu0 0
    %1880 = vmatprep.subr.bf16.mxu0 0
    %1881 = vmatpush2.bf16.xpose.msra.mxu0 0
    %1882 = vmatprep.subr.bf16.mxu0 0
    %1883 = vmatpush2.bf16.xpose.msra.mxu0 0
    %1884 = vmatprep.mubr.bf16.mxu0 0
    %1885 = vmatmul.mubr.bf16.gmra.mxu0 %v1847
    %v1886 = vpop.f32.mrf.mxu0
    %v1887 = vadd.f32 %v178, %v1886
    %v1888 = vpop.f32.mrf.mxu0
    %v1889 = vpop.f32.mrf.mxu0
    %v1890 = vpop.f32.mrf.mxu0
    %1891 = vdwg.mxu0
    %v1892 = vsel %vm182, %v1887, -inf
    %1893 = vmax.xlane.f32.xlu0 %v1892
    %v1894 = vpop.xlane.xlu0 %1893
    %v1895 = vsub.f32 %v1887, %v1894
    %v1896 = vmul.f32 %v1895, 1.442695
    %v1897 = vpow.pop %v1896
    %v1898 = vsel %vm182, %v1897, 0.0
    %1899 = vadd.xlane.f32.xlu0 %v1898
    %v1900 = vpop.xlane.xlu0 %1899
    %v1901 = vrcp.pop %v1900
    %v1902 = vmul.f32 %v1897, %v1901
    %v1903 = vpack.c.bf16 %v1902, %v1902
    %1904 = vrot.lane.b32.xlu0 %v1501, 40
    %v1905 = vpop.permute.xlu0 %1904
    %v1907 = vsel %vm182, %v1903, 0
    %v1910 = vsel %vm246, %v1905, 0
    %1912 = vmatprep.subr.bf16.mxu0 0
    %1913 = vmatpush1.bf16.msra.mxu0 0
    %1914 = vmatprep.subr.bf16.mxu0 0
    %1915 = vmatpush1.bf16.msra.mxu0 0
    %1916 = vmatprep.subr.bf16.mxu0 0
    %1917 = vmatpush1.bf16.msra.mxu0 0
    %1918 = vmatprep.subr.bf16.mxu0 0
    %1919 = vmatpush1.bf16.msra.mxu0 0
    %1920 = vmatprep.subr.bf16.mxu0 0
    %1921 = vmatpush1.bf16.msra.mxu0 0
    %1922 = vmatprep.subr.bf16.mxu0 0
    %1923 = vmatpush1.bf16.msra.mxu0 0
    %1924 = vmatprep.subr.bf16.mxu0 0
    %1925 = vmatpush1.bf16.msra.mxu0 0
    %1926 = vmatprep.subr.bf16.mxu0 0
    %1927 = vmatpush1.bf16.msra.mxu0 %v1910
    %1928 = vmatprep.subr.bf16.mxu0 0
    %1929 = vmatpush2.bf16.msra.mxu0 0
    %1930 = vmatprep.subr.bf16.mxu0 0
    %1931 = vmatpush2.bf16.msra.mxu0 0
    %1932 = vmatprep.subr.bf16.mxu0 0
    %1933 = vmatpush2.bf16.msra.mxu0 0
    %1934 = vmatprep.subr.bf16.mxu0 0
    %1935 = vmatpush2.bf16.msra.mxu0 0
    %1936 = vmatprep.subr.bf16.mxu0 0
    %1937 = vmatpush2.bf16.msra.mxu0 0
    %1938 = vmatprep.subr.bf16.mxu0 0
    %1939 = vmatpush2.bf16.msra.mxu0 0
    %1940 = vmatprep.subr.bf16.mxu0 0
    %1941 = vmatpush2.bf16.msra.mxu0 0
    %1942 = vmatprep.subr.bf16.mxu0 0
    %1943 = vmatpush2.bf16.msra.mxu0 0
    %1944 = vmatprep.mubr.bf16.mxu0 0
    %1945 = vmatmul.mubr.bf16.gmra.mxu0 %v1907
    %v1946 = vpop.f32.mrf.mxu0
    %v1947 = vadd.f32 0.0, %v1946
    %v1948 = vpop.f32.mrf.mxu0
    %v1949 = vpop.f32.mrf.mxu0
    %v1950 = vpop.f32.mrf.mxu0
    %1951 = vdwg.mxu0
    %1953 = vrot.lane.b32.xlu0 %v1947, 24
    %v1954 = vpop.permute.xlu0 %1953
    %1956 = vst.msk [vmem:[#allocation2] sm:$0xff] %vm637, %v1954
    %v1957 = vrot.slane %v1501, 4
    %1958 = vrot.lane.b32.xlu0 %v1957, 96
    %v1959 = vpop.permute.xlu0 %1958
    %v1961 = vsel %vm182, %v1957, 0
    %v1964 = vsel %vm182, %v1959, 0
    %1966 = vmatprep.subr.bf16.mxu0 0
    %1967 = vmatpush1.bf16.xpose.msra.mxu0 0
    %1968 = vmatprep.subr.bf16.mxu0 0
    %1969 = vmatpush1.bf16.xpose.msra.mxu0 0
    %1970 = vmatprep.subr.bf16.mxu0 0
    %1971 = vmatpush1.bf16.xpose.msra.mxu0 0
    %1972 = vmatprep.subr.bf16.mxu0 0
    %1973 = vmatpush1.bf16.xpose.msra.mxu0 0
    %1974 = vmatprep.subr.bf16.mxu0 0
    %1975 = vmatpush1.bf16.xpose.msra.mxu0 0
    %1976 = vmatprep.subr.bf16.mxu0 0
    %1977 = vmatpush1.bf16.xpose.msra.mxu0 0
    %1978 = vmatprep.subr.bf16.mxu0 0
    %1979 = vmatpush1.bf16.xpose.msra.mxu0 0
    %1980 = vmatprep.subr.bf16.mxu0 0
    %1981 = vmatpush1.bf16.xpose.msra.mxu0 %v1964
    %1982 = vmatprep.subr.bf16.mxu0 0
    %1983 = vmatpush2.bf16.xpose.msra.mxu0 0
    %1984 = vmatprep.subr.bf16.mxu0 0
    %1985 = vmatpush2.bf16.xpose.msra.mxu0 0
    %1986 = vmatprep.subr.bf16.mxu0 0
    %1987 = vmatpush2.bf16.xpose.msra.mxu0 0
    %1988 = vmatprep.subr.bf16.mxu0 0
    %1989 = vmatpush2.bf16.xpose.msra.mxu0 0
    %1990 = vmatprep.subr.bf16.mxu0 0
    %1991 = vmatpush2.bf16.xpose.msra.mxu0 0
    %1992 = vmatprep.subr.bf16.mxu0 0
    %1993 = vmatpush2.bf16.xpose.msra.mxu0 0
    %1994 = vmatprep.subr.bf16.mxu0 0
    %1995 = vmatpush2.bf16.xpose.msra.mxu0 0
    %1996 = vmatprep.subr.bf16.mxu0 0
    %1997 = vmatpush2.bf16.xpose.msra.mxu0 0
    %1998 = vmatprep.mubr.bf16.mxu0 0
    %1999 = vmatmul.mubr.bf16.gmra.mxu0 %v1961
    %v2000 = vpop.f32.mrf.mxu0
    %v2001 = vadd.f32 %v642, %v2000
    %v2002 = vpop.f32.mrf.mxu0
    %v2003 = vpop.f32.mrf.mxu0
    %v2004 = vpop.f32.mrf.mxu0
    %2005 = vdwg.mxu0
    %v2006 = vsel %vm182, %v2001, -inf
    %2007 = vmax.xlane.f32.xlu0 %v2006
    %v2008 = vpop.xlane.xlu0 %2007
    %v2009 = vsub.f32 %v2001, %v2008
    %v2010 = vmul.f32 %v2009, 1.442695
    %v2011 = vpow.pop %v2010
    %v2012 = vsel %vm182, %v2011, 0.0
    %2013 = vadd.xlane.f32.xlu0 %v2012
    %v2014 = vpop.xlane.xlu0 %2013
    %v2015 = vrcp.pop %v2014
    %v2016 = vmul.f32 %v2011, %v2015
    %v2017 = vpack.c.bf16 %v2016, %v2016
    %2018 = vrot.lane.b32.xlu0 %v1957, 64
    %v2019 = vpop.permute.xlu0 %2018
    %v2021 = vsel %vm182, %v2017, 0
    %v2024 = vsel %vm246, %v2019, 0
    %2026 = vmatprep.subr.bf16.mxu0 0
    %2027 = vmatpush1.bf16.msra.mxu0 0
    %2028 = vmatprep.subr.bf16.mxu0 0
    %2029 = vmatpush1.bf16.msra.mxu0 0
    %2030 = vmatprep.subr.bf16.mxu0 0
    %2031 = vmatpush1.bf16.msra.mxu0 0
    %2032 = vmatprep.subr.bf16.mxu0 0
    %2033 = vmatpush1.bf16.msra.mxu0 0
    %2034 = vmatprep.subr.bf16.mxu0 0
    %2035 = vmatpush1.bf16.msra.mxu0 0
    %2036 = vmatprep.subr.bf16.mxu0 0
    %2037 = vmatpush1.bf16.msra.mxu0 0
    %2038 = vmatprep.subr.bf16.mxu0 0
    %2039 = vmatpush1.bf16.msra.mxu0 0
    %2040 = vmatprep.subr.bf16.mxu0 0
    %2041 = vmatpush1.bf16.msra.mxu0 %v2024
    %2042 = vmatprep.subr.bf16.mxu0 0
    %2043 = vmatpush2.bf16.msra.mxu0 0
    %2044 = vmatprep.subr.bf16.mxu0 0
    %2045 = vmatpush2.bf16.msra.mxu0 0
    %2046 = vmatprep.subr.bf16.mxu0 0
    %2047 = vmatpush2.bf16.msra.mxu0 0
    %2048 = vmatprep.subr.bf16.mxu0 0
    %2049 = vmatpush2.bf16.msra.mxu0 0
    %2050 = vmatprep.subr.bf16.mxu0 0
    %2051 = vmatpush2.bf16.msra.mxu0 0
    %2052 = vmatprep.subr.bf16.mxu0 0
    %2053 = vmatpush2.bf16.msra.mxu0 0
    %2054 = vmatprep.subr.bf16.mxu0 0
    %2055 = vmatpush2.bf16.msra.mxu0 0
    %2056 = vmatprep.subr.bf16.mxu0 0
    %2057 = vmatpush2.bf16.msra.mxu0 0
    %2058 = vmatprep.mubr.bf16.mxu0 0
    %2059 = vmatmul.mubr.bf16.gmra.mxu0 %v2021
    %v2060 = vpop.f32.mrf.mxu0
    %v2061 = vadd.f32 0.0, %v2060
    %v2062 = vpop.f32.mrf.mxu0
    %v2063 = vpop.f32.mrf.mxu0
    %v2064 = vpop.f32.mrf.mxu0
    %2065 = vdwg.mxu0
    %2066 = vst.msk [vmem:[#allocation2 + $0x8] sm:$0xff] %vm182, %v2061
    %2067 = vrot.lane.b32.xlu0 %v1957, 120
    %v2068 = vpop.permute.xlu0 %2067
    %2069 = vrot.lane.b32.xlu0 %v1957, 88
    %v2070 = vpop.permute.xlu0 %2069
    %v2072 = vsel %vm182, %v2068, 0
    %v2075 = vsel %vm182, %v2070, 0
    %2077 = vmatprep.subr.bf16.mxu0 0
    %2078 = vmatpush1.bf16.xpose.msra.mxu0 0
    %2079 = vmatprep.subr.bf16.mxu0 0
    %2080 = vmatpush1.bf16.xpose.msra.mxu0 0
    %2081 = vmatprep.subr.bf16.mxu0 0
    %2082 = vmatpush1.bf16.xpose.msra.mxu0 0
    %2083 = vmatprep.subr.bf16.mxu0 0
    %2084 = vmatpush1.bf16.xpose.msra.mxu0 0
    %2085 = vmatprep.subr.bf16.mxu0 0
    %2086 = vmatpush1.bf16.xpose.msra.mxu0 0
    %2087 = vmatprep.subr.bf16.mxu0 0
    %2088 = vmatpush1.bf16.xpose.msra.mxu0 0
    %2089 = vmatprep.subr.bf16.mxu0 0
    %2090 = vmatpush1.bf16.xpose.msra.mxu0 0
    %2091 = vmatprep.subr.bf16.mxu0 0
    %2092 = vmatpush1.bf16.xpose.msra.mxu0 %v2075
    %2093 = vmatprep.subr.bf16.mxu0 0
    %2094 = vmatpush2.bf16.xpose.msra.mxu0 0
    %2095 = vmatprep.subr.bf16.mxu0 0
    %2096 = vmatpush2.bf16.xpose.msra.mxu0 0
    %2097 = vmatprep.subr.bf16.mxu0 0
    %2098 = vmatpush2.bf16.xpose.msra.mxu0 0
    %2099 = vmatprep.subr.bf16.mxu0 0
    %2100 = vmatpush2.bf16.xpose.msra.mxu0 0
    %2101 = vmatprep.subr.bf16.mxu0 0
    %2102 = vmatpush2.bf16.xpose.msra.mxu0 0
    %2103 = vmatprep.subr.bf16.mxu0 0
    %2104 = vmatpush2.bf16.xpose.msra.mxu0 0
    %2105 = vmatprep.subr.bf16.mxu0 0
    %2106 = vmatpush2.bf16.xpose.msra.mxu0 0
    %2107 = vmatprep.subr.bf16.mxu0 0
    %2108 = vmatpush2.bf16.xpose.msra.mxu0 0
    %2109 = vmatprep.mubr.bf16.mxu0 0
    %2110 = vmatmul.mubr.bf16.gmra.mxu0 %v2072
    %v2111 = vpop.f32.mrf.mxu0
    %v2112 = vadd.f32 %v642, %v2111
    %v2113 = vpop.f32.mrf.mxu0
    %v2114 = vpop.f32.mrf.mxu0
    %v2115 = vpop.f32.mrf.mxu0
    %2116 = vdwg.mxu0
    %v2117 = vsel %vm182, %v2112, -inf
    %2118 = vmax.xlane.f32.xlu0 %v2117
    %v2119 = vpop.xlane.xlu0 %2118
    %v2120 = vsub.f32 %v2112, %v2119
    %v2121 = vmul.f32 %v2120, 1.442695
    %v2122 = vpow.pop %v2121
    %v2123 = vsel %vm182, %v2122, 0.0
    %2124 = vadd.xlane.f32.xlu0 %v2123
    %v2125 = vpop.xlane.xlu0 %2124
    %v2126 = vrcp.pop %v2125
    %v2127 = vmul.f32 %v2122, %v2126
    %v2128 = vpack.c.bf16 %v2127, %v2127
    %2129 = vrot.lane.b32.xlu0 %v1957, 56
    %v2130 = vpop.permute.xlu0 %2129
    %v2132 = vsel %vm182, %v2128, 0
    %v2135 = vsel %vm246, %v2130, 0
    %2137 = vmatprep.subr.bf16.mxu0 0
    %2138 = vmatpush1.bf16.msra.mxu0 0
    %2139 = vmatprep.subr.bf16.mxu0 0
    %2140 = vmatpush1.bf16.msra.mxu0 0
    %2141 = vmatprep.subr.bf16.mxu0 0
    %2142 = vmatpush1.bf16.msra.mxu0 0
    %2143 = vmatprep.subr.bf16.mxu0 0
    %2144 = vmatpush1.bf16.msra.mxu0 0
    %2145 = vmatprep.subr.bf16.mxu0 0
    %2146 = vmatpush1.bf16.msra.mxu0 0
    %2147 = vmatprep.subr.bf16.mxu0 0
    %2148 = vmatpush1.bf16.msra.mxu0 0
    %2149 = vmatprep.subr.bf16.mxu0 0
    %2150 = vmatpush1.bf16.msra.mxu0 0
    %2151 = vmatprep.subr.bf16.mxu0 0
    %2152 = vmatpush1.bf16.msra.mxu0 %v2135
    %2153 = vmatprep.subr.bf16.mxu0 0
    %2154 = vmatpush2.bf16.msra.mxu0 0
    %2155 = vmatprep.subr.bf16.mxu0 0
    %2156 = vmatpush2.bf16.msra.mxu0 0
    %2157 = vmatprep.subr.bf16.mxu0 0
    %2158 = vmatpush2.bf16.msra.mxu0 0
    %2159 = vmatprep.subr.bf16.mxu0 0
    %2160 = vmatpush2.bf16.msra.mxu0 0
    %2161 = vmatprep.subr.bf16.mxu0 0
    %2162 = vmatpush2.bf16.msra.mxu0 0
    %2163 = vmatprep.subr.bf16.mxu0 0
    %2164 = vmatpush2.bf16.msra.mxu0 0
    %2165 = vmatprep.subr.bf16.mxu0 0
    %2166 = vmatpush2.bf16.msra.mxu0 0
    %2167 = vmatprep.subr.bf16.mxu0 0
    %2168 = vmatpush2.bf16.msra.mxu0 0
    %2169 = vmatprep.mubr.bf16.mxu0 0
    %2170 = vmatmul.mubr.bf16.gmra.mxu0 %v2132
    %v2171 = vpop.f32.mrf.mxu0
    %v2172 = vadd.f32 0.0, %v2171
    %v2173 = vpop.f32.mrf.mxu0
    %v2174 = vpop.f32.mrf.mxu0
    %v2175 = vpop.f32.mrf.mxu0
    %2176 = vdwg.mxu0
    %2178 = vrot.lane.b32.xlu0 %v2172, 8
    %v2179 = vpop.permute.xlu0 %2178
    %2181 = vst.msk [vmem:[#allocation2 + $0x8] sm:$0xff] %vm405, %v2179
    %2182 = vrot.lane.b32.xlu0 %v1957, 112
    %v2183 = vpop.permute.xlu0 %2182
    %2184 = vrot.lane.b32.xlu0 %v1957, 80
    %v2185 = vpop.permute.xlu0 %2184
    %v2187 = vsel %vm182, %v2183, 0
    %v2190 = vsel %vm182, %v2185, 0
    %2192 = vmatprep.subr.bf16.mxu0 0
    %2193 = vmatpush1.bf16.xpose.msra.mxu0 0
    %2194 = vmatprep.subr.bf16.mxu0 0
    %2195 = vmatpush1.bf16.xpose.msra.mxu0 0
    %2196 = vmatprep.subr.bf16.mxu0 0
    %2197 = vmatpush1.bf16.xpose.msra.mxu0 0
    %2198 = vmatprep.subr.bf16.mxu0 0
    %2199 = vmatpush1.bf16.xpose.msra.mxu0 0
    %2200 = vmatprep.subr.bf16.mxu0 0
    %2201 = vmatpush1.bf16.xpose.msra.mxu0 0
    %2202 = vmatprep.subr.bf16.mxu0 0
    %2203 = vmatpush1.bf16.xpose.msra.mxu0 0
    %2204 = vmatprep.subr.bf16.mxu0 0
    %2205 = vmatpush1.bf16.xpose.msra.mxu0 0
    %2206 = vmatprep.subr.bf16.mxu0 0
    %2207 = vmatpush1.bf16.xpose.msra.mxu0 %v2190
    %2208 = vmatprep.subr.bf16.mxu0 0
    %2209 = vmatpush2.bf16.xpose.msra.mxu0 0
    %2210 = vmatprep.subr.bf16.mxu0 0
    %2211 = vmatpush2.bf16.xpose.msra.mxu0 0
    %2212 = vmatprep.subr.bf16.mxu0 0
    %2213 = vmatpush2.bf16.xpose.msra.mxu0 0
    %2214 = vmatprep.subr.bf16.mxu0 0
    %2215 = vmatpush2.bf16.xpose.msra.mxu0 0
    %2216 = vmatprep.subr.bf16.mxu0 0
    %2217 = vmatpush2.bf16.xpose.msra.mxu0 0
    %2218 = vmatprep.subr.bf16.mxu0 0
    %2219 = vmatpush2.bf16.xpose.msra.mxu0 0
    %2220 = vmatprep.subr.bf16.mxu0 0
    %2221 = vmatpush2.bf16.xpose.msra.mxu0 0
    %2222 = vmatprep.subr.bf16.mxu0 0
    %2223 = vmatpush2.bf16.xpose.msra.mxu0 0
    %2224 = vmatprep.mubr.bf16.mxu0 0
    %2225 = vmatmul.mubr.bf16.gmra.mxu0 %v2187
    %v2226 = vpop.f32.mrf.mxu0
    %v2227 = vadd.f32 %v642, %v2226
    %v2228 = vpop.f32.mrf.mxu0
    %v2229 = vpop.f32.mrf.mxu0
    %v2230 = vpop.f32.mrf.mxu0
    %2231 = vdwg.mxu0
    %v2232 = vsel %vm182, %v2227, -inf
    %2233 = vmax.xlane.f32.xlu0 %v2232
    %v2234 = vpop.xlane.xlu0 %2233
    %v2235 = vsub.f32 %v2227, %v2234
    %v2236 = vmul.f32 %v2235, 1.442695
    %v2237 = vpow.pop %v2236
    %v2238 = vsel %vm182, %v2237, 0.0
    %2239 = vadd.xlane.f32.xlu0 %v2238
    %v2240 = vpop.xlane.xlu0 %2239
    %v2241 = vrcp.pop %v2240
    %v2242 = vmul.f32 %v2237, %v2241
    %v2243 = vpack.c.bf16 %v2242, %v2242
    %2244 = vrot.lane.b32.xlu0 %v1957, 48
    %v2245 = vpop.permute.xlu0 %2244
    %v2247 = vsel %vm182, %v2243, 0
    %v2250 = vsel %vm246, %v2245, 0
    %2252 = vmatprep.subr.bf16.mxu0 0
    %2253 = vmatpush1.bf16.msra.mxu0 0
    %2254 = vmatprep.subr.bf16.mxu0 0
    %2255 = vmatpush1.bf16.msra.mxu0 0
    %2256 = vmatprep.subr.bf16.mxu0 0
    %2257 = vmatpush1.bf16.msra.mxu0 0
    %2258 = vmatprep.subr.bf16.mxu0 0
    %2259 = vmatpush1.bf16.msra.mxu0 0
    %2260 = vmatprep.subr.bf16.mxu0 0
    %2261 = vmatpush1.bf16.msra.mxu0 0
    %2262 = vmatprep.subr.bf16.mxu0 0
    %2263 = vmatpush1.bf16.msra.mxu0 0
    %2264 = vmatprep.subr.bf16.mxu0 0
    %2265 = vmatpush1.bf16.msra.mxu0 0
    %2266 = vmatprep.subr.bf16.mxu0 0
    %2267 = vmatpush1.bf16.msra.mxu0 %v2250
    %2268 = vmatprep.subr.bf16.mxu0 0
    %2269 = vmatpush2.bf16.msra.mxu0 0
    %2270 = vmatprep.subr.bf16.mxu0 0
    %2271 = vmatpush2.bf16.msra.mxu0 0
    %2272 = vmatprep.subr.bf16.mxu0 0
    %2273 = vmatpush2.bf16.msra.mxu0 0
    %2274 = vmatprep.subr.bf16.mxu0 0
    %2275 = vmatpush2.bf16.msra.mxu0 0
    %2276 = vmatprep.subr.bf16.mxu0 0
    %2277 = vmatpush2.bf16.msra.mxu0 0
    %2278 = vmatprep.subr.bf16.mxu0 0
    %2279 = vmatpush2.bf16.msra.mxu0 0
    %2280 = vmatprep.subr.bf16.mxu0 0
    %2281 = vmatpush2.bf16.msra.mxu0 0
    %2282 = vmatprep.subr.bf16.mxu0 0
    %2283 = vmatpush2.bf16.msra.mxu0 0
    %2284 = vmatprep.mubr.bf16.mxu0 0
    %2285 = vmatmul.mubr.bf16.gmra.mxu0 %v2247
    %v2286 = vpop.f32.mrf.mxu0
    %v2287 = vadd.f32 0.0, %v2286
    %v2288 = vpop.f32.mrf.mxu0
    %v2289 = vpop.f32.mrf.mxu0
    %v2290 = vpop.f32.mrf.mxu0
    %2291 = vdwg.mxu0
    %2293 = vrot.lane.b32.xlu0 %v2287, 16
    %v2294 = vpop.permute.xlu0 %2293
    %2296 = vst.msk [vmem:[#allocation2 + $0x8] sm:$0xff] %vm521, %v2294
    %2297 = vrot.lane.b32.xlu0 %v1957, 104
    %v2298 = vpop.permute.xlu0 %2297
    %2299 = vrot.lane.b32.xlu0 %v1957, 72
    %v2300 = vpop.permute.xlu0 %2299
    %v2302 = vsel %vm182, %v2298, 0
    %v2305 = vsel %vm182, %v2300, 0
    %2307 = vmatprep.subr.bf16.mxu0 0
    %2308 = vmatpush1.bf16.xpose.msra.mxu0 0
    %2309 = vmatprep.subr.bf16.mxu0 0
    %2310 = vmatpush1.bf16.xpose.msra.mxu0 0
    %2311 = vmatprep.subr.bf16.mxu0 0
    %2312 = vmatpush1.bf16.xpose.msra.mxu0 0
    %2313 = vmatprep.subr.bf16.mxu0 0
    %2314 = vmatpush1.bf16.xpose.msra.mxu0 0
    %2315 = vmatprep.subr.bf16.mxu0 0
    %2316 = vmatpush1.bf16.xpose.msra.mxu0 0
    %2317 = vmatprep.subr.bf16.mxu0 0
    %2318 = vmatpush1.bf16.xpose.msra.mxu0 0
    %2319 = vmatprep.subr.bf16.mxu0 0
    %2320 = vmatpush1.bf16.xpose.msra.mxu0 0
    %2321 = vmatprep.subr.bf16.mxu0 0
    %2322 = vmatpush1.bf16.xpose.msra.mxu0 %v2305
    %2323 = vmatprep.subr.bf16.mxu0 0
    %2324 = vmatpush2.bf16.xpose.msra.mxu0 0
    %2325 = vmatprep.subr.bf16.mxu0 0
    %2326 = vmatpush2.bf16.xpose.msra.mxu0 0
    %2327 = vmatprep.subr.bf16.mxu0 0
    %2328 = vmatpush2.bf16.xpose.msra.mxu0 0
    %2329 = vmatprep.subr.bf16.mxu0 0
    %2330 = vmatpush2.bf16.xpose.msra.mxu0 0
    %2331 = vmatprep.subr.bf16.mxu0 0
    %2332 = vmatpush2.bf16.xpose.msra.mxu0 0
    %2333 = vmatprep.subr.bf16.mxu0 0
    %2334 = vmatpush2.bf16.xpose.msra.mxu0 0
    %2335 = vmatprep.subr.bf16.mxu0 0
    %2336 = vmatpush2.bf16.xpose.msra.mxu0 0
    %2337 = vmatprep.subr.bf16.mxu0 0
    %2338 = vmatpush2.bf16.xpose.msra.mxu0 0
    %2339 = vmatprep.mubr.bf16.mxu0 0
    %2340 = vmatmul.mubr.bf16.gmra.mxu0 %v2302
    %v2341 = vpop.f32.mrf.mxu0
    %v2342 = vadd.f32 %v642, %v2341
    %v2343 = vpop.f32.mrf.mxu0
    %v2344 = vpop.f32.mrf.mxu0
    %v2345 = vpop.f32.mrf.mxu0
    %2346 = vdwg.mxu0
    %v2347 = vsel %vm182, %v2342, -inf
    %2348 = vmax.xlane.f32.xlu0 %v2347
    %v2349 = vpop.xlane.xlu0 %2348
    %v2350 = vsub.f32 %v2342, %v2349
    %v2351 = vmul.f32 %v2350, 1.442695
    %v2352 = vpow.pop %v2351
    %v2353 = vsel %vm182, %v2352, 0.0
    %2354 = vadd.xlane.f32.xlu0 %v2353
    %v2355 = vpop.xlane.xlu0 %2354
    %v2356 = vrcp.pop %v2355
    %v2357 = vmul.f32 %v2352, %v2356
    %v2358 = vpack.c.bf16 %v2357, %v2357
    %2359 = vrot.lane.b32.xlu0 %v1957, 40
    %v2360 = vpop.permute.xlu0 %2359
    %v2362 = vsel %vm182, %v2358, 0
    %v2365 = vsel %vm246, %v2360, 0
    %2367 = vmatprep.subr.bf16.mxu0 0
    %2368 = vmatpush1.bf16.msra.mxu0 0
    %2369 = vmatprep.subr.bf16.mxu0 0
    %2370 = vmatpush1.bf16.msra.mxu0 0
    %2371 = vmatprep.subr.bf16.mxu0 0
    %2372 = vmatpush1.bf16.msra.mxu0 0
    %2373 = vmatprep.subr.bf16.mxu0 0
    %2374 = vmatpush1.bf16.msra.mxu0 0
    %2375 = vmatprep.subr.bf16.mxu0 0
    %2376 = vmatpush1.bf16.msra.mxu0 0
    %2377 = vmatprep.subr.bf16.mxu0 0
    %2378 = vmatpush1.bf16.msra.mxu0 0
    %2379 = vmatprep.subr.bf16.mxu0 0
    %2380 = vmatpush1.bf16.msra.mxu0 0
    %2381 = vmatprep.subr.bf16.mxu0 0
    %2382 = vmatpush1.bf16.msra.mxu0 %v2365
    %2383 = vmatprep.subr.bf16.mxu0 0
    %2384 = vmatpush2.bf16.msra.mxu0 0
    %2385 = vmatprep.subr.bf16.mxu0 0
    %2386 = vmatpush2.bf16.msra.mxu0 0
    %2387 = vmatprep.subr.bf16.mxu0 0
    %2388 = vmatpush2.bf16.msra.mxu0 0
    %2389 = vmatprep.subr.bf16.mxu0 0
    %2390 = vmatpush2.bf16.msra.mxu0 0
    %2391 = vmatprep.subr.bf16.mxu0 0
    %2392 = vmatpush2.bf16.msra.mxu0 0
    %2393 = vmatprep.subr.bf16.mxu0 0
    %2394 = vmatpush2.bf16.msra.mxu0 0
    %2395 = vmatprep.subr.bf16.mxu0 0
    %2396 = vmatpush2.bf16.msra.mxu0 0
    %2397 = vmatprep.subr.bf16.mxu0 0
    %2398 = vmatpush2.bf16.msra.mxu0 0
    %2399 = vmatprep.mubr.bf16.mxu0 0
    %2400 = vmatmul.mubr.bf16.gmra.mxu0 %v2362
    %v2401 = vpop.f32.mrf.mxu0
    %v2402 = vadd.f32 0.0, %v2401
    %v2403 = vpop.f32.mrf.mxu0
    %v2404 = vpop.f32.mrf.mxu0
    %v2405 = vpop.f32.mrf.mxu0
    %2406 = vdwg.mxu0
    %2408 = vrot.lane.b32.xlu0 %v2402, 24
    %v2409 = vpop.permute.xlu0 %2408
    %2411 = vst.msk [vmem:[#allocation2 + $0x8] sm:$0xff] %vm637, %v2409
    %v2412 = vld [vmem:[#allocation2] sm:$0xff]
    %v2413 = vld [vmem:[#allocation2 + $0x8] sm:$0xff]
    %v2414 = vpack.c.bf16 %v2413, %v2412
    %s2415 = scalar_lea.vmem %s6, 16
    %v2416 = vld [vmem:[%s2415] sm:$0xf]
    %v2417 = vld [vmem:[%s2415 + $0x4] sm:$0xf]
    %v2418 = vld [vmem:[%s2415 + $0x8] sm:$0xf]
    %v2419 = vld [vmem:[%s2415 + $0xc] sm:$0xf]
    %s2420 = scalar_lea.vmem %s7, 1
    %v2421 = vld [vmem:[%s2420] sm:$0x1]
    %v2423 = vlaneseq
    %v2424 = vshrl.u32 %v2423, 7
    %v2425 = vsub.s32 0, %v2424
    %v2426 = vrot.slane %v2421, %v2425
    %v2432 = vunpack.c.l.b16 %v2416
    %v2433 = vunpack.c.l.b16 %v2417
    %v2434 = vunpack.c.l.b16 %v2418
    %v2435 = vunpack.c.l.b16 %v2419
    %v2436 = vpack.c.b16 %v2433, %v2432
    %v2437 = vpack.c.b16 %v2435, %v2434
    %v2441 = vsel %vm62, %v2414, 0
    %2443 = vmatprep.subr.bf16.mxu0 0
    %2444 = vmatpush1.bf16.msra.mxu0 0
    %2445 = vmatprep.subr.bf16.mxu0 0
    %2446 = vmatpush1.bf16.msra.mxu0 0
    %2447 = vmatprep.subr.bf16.mxu0 0
    %2448 = vmatpush1.bf16.msra.mxu0 0
    %2449 = vmatprep.subr.bf16.mxu0 0
    %2450 = vmatpush1.bf16.msra.mxu0 0
    %2451 = vmatprep.subr.bf16.mxu0 0
    %2452 = vmatpush1.bf16.msra.mxu0 0
    %2453 = vmatprep.subr.bf16.mxu0 0
    %2454 = vmatpush1.bf16.msra.mxu0 0
    %2455 = vmatprep.subr.bf16.mxu0 0
    %2456 = vmatpush1.bf16.msra.mxu0 %v2437
    %2457 = vmatprep.subr.bf16.mxu0 0
    %2458 = vmatpush1.bf16.msra.mxu0 %v2436
    %2459 = vmatprep.subr.bf16.mxu0 0
    %2460 = vmatpush2.bf16.msra.mxu0 0
    %2461 = vmatprep.subr.bf16.mxu0 0
    %2462 = vmatpush2.bf16.msra.mxu0 0
    %2463 = vmatprep.subr.bf16.mxu0 0
    %2464 = vmatpush2.bf16.msra.mxu0 0
    %2465 = vmatprep.subr.bf16.mxu0 0
    %2466 = vmatpush2.bf16.msra.mxu0 0
    %2467 = vmatprep.subr.bf16.mxu0 0
    %2468 = vmatpush2.bf16.msra.mxu0 0
    %2469 = vmatprep.subr.bf16.mxu0 0
    %2470 = vmatpush2.bf16.msra.mxu0 0
    %2471 = vmatprep.subr.bf16.mxu0 0
    %2472 = vmatpush2.bf16.msra.mxu0 0
    %2473 = vmatprep.subr.bf16.mxu0 0
    %2474 = vmatpush2.bf16.msra.mxu0 0
    %2475 = vmatprep.mubr.bf16.mxu0 0
    %2476 = vmatmul.mubr.bf16.gmra.mxu0 %v2441
    %v2477 = vpop.f32.mrf.mxu0
    %v2478 = vadd.f32 %v2426, %v2477
    %v2479 = vpop.f32.mrf.mxu0
    %v2480 = vpop.f32.mrf.mxu0
    %v2481 = vadd.f32 %v2426, %v2480
    %v2482 = vpop.f32.mrf.mxu0
    %2483 = vdwg.mxu0
    %v2484 = vadd.f32 %v2478, %v1429
    %v2485 = vadd.f32 %v2481, %v1430
    %s2486 = scalar_lea.vmem %s8, 1
    %v2487 = vld [vmem:[%s2486] sm:$0x1]
    %s2488 = scalar_lea.vmem %s9, 1
    %v2489 = vld [vmem:[%s2488] sm:$0x1]
    %v2490 = vsel %vm62, %v2484, 0.0
    %2491 = vadd.xlane.f32.xlu0 %v2490
    %v2492 = vpop.xlane.xlu0 %2491
    %v2493 = vsel %vm62, %v2485, 0.0
    %2494 = vadd.xlane.f32.xlu0 %v2493
    %v2495 = vpop.xlane.xlu0 %2494
    %v2496 = vmul.f32 %v2492, %v69
    %v2497 = vmul.f32 %v2495, %v69
    %v2498 = vsub.f32 %v2484, %v2496
    %v2499 = vsub.f32 %v2485, %v2497
    %v2500 = vmul.f32 %v2498, %v2498
    %v2501 = vmul.f32 %v2499, %v2499
    %v2502 = vsel %vm62, %v2500, 0.0
    %2503 = vadd.xlane.f32.xlu0 %v2502
    %v2504 = vpop.xlane.xlu0 %2503
    %v2505 = vsel %vm62, %v2501, 0.0
    %2506 = vadd.xlane.f32.xlu0 %v2505
    %v2507 = vpop.xlane.xlu0 %2506
    %v2508 = vmul.f32 %v2504, %v69
    %v2509 = vmul.f32 %v2507, %v69
    %v2510 = vadd.f32 %v2508, 1e-12
    %v2511 = vadd.f32 %v2509, 1e-12
    %v2512 = vrsqrt.pop %v2510
    %v2513 = vrsqrt.pop %v2511
    %v2514 = vmul.f32 %v2498, %v2512
    %v2515 = vmul.f32 %v2499, %v2513
    %v2517 = vlaneseq
    %v2518 = vshrl.u32 %v2517, 7
    %v2519 = vsub.s32 0, %v2518
    %v2520 = vrot.slane %v2487, %v2519
    %v2522 = vmul.f32 %v2514, %v2520
    %v2523 = vmul.f32 %v2515, %v2520
    %v2525 = vlaneseq
    %v2526 = vshrl.u32 %v2525, 7
    %v2527 = vsub.s32 0, %v2526
    %v2528 = vrot.slane %v2489, %v2527
    %v2530 = vadd.f32 %v2522, %v2528
    %v2531 = vadd.f32 %v2523, %v2528
    %v2532 = vpack.c.bf16 %v2531, %v2530
    %s2533 = scalar_lea.vmem %s10, 16
    %v2534 = vld [vmem:[%s2533] sm:$0xf]
    %v2535 = vld [vmem:[%s2533 + $0x4] sm:$0xf]
    %v2536 = vld [vmem:[%s2533 + $0x8] sm:$0xf]
    %v2537 = vld [vmem:[%s2533 + $0xc] sm:$0xf]
    %s2538 = scalar_lea.vmem %s11, 1
    %v2539 = vld [vmem:[%s2538] sm:$0x1]
    %v2541 = vlaneseq
    %v2542 = vshrl.u32 %v2541, 7
    %v2543 = vsub.s32 0, %v2542
    %v2544 = vrot.slane %v2539, %v2543
    %v2550 = vunpack.c.l.b16 %v2534
    %v2551 = vunpack.c.l.b16 %v2535
    %v2552 = vunpack.c.l.b16 %v2536
    %v2553 = vunpack.c.l.b16 %v2537
    %v2554 = vpack.c.b16 %v2551, %v2550
    %v2555 = vpack.c.b16 %v2553, %v2552
    %v2559 = vsel %vm62, %v2532, 0
    %2561 = vmatprep.subr.bf16.mxu0 0
    %2562 = vmatpush1.bf16.msra.mxu0 0
    %2563 = vmatprep.subr.bf16.mxu0 0
    %2564 = vmatpush1.bf16.msra.mxu0 0
    %2565 = vmatprep.subr.bf16.mxu0 0
    %2566 = vmatpush1.bf16.msra.mxu0 0
    %2567 = vmatprep.subr.bf16.mxu0 0
    %2568 = vmatpush1.bf16.msra.mxu0 0
    %2569 = vmatprep.subr.bf16.mxu0 0
    %2570 = vmatpush1.bf16.msra.mxu0 0
    %2571 = vmatprep.subr.bf16.mxu0 0
    %2572 = vmatpush1.bf16.msra.mxu0 0
    %2573 = vmatprep.subr.bf16.mxu0 0
    %2574 = vmatpush1.bf16.msra.mxu0 %v2555
    %2575 = vmatprep.subr.bf16.mxu0 0
    %2576 = vmatpush1.bf16.msra.mxu0 %v2554
    %2577 = vmatprep.subr.bf16.mxu0 0
    %2578 = vmatpush2.bf16.msra.mxu0 0
    %2579 = vmatprep.subr.bf16.mxu0 0
    %2580 = vmatpush2.bf16.msra.mxu0 0
    %2581 = vmatprep.subr.bf16.mxu0 0
    %2582 = vmatpush2.bf16.msra.mxu0 0
    %2583 = vmatprep.subr.bf16.mxu0 0
    %2584 = vmatpush2.bf16.msra.mxu0 0
    %2585 = vmatprep.subr.bf16.mxu0 0
    %2586 = vmatpush2.bf16.msra.mxu0 0
    %2587 = vmatprep.subr.bf16.mxu0 0
    %2588 = vmatpush2.bf16.msra.mxu0 0
    %2589 = vmatprep.subr.bf16.mxu0 0
    %2590 = vmatpush2.bf16.msra.mxu0 0
    %2591 = vmatprep.subr.bf16.mxu0 0
    %2592 = vmatpush2.bf16.msra.mxu0 0
    %2593 = vmatprep.mubr.bf16.mxu0 0
    %2594 = vmatmul.mubr.bf16.gmra.mxu0 %v2559
    %v2595 = vpop.f32.mrf.mxu0
    %v2596 = vadd.f32 %v2544, %v2595
    %v2597 = vpop.f32.mrf.mxu0
    %v2598 = vpop.f32.mrf.mxu0
    %v2599 = vadd.f32 %v2544, %v2598
    %v2600 = vpop.f32.mrf.mxu0
    %2601 = vdwg.mxu0
    %v2602 = vmul.f32 %v2596, 0.5
    %v2603 = vmul.f32 %v2599, 0.5
    %v2604 = vmul.f32 %v2596, 0.044715
    %v2605 = vmul.f32 %v2599, 0.044715
    %v2606 = vmul.f32 %v2604, %v2596
    %v2607 = vmul.f32 %v2605, %v2599
    %v2608 = vmul.f32 %v2606, %v2596
    %v2609 = vmul.f32 %v2607, %v2599
    %v2610 = vadd.f32 %v2596, %v2608
    %v2611 = vadd.f32 %v2599, %v2609
    %v2612 = vmul.f32 %v2610, 0.7978846
    %v2613 = vmul.f32 %v2611, 0.7978846
    %v2614 = vtanh.pop %v2612
    %v2615 = vtanh.pop %v2613
    %v2616 = vadd.f32 %v2614, 1.0
    %v2617 = vadd.f32 %v2615, 1.0
    %v2618 = vmul.f32 %v2602, %v2616
    %v2619 = vmul.f32 %v2603, %v2617
    %v2620 = vpack.c.bf16 %v2619, %v2618
    %s2621 = scalar_lea.vmem %s12, 32
    %v2622 = vld [vmem:[%s2621] sm:$0xf]
    %v2623 = vld [vmem:[%s2621 + $0x4] sm:$0xf]
    %v2624 = vld [vmem:[%s2621 + $0x8] sm:$0xf]
    %v2625 = vld [vmem:[%s2621 + $0xc] sm:$0xf]
    %v2626 = vld [vmem:[%s2621 + $0x10] sm:$0xf]
    %v2627 = vld [vmem:[%s2621 + $0x14] sm:$0xf]
    %v2628 = vld [vmem:[%s2621 + $0x18] sm:$0xf]
    %v2629 = vld [vmem:[%s2621 + $0x1c] sm:$0xf]
    %s2630 = scalar_lea.vmem %s13, 1
    %v2631 = vld [vmem:[%s2630] sm:$0x1]
    %v2633 = vlaneseq
    %v2634 = vshrl.u32 %v2633, 7
    %v2635 = vsub.s32 0, %v2634
    %v2636 = vrot.slane %v2631, %v2635
    %v2646 = vunpack.c.l.b16 %v2622
    %v2647 = vunpack.c.l.b16 %v2623
    %v2648 = vunpack.c.l.b16 %v2624
    %v2649 = vunpack.c.l.b16 %v2625
    %v2650 = vunpack.c.l.b16 %v2626
    %v2651 = vunpack.c.l.b16 %v2627
    %v2652 = vunpack.c.l.b16 %v2628
    %v2653 = vunpack.c.l.b16 %v2629
    %v2654 = vpack.c.b16 %v2647, %v2646
    %v2655 = vpack.c.b16 %v2649, %v2648
    %v2656 = vpack.c.b16 %v2651, %v2650
    %v2657 = vpack.c.b16 %v2653, %v2652
    %v2663 = vsel %vm1340, %v2620, 0
    %2665 = vmatprep.subr.bf16.mxu0 0
    %2666 = vmatpush1.bf16.msra.mxu0 0
    %2667 = vmatprep.subr.bf16.mxu0 0
    %2668 = vmatpush1.bf16.msra.mxu0 0
    %2669 = vmatprep.subr.bf16.mxu0 0
    %2670 = vmatpush1.bf16.msra.mxu0 0
    %2671 = vmatprep.subr.bf16.mxu0 0
    %2672 = vmatpush1.bf16.msra.mxu0 0
    %2673 = vmatprep.subr.bf16.mxu0 0
    %2674 = vmatpush1.bf16.msra.mxu0 %v2657
    %2675 = vmatprep.subr.bf16.mxu0 0
    %2676 = vmatpush1.bf16.msra.mxu0 %v2656
    %2677 = vmatprep.subr.bf16.mxu0 0
    %2678 = vmatpush1.bf16.msra.mxu0 %v2655
    %2679 = vmatprep.subr.bf16.mxu0 0
    %2680 = vmatpush1.bf16.msra.mxu0 %v2654
    %2681 = vmatprep.subr.bf16.mxu0 0
    %2682 = vmatpush2.bf16.msra.mxu0 0
    %2683 = vmatprep.subr.bf16.mxu0 0
    %2684 = vmatpush2.bf16.msra.mxu0 0
    %2685 = vmatprep.subr.bf16.mxu0 0
    %2686 = vmatpush2.bf16.msra.mxu0 0
    %2687 = vmatprep.subr.bf16.mxu0 0
    %2688 = vmatpush2.bf16.msra.mxu0 0
    %2689 = vmatprep.subr.bf16.mxu0 0
    %2690 = vmatpush2.bf16.msra.mxu0 0
    %2691 = vmatprep.subr.bf16.mxu0 0
    %2692 = vmatpush2.bf16.msra.mxu0 0
    %2693 = vmatprep.subr.bf16.mxu0 0
    %2694 = vmatpush2.bf16.msra.mxu0 0
    %2695 = vmatprep.subr.bf16.mxu0 0
    %2696 = vmatpush2.bf16.msra.mxu0 0
    %2697 = vmatprep.mubr.bf16.mxu0 0
    %2698 = vmatmul.mubr.bf16.gmra.mxu0 %v2663
    %v2699 = vpop.f32.mrf.mxu0
    %v2700 = vadd.f32 %v2636, %v2699
    %v2701 = vpop.f32.mrf.mxu0
    %v2702 = vpop.f32.mrf.mxu0
    %v2703 = vadd.f32 %v2636, %v2702
    %v2704 = vpop.f32.mrf.mxu0
    %2705 = vdwg.mxu0
    %v2706 = vadd.f32 %v2700, %v2530
    %v2707 = vadd.f32 %v2703, %v2531
    %s2708 = scalar_lea.vmem %s14, 1
    %v2709 = vld [vmem:[%s2708] sm:$0x1]
    %s2710 = scalar_lea.vmem %s15, 1
    %v2711 = vld [vmem:[%s2710] sm:$0x1]
    %v2712 = vsel %vm62, %v2706, 0.0
    %2713 = vadd.xlane.f32.xlu0 %v2712
    %v2714 = vpop.xlane.xlu0 %2713
    %v2715 = vsel %vm62, %v2707, 0.0
    %2716 = vadd.xlane.f32.xlu0 %v2715
    %v2717 = vpop.xlane.xlu0 %2716
    %v2718 = vmul.f32 %v2714, %v69
    %v2719 = vmul.f32 %v2717, %v69
    %v2720 = vsub.f32 %v2706, %v2718
    %v2721 = vsub.f32 %v2707, %v2719
    %v2722 = vmul.f32 %v2720, %v2720
    %v2723 = vmul.f32 %v2721, %v2721
    %v2724 = vsel %vm62, %v2722, 0.0
    %2725 = vadd.xlane.f32.xlu0 %v2724
    %v2726 = vpop.xlane.xlu0 %2725
    %v2727 = vsel %vm62, %v2723, 0.0
    %2728 = vadd.xlane.f32.xlu0 %v2727
    %v2729 = vpop.xlane.xlu0 %2728
    %v2730 = vmul.f32 %v2726, %v69
    %v2731 = vmul.f32 %v2729, %v69
    %v2732 = vadd.f32 %v2730, 1e-12
    %v2733 = vadd.f32 %v2731, 1e-12
    %v2734 = vrsqrt.pop %v2732
    %v2735 = vrsqrt.pop %v2733
    %v2736 = vmul.f32 %v2720, %v2734
    %v2737 = vmul.f32 %v2721, %v2735
    %v2739 = vlaneseq
    %v2740 = vshrl.u32 %v2739, 7
    %v2741 = vsub.s32 0, %v2740
    %v2742 = vrot.slane %v2709, %v2741
    %v2744 = vmul.f32 %v2736, %v2742
    %v2745 = vmul.f32 %v2737, %v2742
    %v2747 = vlaneseq
    %v2748 = vshrl.u32 %v2747, 7
    %v2749 = vsub.s32 0, %v2748
    %v2750 = vrot.slane %v2711, %v2749
    %v2752 = vadd.f32 %v2744, %v2750
    %v2753 = vadd.f32 %v2745, %v2750
    %v2755 = vrot.slane %v2753, 7
    %vm2757 = vcmask 1040384
    %v2758 = vsel %vm2757, %v2752, %v2755
    %vm2759 = vcmask 254976
    %2760 = vst.msk [vmem:[#allocation3] sm:$0x3] %vm2759, %v2758
    // Predicated region
    $region66: #{embedding_model_forward.1} parent=1 // pred_check
      _
    $region67: #{embedding_model_forward.1} parent=1 // pred_check_branch
      %2762 = sbr.rel (0) target = $region69
    $region68: #{embedding_model_forward.1} parent=1 // pred_region
      %s2764 = ssub.s32 32, 32
      %2765 = vsyncadd [#allocation4], %s2764
      %s2767 = sshll.u32 [#allocation3], 4
      %s2768 = int_to_ptr.vmem [resolvable:$true] %s2767
      %2770 = dma.vmem_to_hbm [thread:$0]  %s2768, 32, %s16, [#allocation4]
    $region69: #{embedding_model_forward.1} parent=1 // pred_fallthru
      _
    // Predicated region
    $region70: #{embedding_model_forward.1} parent=1 // pred_check
      _
    $region71: #{embedding_model_forward.1} parent=1 // pred_check_branch
      %2772 = sbr.rel (0) target = $region73
    $region72: #{embedding_model_forward.1} parent=1 // pred_region
      %2773 = dma.done [#allocation4], 32
    $region73: #{embedding_model_forward.1} parent=1 // pred_fallthru
      _
    %2774 = vsyncpa [#allocation4], 1

</llo_original>
